<compile_context>
chip_gen: v7x
topology: tpu7x:2x2x1
jax: 0.10.0
libtpu: 0.0.40
codegen_flags: <defaults>
</compile_context>

<pallas_src>
import functools

import jax
import jax.numpy as jnp
from jax.experimental import pallas as pl
from jax.experimental.pallas import tpu as pltpu


# ----------------------------- kernel helpers ------------------------------

def _layernorm(x, gamma, beta, eps):
    # PyTorch LayerNorm: biased variance over the last dim, f32 statistics.
    mean = jnp.mean(x, axis=-1, keepdims=True)
    var = jnp.mean((x - mean) ** 2, axis=-1, keepdims=True)
    return (x - mean) * jax.lax.rsqrt(var + eps) * gamma + beta


# --------------------------- fused decoder kernel ---------------------------

def decoder_kernel(x_ref, pos_ref,
                   ln1_g_ref, ln1_b_ref, qkv_w_ref,
                   proj_w_ref, proj_b_ref,
                   ln2_g_ref, ln2_b_ref,
                   fc1_w_ref, fc1_b_ref, fc2_w_ref, fc2_b_ref,
                   nf_g_ref, nf_b_ref,
                   o_ref, act_ref, ctx_ref, *, num_heads):
    layer = pl.program_id(1)
    Bb, N, D = x_ref.shape
    T = Bb * N
    H = num_heads
    hd = D // H
    cdt = qkv_w_ref.dtype                 # MXU input dtype (bf16); acc is f32

    @pl.when(layer == 0)
    def _():                              # load residual stream once per batch block
        act_ref[...] = x_ref[...].reshape(T, D).astype(jnp.float32)

    # x + pos_embeds is re-applied every layer (as in the PyTorch forward).
    xin = act_ref[...] + pos_ref[...].reshape(T, D).astype(jnp.float32)

    # --- multi-head self-attention branch ---
    h1 = _layernorm(xin, ln1_g_ref[0], ln1_b_ref[0], 1e-5).astype(cdt)
    # Single fused, lane-dense QKV projection; query scale pre-folded into W_q.
    qkv = jnp.dot(h1, qkv_w_ref[0], preferred_element_type=jnp.float32)  # (T, 3D)

    for h in range(H):                    # static per-head loop (batched over Bb)
        q = qkv[:, 0 * D + h * hd:0 * D + (h + 1) * hd].reshape(Bb, N, hd).astype(cdt)
        k = qkv[:, 1 * D + h * hd:1 * D + (h + 1) * hd].reshape(Bb, N, hd).astype(cdt)
        v = qkv[:, 2 * D + h * hd:2 * D + (h + 1) * hd].reshape(Bb, N, hd).astype(cdt)
        s = jnp.einsum("bqd,bkd->bqk", q, k,
                       preferred_element_type=jnp.float32)               # (Bb, N, N)
        s = s - jnp.max(s, axis=-1, keepdims=True)
        p = jnp.exp(s)
        p = p * pl.reciprocal(jnp.sum(p, axis=-1, keepdims=True), approx=True)
        c = jnp.einsum("bqk,bkd->bqd", p.astype(cdt), v,
                       preferred_element_type=jnp.float32)               # (Bb, N, hd)
        # Merge heads by writing into lane slot [h*hd, (h+1)*hd) of a (T, D)
        # bf16 buffer -> output projection becomes one full-depth contraction.
        ctx_ref[:, h * hd:(h + 1) * hd] = c.reshape(T, hd).astype(cdt)

    attn = (jnp.dot(ctx_ref[...], proj_w_ref[0],
                    preferred_element_type=jnp.float32) + proj_b_ref[0])
    # TODO(synk): DropPath / attention & proj dropout are identity at inference.
    x1 = xin + attn

    # --- MLP branch (4x expansion) ---
    h2 = _layernorm(x1, ln2_g_ref[0], ln2_b_ref[0], 1e-5).astype(cdt)
    m = jnp.dot(h2, fc1_w_ref[0], preferred_element_type=jnp.float32) + fc1_b_ref[0]
    # tanh-GELU runs on the EUP; use approximate=False for exact-erf torch parity.
    m = jax.nn.gelu(m, approximate=True)
    m = (jnp.dot(m.astype(cdt), fc2_w_ref[0], preferred_element_type=jnp.float32)
         + fc2_b_ref[0])
    x2 = x1 + m
    act_ref[...] = x2

    @pl.when(layer == pl.num_programs(1) - 1)
    def _():                              # fused final LayerNorm(eps=1e-12)
        y = _layernorm(x2, nf_g_ref[0], nf_b_ref[0], 1e-12)
        o_ref[...] = y.reshape(Bb, N, D).astype(o_ref.dtype)


# ------------------------------- wrappers -----------------------------------

_LAYER_PARAMS = ("ln1_g", "ln1_b", "qkv_w", "proj_w", "proj_b",
                 "ln2_g", "ln2_b", "fc1_w", "fc1_b", "fc2_w", "fc2_b")


def pack_params(params, num_heads):
    """Host-side, one-time prep: fold the 1/sqrt(head_dim) query scale into the
    q-columns of qkv_w.  Weights stay as single lane-dense (D,3D)/(D,D) tensors."""
    p = dict(params)
    qkv = p["qkv_w"]
    L, D, _ = qkv.shape
    hd = D // num_heads
    scale = float(hd) ** -0.5
    q_scaled = (qkv[:, :, :D].astype(jnp.float32) * scale).astype(qkv.dtype)
    p["qkv_w"] = jnp.concatenate([q_scaled, qkv[:, :, D:]], axis=-1)
    return p


def _layer_spec(arr):
    rest = arr.shape[1:]
    return pl.BlockSpec((1,) + rest,
                        lambda b, l, _n=len(rest): (l,) + (0,) * _n)


def _vmem_capacity_bytes():
    try:
        return int(pltpu.get_tpu_info().vmem_capacity_bytes)
    except Exception:
        return 64 * 1024 * 1024          # conservative (v7x-sized) fallback


def _vmem_bytes_estimate(Bb, N, D, Hm, w_itemsize):
    """Per-grid-step VMEM footprint, including attention intermediates."""
    T = Bb * N
    per_layer_w = (3 * D * D + D * D + D * Hm + Hm * D) * w_itemsize + (6 * D + Hm) * 4
    weights = 2 * per_layer_w                       # double-buffered weight pipeline
    io_blocks = 3 * 2 * T * D * 4                   # x / pos / out f32 blocks (x2 bufs)
    scratch = T * D * 4 + T * D * w_itemsize        # residual act (f32) + ctx (bf16)
    interm = (3 * T * D * w_itemsize                # bf16 matmul inputs (h1/h2/m)
              + T * 3 * D * 4                       # fused QKV output (f32)
              + 6 * T * D * 4                       # xin/x1/attn/x2/LN temporaries
              + 4 * Bb * N * N * 4                  # per-head scores + probs (+slack)
              + 2 * T * Hm * 4)                     # MLP hidden pre/post GELU
    return weights + io_blocks + scratch + interm + (2 << 20)


def _pick_batch_block(B, N, D, Hm, w_itemsize, vmem_cap, max_tokens=4096):
    """Largest divisor of B whose working set fits ~85% of VMEM (weight-DMA
    amortization); stop growing once we exceed ~4K tokens per step."""
    budget = int(0.85 * vmem_cap)
    best = 1
    for bb in range(1, B + 1):
        if B % bb:
            continue
        if _vmem_bytes_estimate(bb, N, D, Hm, w_itemsize) > budget:
            break
        best = bb
        if bb * N >= max_tokens:
            break
    return best


def mae_decoder_forward(x, pos_embeds, params, num_heads, *, batch_block=None):
    """Pallas implementation of MAEDecoder.forward (all blocks + final LN fused).

    Real configs should keep D a multiple of 128 and N a multiple of 8 (ideally
    128) to keep all tiles lane/sublane dense."""
    B, N, D = x.shape
    assert D % num_heads == 0, "hidden size must be divisible by num_heads"
    kp = pack_params(params, num_heads)
    L = kp["qkv_w"].shape[0]
    Hm = kp["fc1_w"].shape[-1]
    w_dtype = kp["qkv_w"].dtype
    w_itemsize = jnp.dtype(w_dtype).itemsize

    vmem_cap = _vmem_capacity_bytes()
    if batch_block is None:
        batch_block = _pick_batch_block(B, N, D, Hm, w_itemsize, vmem_cap)
    Bb = batch_block
    assert B % Bb == 0, "batch_block must divide batch"
    est = _vmem_bytes_estimate(Bb, N, D, Hm, w_itemsize)
    vmem_limit = int(min(vmem_cap, max(32 * 1024 * 1024, int(1.25 * est))))

    act_spec = pl.BlockSpec((Bb, N, D), lambda b, l: (b, 0, 0))
    final_spec = pl.BlockSpec((1, 1, D), lambda b, l: (0, 0, 0))

    in_specs = ([act_spec, act_spec]
                + [_layer_spec(kp[k]) for k in _LAYER_PARAMS]
                + [final_spec, final_spec])
    args = ([x, pos_embeds] + [kp[k] for k in _LAYER_PARAMS]
            + [kp["norm_g"], kp["norm_b"]])

    # TODO(synk): on v7x consider pltpu.CORE_PARALLEL / pl.core_map on the batch
    # axis if "parallel" alone does not shard the grid across both TensorCores.
    return pl.pallas_call(
        functools.partial(decoder_kernel, num_heads=num_heads),
        out_shape=jax.ShapeDtypeStruct((B, N, D), x.dtype),
        grid=(B // Bb, L),
        in_specs=in_specs,
        out_specs=act_spec,
        scratch_shapes=[pltpu.VMEM((Bb * N, D), jnp.float32),   # residual stream
                        pltpu.VMEM((Bb * N, D), w_dtype)],      # merged-heads ctx
        compiler_params=pltpu.CompilerParams(
            dimension_semantics=("parallel", "arbitrary"),
            vmem_limit_bytes=vmem_limit),
    )(*args)


# ------------------------- deterministic parameters --------------------------

def init_params(key, hidden, depth, mlp_ratio=4, w_dtype=jnp.bfloat16):
    """Stacked (over depth) PyTorch-layout weights; matmul weights in bf16."""
    D, Hm = hidden, hidden * mlp_ratio
    ks = jax.random.split(key, 7)

    def w(k, shape):
        return (0.02 * jax.random.normal(k, shape, jnp.float32)).astype(w_dtype)

    return dict(
        ln1_g=jnp.ones((depth, 1, D), jnp.float32),
        ln1_b=jnp.zeros((depth, 1, D), jnp.float32),
        qkv_w=w(ks[0], (depth, D, 3 * D)),            # qkv_bias=False
        proj_w=w(ks[1], (depth, D, D)),
        proj_b=0.02 * jax.random.normal(ks[2], (depth, 1, D), jnp.float32),
        ln2_g=jnp.ones((depth, 1, D), jnp.float32),
        ln2_b=jnp.zeros((depth, 1, D), jnp.float32),
        fc1_w=w(ks[3], (depth, D, Hm)),
        fc1_b=0.02 * jax.random.normal(ks[4], (depth, 1, Hm), jnp.float32),
        fc2_w=w(ks[5], (depth, Hm, D)),
        fc2_b=0.02 * jax.random.normal(ks[6], (depth, 1, D), jnp.float32),
        norm_g=jnp.ones((1, 1, D), jnp.float32),
        norm_b=jnp.zeros((1, 1, D), jnp.float32),
    )


# ---------------------------- pure-JAX reference -----------------------------

def _ref_ln(x, g, b, eps):
    m = jnp.mean(x, -1, keepdims=True)
    v = jnp.mean((x - m) ** 2, -1, keepdims=True)
    return (x - m) / jnp.sqrt(v + eps) * g + b


def ref_forward(x, pos, params, num_heads):
    B, N, D = x.shape
    L = params["qkv_w"].shape[0]
    hd = D // num_heads
    f32 = lambda a: a.astype(jnp.float32)
    for l in range(L):
        xin = x + pos
        h = _ref_ln(xin, params["ln1_g"][l, 0], params["ln1_b"][l, 0], 1e-5)
        qkv = h @ f32(params["qkv_w"][l])
        q, k, v = qkv[..., :D], qkv[..., D:2 * D], qkv[..., 2 * D:]
        q = q.reshape(B, N, num_heads, hd).transpose(0, 2, 1, 3)
        k = k.reshape(B, N, num_heads, hd).transpose(0, 2, 1, 3)
        v = v.reshape(B, N, num_heads, hd).transpose(0, 2, 1, 3)
        a = jax.nn.softmax(jnp.einsum("bhnd,bhmd->bhnm", q, k) * hd ** -0.5, -1)
        ctx = (jnp.einsum("bhnm,bhmd->bhnd", a, v)
               .transpose(0, 2, 1, 3).reshape(B, N, D))
        x1 = xin + ctx @ f32(params["proj_w"][l]) + params["proj_b"][l, 0]
        h2 = _ref_ln(x1, params["ln2_g"][l, 0], params["ln2_b"][l, 0], 1e-5)
        m = jax.nn.gelu(h2 @ f32(params["fc1_w"][l]) + params["fc1_b"][l, 0],
                        approximate=False)
        x = x1 + m @ f32(params["fc2_w"][l]) + params["fc2_b"][l, 0]
    return _ref_ln(x, params["norm_g"][0, 0], params["norm_b"][0, 0], 1e-12)


# ----------------------------------- main ------------------------------------

if __name__ == "__main__":
    # Small demo shapes (D a multiple of 128 and N a multiple of 8 keeps all
    # tiles dense; real configs should follow the same rule).
    B, N, D = 4, 16, 128        # batch, tokens, hidden
    num_heads, depth = 4, 2     # dpr drop-path rates are identity at inference

    key = jax.random.PRNGKey(0)
    kx, kp, kw = jax.random.split(key, 3)
    x = jax.random.normal(kx, (B, N, D), jnp.float32)
    pos_embeds = jax.random.normal(kp, (B, N, D), jnp.float32)
    params = init_params(kw, D, depth)

    out = jax.block_until_ready(mae_decoder_forward(x, pos_embeds, params, num_heads))
    ref = ref_forward(x, pos_embeds, params, num_heads)

    assert out.shape == (B, N, D)
    err = float(jnp.max(jnp.abs(out - ref)))
    # bf16 matmul inputs + approx reciprocal / tanh-GELU vs exact-f32 reference.
    assert jnp.allclose(out, ref, rtol=2e-2, atol=2e-2), f"max abs err {err}"
    print("KERNEL_OK")
</pallas_src>

<mosaic_0001>
module attributes {stable_mosaic.version = 11 : i64} {
  func.func @decoder_kernel(%arg0: i32, %arg1: i32, %arg2: memref<4x16x128xf32, #tpu.memory_space<vmem>>, %arg3: memref<4x16x128xf32, #tpu.memory_space<vmem>>, %arg4: memref<1x1x128xf32, #tpu.memory_space<vmem>>, %arg5: memref<1x1x128xf32, #tpu.memory_space<vmem>>, %arg6: memref<1x128x384xbf16, #tpu.memory_space<vmem>>, %arg7: memref<1x128x128xbf16, #tpu.memory_space<vmem>>, %arg8: memref<1x1x128xf32, #tpu.memory_space<vmem>>, %arg9: memref<1x1x128xf32, #tpu.memory_space<vmem>>, %arg10: memref<1x1x128xf32, #tpu.memory_space<vmem>>, %arg11: memref<1x128x512xbf16, #tpu.memory_space<vmem>>, %arg12: memref<1x1x512xf32, #tpu.memory_space<vmem>>, %arg13: memref<1x512x128xbf16, #tpu.memory_space<vmem>>, %arg14: memref<1x1x128xf32, #tpu.memory_space<vmem>>, %arg15: memref<1x1x128xf32, #tpu.memory_space<vmem>>, %arg16: memref<1x1x128xf32, #tpu.memory_space<vmem>>, %arg17: memref<4x16x128xf32, #tpu.memory_space<vmem>>, %arg18: memref<64x128xf32, #tpu.memory_space<vmem>>, %arg19: memref<64x128xbf16, #tpu.memory_space<vmem>>) attributes {dimension_semantics = [#tpu.dimension_semantics<parallel>, #tpu.dimension_semantics<arbitrary>], iteration_bounds = array<i64: 1, 2>, scalar_prefetch = 0 : i64, scratch_operands = 2 : i64, tpu.core_type = #tpu.core_type<tc>, window_params = [{transform_indices = @transform_0, window_bounds = array<i64: 4, 16, 128>}, {transform_indices = @transform_1, window_bounds = array<i64: 4, 16, 128>}, {transform_indices = @transform_2, window_bounds = array<i64: 1, 1, 128>}, {transform_indices = @transform_3, window_bounds = array<i64: 1, 1, 128>}, {transform_indices = @transform_4, window_bounds = array<i64: 1, 128, 384>}, {transform_indices = @transform_5, window_bounds = array<i64: 1, 128, 128>}, {transform_indices = @transform_6, window_bounds = array<i64: 1, 1, 128>}, {transform_indices = @transform_7, window_bounds = array<i64: 1, 1, 128>}, {transform_indices = @transform_8, window_bounds = array<i64: 1, 1, 128>}, {transform_indices = @transform_9, window_bounds = array<i64: 1, 128, 512>}, {transform_indices = @transform_10, window_bounds = array<i64: 1, 1, 512>}, {transform_indices = @transform_11, window_bounds = array<i64: 1, 512, 128>}, {transform_indices = @transform_12, window_bounds = array<i64: 1, 1, 128>}, {pipeline_mode = #tpu.pipeline_mode<synchronous>, transform_indices = @transform_13, window_bounds = array<i64: 1, 1, 128>}, {pipeline_mode = #tpu.pipeline_mode<synchronous>, transform_indices = @transform_14, window_bounds = array<i64: 1, 1, 128>}, {transform_indices = @transform_15, window_bounds = array<i64: 4, 16, 128>}]} {
    %c0_i32 = arith.constant 0 : i32
    %0 = arith.cmpi eq, %arg1, %c0_i32 : i32
    %1 = arith.extui %0 : i1 to i32
    %c0_i32_0 = arith.constant 0 : i32
    %2 = arith.cmpi ne, %1, %c0_i32_0 : i32
    scf.if %2 {
      %c0_81 = arith.constant 0 : index
      %c0_82 = arith.constant 0 : index
      %c0_83 = arith.constant 0 : index
      %206 = vector.load %arg2[%c0_81, %c0_82, %c0_83] : memref<4x16x128xf32, #tpu.memory_space<vmem>>, vector<4x16x128xf32>
      %207 = vector.shape_cast %206 : vector<4x16x128xf32> to vector<64x128xf32>
      %c0_84 = arith.constant 0 : index
      %c0_85 = arith.constant 0 : index
      %208 = vector.load %arg18[%c0_84, %c0_85] : memref<64x128xf32, #tpu.memory_space<vmem>>, vector<64x128xf32>
      tpu.vector_store %arg18[%c0_84, %c0_85], %207 {strides = array<i32>} : memref<64x128xf32, #tpu.memory_space<vmem>>, vector<64x128xf32>,
    } else {
    }
    %c0 = arith.constant 0 : index
    %c0_1 = arith.constant 0 : index
    %3 = vector.load %arg18[%c0, %c0_1] : memref<64x128xf32, #tpu.memory_space<vmem>>, vector<64x128xf32>
    %c0_2 = arith.constant 0 : index
    %c0_3 = arith.constant 0 : index
    %c0_4 = arith.constant 0 : index
    %4 = vector.load %arg3[%c0_2, %c0_3, %c0_4] : memref<4x16x128xf32, #tpu.memory_space<vmem>>, vector<4x16x128xf32>
    %5 = vector.shape_cast %4 : vector<4x16x128xf32> to vector<64x128xf32>
    %6 = arith.addf %3, %5 : vector<64x128xf32>
    %c0_5 = arith.constant 0 : index
    %c0_6 = arith.constant 0 : index
    %c0_7 = arith.constant 0 : index
    %7 = vector.load %arg4[%c0_5, %c0_6, %c0_7] : memref<1x1x128xf32, #tpu.memory_space<vmem>>, vector<1x1x128xf32>
    %8 = vector.shape_cast %7 : vector<1x1x128xf32> to vector<1x128xf32>
    %c0_8 = arith.constant 0 : index
    %c0_9 = arith.constant 0 : index
    %c0_10 = arith.constant 0 : index
    %9 = vector.load %arg5[%c0_8, %c0_9, %c0_10] : memref<1x1x128xf32, #tpu.memory_space<vmem>>, vector<1x1x128xf32>
    %10 = vector.shape_cast %9 : vector<1x1x128xf32> to vector<1x128xf32>
    %cst = arith.constant dense<0.000000e+00> : vector<64xf32>
    %11 = vector.multi_reduction <add>, %6, %cst [1] : vector<64x128xf32> to vector<64xf32>
    %12 = vector.shape_cast %11 : vector<64xf32> to vector<64x1xf32>
    %cst_11 = arith.constant 1.280000e+02 : f32
    %13 = vector.broadcast %cst_11 : f32 to vector<64x1xf32>
    %14 = arith.divf %12, %13 : vector<64x1xf32>
    %15 = vector.broadcast %14 : vector<64x1xf32> to vector<64x128xf32>
    %16 = arith.subf %6, %15 : vector<64x128xf32>
    %17 = arith.mulf %16, %16 : vector<64x128xf32>
    %cst_12 = arith.constant dense<0.000000e+00> : vector<64xf32>
    %18 = vector.multi_reduction <add>, %17, %cst_12 [1] : vector<64x128xf32> to vector<64xf32>
    %19 = vector.shape_cast %18 : vector<64xf32> to vector<64x1xf32>
    %cst_13 = arith.constant 1.280000e+02 : f32
    %20 = vector.broadcast %cst_13 : f32 to vector<64x1xf32>
    %21 = arith.divf %19, %20 : vector<64x1xf32>
    %22 = vector.broadcast %14 : vector<64x1xf32> to vector<64x128xf32>
    %23 = arith.subf %6, %22 : vector<64x128xf32>
    %cst_14 = arith.constant 9.99999974E-6 : f32
    %24 = vector.broadcast %cst_14 : f32 to vector<64x1xf32>
    %25 = arith.addf %21, %24 : vector<64x1xf32>
    %26 = math.rsqrt %25 : vector<64x1xf32>
    %27 = vector.broadcast %26 : vector<64x1xf32> to vector<64x128xf32>
    %28 = arith.mulf %23, %27 : vector<64x128xf32>
    %29 = vector.broadcast %8 : vector<1x128xf32> to vector<64x128xf32>
    %30 = arith.mulf %28, %29 : vector<64x128xf32>
    %31 = vector.broadcast %10 : vector<1x128xf32> to vector<64x128xf32>
    %32 = arith.addf %30, %31 : vector<64x128xf32>
    %33 = arith.truncf %32 : vector<64x128xf32> to vector<64x128xbf16>
    %c0_15 = arith.constant 0 : index
    %c0_16 = arith.constant 0 : index
    %c0_17 = arith.constant 0 : index
    %34 = vector.load %arg6[%c0_15, %c0_16, %c0_17] : memref<1x128x384xbf16, #tpu.memory_space<vmem>>, vector<1x128x384xbf16>
    %35 = vector.shape_cast %34 : vector<1x128x384xbf16> to vector<128x384xbf16>
    %cst_18 = arith.constant dense<0.000000e+00> : vector<64x384xf32>
    %36 = tpu.matmul %33, %35, %cst_18 {dimension_numbers = #tpu.dot_dimension_numbers<[1], [0], [0], [1], [0, 0, 1, 1], [], []>} : vector<64x128xbf16>, vector<128x384xbf16>, vector<64x384xf32> -> vector<64x384xf32>
    %37 = vector.extract_strided_slice %36 {offsets = [0, 0], sizes = [64, 32], strides = [1, 1]} : vector<64x384xf32> to vector<64x32xf32>
    %38 = vector.shape_cast %37 : vector<64x32xf32> to vector<4x16x32xf32>
    %39 = arith.truncf %38 : vector<4x16x32xf32> to vector<4x16x32xbf16>
    %40 = vector.extract_strided_slice %36 {offsets = [0, 128], sizes = [64, 32], strides = [1, 1]} : vector<64x384xf32> to vector<64x32xf32>
    %41 = vector.shape_cast %40 : vector<64x32xf32> to vector<4x16x32xf32>
    %42 = arith.truncf %41 : vector<4x16x32xf32> to vector<4x16x32xbf16>
    %43 = vector.extract_strided_slice %36 {offsets = [0, 256], sizes = [64, 32], strides = [1, 1]} : vector<64x384xf32> to vector<64x32xf32>
    %44 = vector.shape_cast %43 : vector<64x32xf32> to vector<4x16x32xf32>
    %45 = arith.truncf %44 : vector<4x16x32xf32> to vector<4x16x32xbf16>
    "tpu.trace_start"() <{level = 10 : i32, message = "bqd,bkd->bqk"}> : () -> ()
    %cst_19 = arith.constant dense<0.000000e+00> : vector<4x16x16xf32>
    %46 = tpu.matmul %39, %42, %cst_19 {dimension_numbers = #tpu.dot_dimension_numbers<[2], [2], [1], [1], [0, 0, 0, 1, 1, 1], [0], [0]>} : vector<4x16x32xbf16>, vector<4x16x32xbf16>, vector<4x16x16xf32> -> vector<4x16x16xf32>
    "tpu.trace_stop"() : () -> ()
    %cst_20 = arith.constant dense<0xFF800000> : vector<4x16xf32>
    %47 = vector.multi_reduction <maximumf>, %46, %cst_20 [2] : vector<4x16x16xf32> to vector<4x16xf32>
    %48 = vector.shape_cast %47 : vector<4x16xf32> to vector<4x16x1xf32>
    %49 = vector.broadcast %48 : vector<4x16x1xf32> to vector<4x16x16xf32>
    %50 = arith.subf %46, %49 : vector<4x16x16xf32>
    %51 = math.exp %50 : vector<4x16x16xf32>
    %cst_21 = arith.constant dense<0.000000e+00> : vector<4x16xf32>
    %52 = vector.multi_reduction <add>, %51, %cst_21 [2] : vector<4x16x16xf32> to vector<4x16xf32>
    %53 = vector.shape_cast %52 : vector<4x16xf32> to vector<4x16x1xf32>
    %54 = tpu.reciprocal %53 {approx = true} : vector<4x16x1xf32> -> vector<4x16x1xf32>
    %55 = vector.broadcast %54 : vector<4x16x1xf32> to vector<4x16x16xf32>
    %56 = arith.mulf %51, %55 : vector<4x16x16xf32>
    %57 = arith.truncf %56 : vector<4x16x16xf32> to vector<4x16x16xbf16>
    "tpu.trace_start"() <{level = 10 : i32, message = "bqk,bkd->bqd"}> : () -> ()
    %cst_22 = arith.constant dense<0.000000e+00> : vector<4x16x32xf32>
    %58 = tpu.matmul %57, %45, %cst_22 {dimension_numbers = #tpu.dot_dimension_numbers<[2], [1], [1], [2], [0, 0, 0, 1, 1, 2], [0], [0]>} : vector<4x16x16xbf16>, vector<4x16x32xbf16>, vector<4x16x32xf32> -> vector<4x16x32xf32>
    "tpu.trace_stop"() : () -> ()
    %59 = vector.shape_cast %58 : vector<4x16x32xf32> to vector<64x32xf32>
    %60 = arith.truncf %59 : vector<64x32xf32> to vector<64x32xbf16>
    %c0_23 = arith.constant 0 : index
    %c0_24 = arith.constant 0 : index
    %61 = vector.load %arg19[%c0_23, %c0_24] : memref<64x128xbf16, #tpu.memory_space<vmem>>, vector<64x32xbf16>
    tpu.vector_store %arg19[%c0_23, %c0_24], %60 {strides = array<i32>} : memref<64x128xbf16, #tpu.memory_space<vmem>>, vector<64x32xbf16>,
    %62 = vector.extract_strided_slice %36 {offsets = [0, 32], sizes = [64, 32], strides = [1, 1]} : vector<64x384xf32> to vector<64x32xf32>
    %63 = vector.shape_cast %62 : vector<64x32xf32> to vector<4x16x32xf32>
    %64 = arith.truncf %63 : vector<4x16x32xf32> to vector<4x16x32xbf16>
    %65 = vector.extract_strided_slice %36 {offsets = [0, 160], sizes = [64, 32], strides = [1, 1]} : vector<64x384xf32> to vector<64x32xf32>
    %66 = vector.shape_cast %65 : vector<64x32xf32> to vector<4x16x32xf32>
    %67 = arith.truncf %66 : vector<4x16x32xf32> to vector<4x16x32xbf16>
    %68 = vector.extract_strided_slice %36 {offsets = [0, 288], sizes = [64, 32], strides = [1, 1]} : vector<64x384xf32> to vector<64x32xf32>
    %69 = vector.shape_cast %68 : vector<64x32xf32> to vector<4x16x32xf32>
    %70 = arith.truncf %69 : vector<4x16x32xf32> to vector<4x16x32xbf16>
    "tpu.trace_start"() <{level = 10 : i32, message = "bqd,bkd->bqk"}> : () -> ()
    %cst_25 = arith.constant dense<0.000000e+00> : vector<4x16x16xf32>
    %71 = tpu.matmul %64, %67, %cst_25 {dimension_numbers = #tpu.dot_dimension_numbers<[2], [2], [1], [1], [0, 0, 0, 1, 1, 1], [0], [0]>} : vector<4x16x32xbf16>, vector<4x16x32xbf16>, vector<4x16x16xf32> -> vector<4x16x16xf32>
    "tpu.trace_stop"() : () -> ()
    %cst_26 = arith.constant dense<0xFF800000> : vector<4x16xf32>
    %72 = vector.multi_reduction <maximumf>, %71, %cst_26 [2] : vector<4x16x16xf32> to vector<4x16xf32>
    %73 = vector.shape_cast %72 : vector<4x16xf32> to vector<4x16x1xf32>
    %74 = vector.broadcast %73 : vector<4x16x1xf32> to vector<4x16x16xf32>
    %75 = arith.subf %71, %74 : vector<4x16x16xf32>
    %76 = math.exp %75 : vector<4x16x16xf32>
    %cst_27 = arith.constant dense<0.000000e+00> : vector<4x16xf32>
    %77 = vector.multi_reduction <add>, %76, %cst_27 [2] : vector<4x16x16xf32> to vector<4x16xf32>
    %78 = vector.shape_cast %77 : vector<4x16xf32> to vector<4x16x1xf32>
    %79 = tpu.reciprocal %78 {approx = true} : vector<4x16x1xf32> -> vector<4x16x1xf32>
    %80 = vector.broadcast %79 : vector<4x16x1xf32> to vector<4x16x16xf32>
    %81 = arith.mulf %76, %80 : vector<4x16x16xf32>
    %82 = arith.truncf %81 : vector<4x16x16xf32> to vector<4x16x16xbf16>
    "tpu.trace_start"() <{level = 10 : i32, message = "bqk,bkd->bqd"}> : () -> ()
    %cst_28 = arith.constant dense<0.000000e+00> : vector<4x16x32xf32>
    %83 = tpu.matmul %82, %70, %cst_28 {dimension_numbers = #tpu.dot_dimension_numbers<[2], [1], [1], [2], [0, 0, 0, 1, 1, 2], [0], [0]>} : vector<4x16x16xbf16>, vector<4x16x32xbf16>, vector<4x16x32xf32> -> vector<4x16x32xf32>
    "tpu.trace_stop"() : () -> ()
    %84 = vector.shape_cast %83 : vector<4x16x32xf32> to vector<64x32xf32>
    %85 = arith.truncf %84 : vector<64x32xf32> to vector<64x32xbf16>
    %c0_29 = arith.constant 0 : index
    %c32 = arith.constant 32 : index
    %86 = vector.load %arg19[%c0_29, %c32] : memref<64x128xbf16, #tpu.memory_space<vmem>>, vector<64x32xbf16>
    tpu.vector_store %arg19[%c0_29, %c32], %85 {strides = array<i32>} : memref<64x128xbf16, #tpu.memory_space<vmem>>, vector<64x32xbf16>,
    %87 = vector.extract_strided_slice %36 {offsets = [0, 64], sizes = [64, 32], strides = [1, 1]} : vector<64x384xf32> to vector<64x32xf32>
    %88 = vector.shape_cast %87 : vector<64x32xf32> to vector<4x16x32xf32>
    %89 = arith.truncf %88 : vector<4x16x32xf32> to vector<4x16x32xbf16>
    %90 = vector.extract_strided_slice %36 {offsets = [0, 192], sizes = [64, 32], strides = [1, 1]} : vector<64x384xf32> to vector<64x32xf32>
    %91 = vector.shape_cast %90 : vector<64x32xf32> to vector<4x16x32xf32>
    %92 = arith.truncf %91 : vector<4x16x32xf32> to vector<4x16x32xbf16>
    %93 = vector.extract_strided_slice %36 {offsets = [0, 320], sizes = [64, 32], strides = [1, 1]} : vector<64x384xf32> to vector<64x32xf32>
    %94 = vector.shape_cast %93 : vector<64x32xf32> to vector<4x16x32xf32>
    %95 = arith.truncf %94 : vector<4x16x32xf32> to vector<4x16x32xbf16>
    "tpu.trace_start"() <{level = 10 : i32, message = "bqd,bkd->bqk"}> : () -> ()
    %cst_30 = arith.constant dense<0.000000e+00> : vector<4x16x16xf32>
    %96 = tpu.matmul %89, %92, %cst_30 {dimension_numbers = #tpu.dot_dimension_numbers<[2], [2], [1], [1], [0, 0, 0, 1, 1, 1], [0], [0]>} : vector<4x16x32xbf16>, vector<4x16x32xbf16>, vector<4x16x16xf32> -> vector<4x16x16xf32>
    "tpu.trace_stop"() : () -> ()
    %cst_31 = arith.constant dense<0xFF800000> : vector<4x16xf32>
    %97 = vector.multi_reduction <maximumf>, %96, %cst_31 [2] : vector<4x16x16xf32> to vector<4x16xf32>
    %98 = vector.shape_cast %97 : vector<4x16xf32> to vector<4x16x1xf32>
    %99 = vector.broadcast %98 : vector<4x16x1xf32> to vector<4x16x16xf32>
    %100 = arith.subf %96, %99 : vector<4x16x16xf32>
    %101 = math.exp %100 : vector<4x16x16xf32>
    %cst_32 = arith.constant dense<0.000000e+00> : vector<4x16xf32>
    %102 = vector.multi_reduction <add>, %101, %cst_32 [2] : vector<4x16x16xf32> to vector<4x16xf32>
    %103 = vector.shape_cast %102 : vector<4x16xf32> to vector<4x16x1xf32>
    %104 = tpu.reciprocal %103 {approx = true} : vector<4x16x1xf32> -> vector<4x16x1xf32>
    %105 = vector.broadcast %104 : vector<4x16x1xf32> to vector<4x16x16xf32>
    %106 = arith.mulf %101, %105 : vector<4x16x16xf32>
    %107 = arith.truncf %106 : vector<4x16x16xf32> to vector<4x16x16xbf16>
    "tpu.trace_start"() <{level = 10 : i32, message = "bqk,bkd->bqd"}> : () -> ()
    %cst_33 = arith.constant dense<0.000000e+00> : vector<4x16x32xf32>
    %108 = tpu.matmul %107, %95, %cst_33 {dimension_numbers = #tpu.dot_dimension_numbers<[2], [1], [1], [2], [0, 0, 0, 1, 1, 2], [0], [0]>} : vector<4x16x16xbf16>, vector<4x16x32xbf16>, vector<4x16x32xf32> -> vector<4x16x32xf32>
    "tpu.trace_stop"() : () -> ()
    %109 = vector.shape_cast %108 : vector<4x16x32xf32> to vector<64x32xf32>
    %110 = arith.truncf %109 : vector<64x32xf32> to vector<64x32xbf16>
    %c0_34 = arith.constant 0 : index
    %c64 = arith.constant 64 : index
    %111 = vector.load %arg19[%c0_34, %c64] : memref<64x128xbf16, #tpu.memory_space<vmem>>, vector<64x32xbf16>
    tpu.vector_store %arg19[%c0_34, %c64], %110 {strides = array<i32>} : memref<64x128xbf16, #tpu.memory_space<vmem>>, vector<64x32xbf16>,
    %112 = vector.extract_strided_slice %36 {offsets = [0, 96], sizes = [64, 32], strides = [1, 1]} : vector<64x384xf32> to vector<64x32xf32>
    %113 = vector.shape_cast %112 : vector<64x32xf32> to vector<4x16x32xf32>
    %114 = arith.truncf %113 : vector<4x16x32xf32> to vector<4x16x32xbf16>
    %115 = vector.extract_strided_slice %36 {offsets = [0, 224], sizes = [64, 32], strides = [1, 1]} : vector<64x384xf32> to vector<64x32xf32>
    %116 = vector.shape_cast %115 : vector<64x32xf32> to vector<4x16x32xf32>
    %117 = arith.truncf %116 : vector<4x16x32xf32> to vector<4x16x32xbf16>
    %118 = vector.extract_strided_slice %36 {offsets = [0, 352], sizes = [64, 32], strides = [1, 1]} : vector<64x384xf32> to vector<64x32xf32>
    %119 = vector.shape_cast %118 : vector<64x32xf32> to vector<4x16x32xf32>
    %120 = arith.truncf %119 : vector<4x16x32xf32> to vector<4x16x32xbf16>
    "tpu.trace_start"() <{level = 10 : i32, message = "bqd,bkd->bqk"}> : () -> ()
    %cst_35 = arith.constant dense<0.000000e+00> : vector<4x16x16xf32>
    %121 = tpu.matmul %114, %117, %cst_35 {dimension_numbers = #tpu.dot_dimension_numbers<[2], [2], [1], [1], [0, 0, 0, 1, 1, 1], [0], [0]>} : vector<4x16x32xbf16>, vector<4x16x32xbf16>, vector<4x16x16xf32> -> vector<4x16x16xf32>
    "tpu.trace_stop"() : () -> ()
    %cst_36 = arith.constant dense<0xFF800000> : vector<4x16xf32>
    %122 = vector.multi_reduction <maximumf>, %121, %cst_36 [2] : vector<4x16x16xf32> to vector<4x16xf32>
    %123 = vector.shape_cast %122 : vector<4x16xf32> to vector<4x16x1xf32>
    %124 = vector.broadcast %123 : vector<4x16x1xf32> to vector<4x16x16xf32>
    %125 = arith.subf %121, %124 : vector<4x16x16xf32>
    %126 = math.exp %125 : vector<4x16x16xf32>
    %cst_37 = arith.constant dense<0.000000e+00> : vector<4x16xf32>
    %127 = vector.multi_reduction <add>, %126, %cst_37 [2] : vector<4x16x16xf32> to vector<4x16xf32>
    %128 = vector.shape_cast %127 : vector<4x16xf32> to vector<4x16x1xf32>
    %129 = tpu.reciprocal %128 {approx = true} : vector<4x16x1xf32> -> vector<4x16x1xf32>
    %130 = vector.broadcast %129 : vector<4x16x1xf32> to vector<4x16x16xf32>
    %131 = arith.mulf %126, %130 : vector<4x16x16xf32>
    %132 = arith.truncf %131 : vector<4x16x16xf32> to vector<4x16x16xbf16>
    "tpu.trace_start"() <{level = 10 : i32, message = "bqk,bkd->bqd"}> : () -> ()
    %cst_38 = arith.constant dense<0.000000e+00> : vector<4x16x32xf32>
    %133 = tpu.matmul %132, %120, %cst_38 {dimension_numbers = #tpu.dot_dimension_numbers<[2], [1], [1], [2], [0, 0, 0, 1, 1, 2], [0], [0]>} : vector<4x16x16xbf16>, vector<4x16x32xbf16>, vector<4x16x32xf32> -> vector<4x16x32xf32>
    "tpu.trace_stop"() : () -> ()
    %134 = vector.shape_cast %133 : vector<4x16x32xf32> to vector<64x32xf32>
    %135 = arith.truncf %134 : vector<64x32xf32> to vector<64x32xbf16>
    %c0_39 = arith.constant 0 : index
    %c96 = arith.constant 96 : index
    %136 = vector.load %arg19[%c0_39, %c96] : memref<64x128xbf16, #tpu.memory_space<vmem>>, vector<64x32xbf16>
    tpu.vector_store %arg19[%c0_39, %c96], %135 {strides = array<i32>} : memref<64x128xbf16, #tpu.memory_space<vmem>>, vector<64x32xbf16>,
    %c0_40 = arith.constant 0 : index
    %c0_41 = arith.constant 0 : index
    %137 = vector.load %arg19[%c0_40, %c0_41] : memref<64x128xbf16, #tpu.memory_space<vmem>>, vector<64x128xbf16>
    %c0_42 = arith.constant 0 : index
    %c0_43 = arith.constant 0 : index
    %c0_44 = arith.constant 0 : index
    %138 = vector.load %arg7[%c0_42, %c0_43, %c0_44] : memref<1x128x128xbf16, #tpu.memory_space<vmem>>, vector<1x128x128xbf16>
    %139 = vector.shape_cast %138 : vector<1x128x128xbf16> to vector<128x128xbf16>
    %cst_45 = arith.constant dense<0.000000e+00> : vector<64x128xf32>
    %140 = tpu.matmul %137, %139, %cst_45 {dimension_numbers = #tpu.dot_dimension_numbers<[1], [0], [0], [1], [0, 0, 1, 1], [], []>} : vector<64x128xbf16>, vector<128x128xbf16>, vector<64x128xf32> -> vector<64x128xf32>
    %c0_46 = arith.constant 0 : index
    %c0_47 = arith.constant 0 : index
    %c0_48 = arith.constant 0 : index
    %141 = vector.load %arg8[%c0_46, %c0_47, %c0_48] : memref<1x1x128xf32, #tpu.memory_space<vmem>>, vector<1x1x128xf32>
    %142 = vector.shape_cast %141 : vector<1x1x128xf32> to vector<1x128xf32>
    %143 = vector.broadcast %142 : vector<1x128xf32> to vector<64x128xf32>
    %144 = arith.addf %140, %143 : vector<64x128xf32>
    %145 = arith.addf %6, %144 : vector<64x128xf32>
    %c0_49 = arith.constant 0 : index
    %c0_50 = arith.constant 0 : index
    %c0_51 = arith.constant 0 : index
    %146 = vector.load %arg9[%c0_49, %c0_50, %c0_51] : memref<1x1x128xf32, #tpu.memory_space<vmem>>, vector<1x1x128xf32>
    %147 = vector.shape_cast %146 : vector<1x1x128xf32> to vector<1x128xf32>
    %c0_52 = arith.constant 0 : index
    %c0_53 = arith.constant 0 : index
    %c0_54 = arith.constant 0 : index
    %148 = vector.load %arg10[%c0_52, %c0_53, %c0_54] : memref<1x1x128xf32, #tpu.memory_space<vmem>>, vector<1x1x128xf32>
    %149 = vector.shape_cast %148 : vector<1x1x128xf32> to vector<1x128xf32>
    %cst_55 = arith.constant dense<0.000000e+00> : vector<64xf32>
    %150 = vector.multi_reduction <add>, %145, %cst_55 [1] : vector<64x128xf32> to vector<64xf32>
    %151 = vector.shape_cast %150 : vector<64xf32> to vector<64x1xf32>
    %cst_56 = arith.constant 1.280000e+02 : f32
    %152 = vector.broadcast %cst_56 : f32 to vector<64x1xf32>
    %153 = arith.divf %151, %152 : vector<64x1xf32>
    %154 = vector.broadcast %153 : vector<64x1xf32> to vector<64x128xf32>
    %155 = arith.subf %145, %154 : vector<64x128xf32>
    %156 = arith.mulf %155, %155 : vector<64x128xf32>
    %cst_57 = arith.constant dense<0.000000e+00> : vector<64xf32>
    %157 = vector.multi_reduction <add>, %156, %cst_57 [1] : vector<64x128xf32> to vector<64xf32>
    %158 = vector.shape_cast %157 : vector<64xf32> to vector<64x1xf32>
    %cst_58 = arith.constant 1.280000e+02 : f32
    %159 = vector.broadcast %cst_58 : f32 to vector<64x1xf32>
    %160 = arith.divf %158, %159 : vector<64x1xf32>
    %161 = vector.broadcast %153 : vector<64x1xf32> to vector<64x128xf32>
    %162 = arith.subf %145, %161 : vector<64x128xf32>
    %cst_59 = arith.constant 9.99999974E-6 : f32
    %163 = vector.broadcast %cst_59 : f32 to vector<64x1xf32>
    %164 = arith.addf %160, %163 : vector<64x1xf32>
    %165 = math.rsqrt %164 : vector<64x1xf32>
    %166 = vector.broadcast %165 : vector<64x1xf32> to vector<64x128xf32>
    %167 = arith.mulf %162, %166 : vector<64x128xf32>
    %168 = vector.broadcast %147 : vector<1x128xf32> to vector<64x128xf32>
    %169 = arith.mulf %167, %168 : vector<64x128xf32>
    %170 = vector.broadcast %149 : vector<1x128xf32> to vector<64x128xf32>
    %171 = arith.addf %169, %170 : vector<64x128xf32>
    %172 = arith.truncf %171 : vector<64x128xf32> to vector<64x128xbf16>
    %c0_60 = arith.constant 0 : index
    %c0_61 = arith.constant 0 : index
    %c0_62 = arith.constant 0 : index
    %173 = vector.load %arg11[%c0_60, %c0_61, %c0_62] : memref<1x128x512xbf16, #tpu.memory_space<vmem>>, vector<1x128x512xbf16>
    %174 = vector.shape_cast %173 : vector<1x128x512xbf16> to vector<128x512xbf16>
    %cst_63 = arith.constant dense<0.000000e+00> : vector<64x512xf32>
    %175 = tpu.matmul %172, %174, %cst_63 {dimension_numbers = #tpu.dot_dimension_numbers<[1], [0], [0], [1], [0, 0, 1, 1], [], []>} : vector<64x128xbf16>, vector<128x512xbf16>, vector<64x512xf32> -> vector<64x512xf32>
    %c0_64 = arith.constant 0 : index
    %c0_65 = arith.constant 0 : index
    %c0_66 = arith.constant 0 : index
    %176 = vector.load %arg12[%c0_64, %c0_65, %c0_66] : memref<1x1x512xf32, #tpu.memory_space<vmem>>, vector<1x1x512xf32>
    %177 = vector.shape_cast %176 : vector<1x1x512xf32> to vector<1x512xf32>
    %178 = vector.broadcast %177 : vector<1x512xf32> to vector<64x512xf32>
    %179 = arith.addf %175, %178 : vector<64x512xf32>
    %180 = arith.mulf %179, %179 : vector<64x512xf32>
    %181 = arith.mulf %179, %180 : vector<64x512xf32>
    %cst_67 = arith.constant 4.471500e-02 : f32
    %182 = vector.broadcast %cst_67 : f32 to vector<64x512xf32>
    %183 = arith.mulf %182, %181 : vector<64x512xf32>
    %184 = arith.addf %179, %183 : vector<64x512xf32>
    %cst_68 = arith.constant 0.797884583 : f32
    %185 = vector.broadcast %cst_68 : f32 to vector<64x512xf32>
    %186 = arith.mulf %185, %184 : vector<64x512xf32>
    %187 = math.tanh %186 : vector<64x512xf32>
    %cst_69 = arith.constant 1.000000e+00 : f32
    %188 = vector.broadcast %cst_69 : f32 to vector<64x512xf32>
    %189 = arith.addf %188, %187 : vector<64x512xf32>
    %cst_70 = arith.constant 5.000000e-01 : f32
    %190 = vector.broadcast %cst_70 : f32 to vector<64x512xf32>
    %191 = arith.mulf %190, %189 : vector<64x512xf32>
    %192 = arith.mulf %179, %191 : vector<64x512xf32>
    %193 = arith.truncf %192 : vector<64x512xf32> to vector<64x512xbf16>
    %c0_71 = arith.constant 0 : index
    %c0_72 = arith.constant 0 : index
    %c0_73 = arith.constant 0 : index
    %194 = vector.load %arg13[%c0_71, %c0_72, %c0_73] : memref<1x512x128xbf16, #tpu.memory_space<vmem>>, vector<1x512x128xbf16>
    %195 = vector.shape_cast %194 : vector<1x512x128xbf16> to vector<512x128xbf16>
    %cst_74 = arith.constant dense<0.000000e+00> : vector<64x128xf32>
    %196 = tpu.matmul %193, %195, %cst_74 {dimension_numbers = #tpu.dot_dimension_numbers<[1], [0], [0], [1], [0, 0, 1, 1], [], []>} : vector<64x512xbf16>, vector<512x128xbf16>, vector<64x128xf32> -> vector<64x128xf32>
    %c0_75 = arith.constant 0 : index
    %c0_76 = arith.constant 0 : index
    %c0_77 = arith.constant 0 : index
    %197 = vector.load %arg14[%c0_75, %c0_76, %c0_77] : memref<1x1x128xf32, #tpu.memory_space<vmem>>, vector<1x1x128xf32>
    %198 = vector.shape_cast %197 : vector<1x1x128xf32> to vector<1x128xf32>
    %199 = vector.broadcast %198 : vector<1x128xf32> to vector<64x128xf32>
    %200 = arith.addf %196, %199 : vector<64x128xf32>
    %201 = arith.addf %145, %200 : vector<64x128xf32>
    %c0_78 = arith.constant 0 : index
    %c0_79 = arith.constant 0 : index
    %202 = vector.load %arg18[%c0_78, %c0_79] : memref<64x128xf32, #tpu.memory_space<vmem>>, vector<64x128xf32>
    tpu.vector_store %arg18[%c0_78, %c0_79], %201 {strides = array<i32>} : memref<64x128xf32, #tpu.memory_space<vmem>>, vector<64x128xf32>,
    %c1_i32 = arith.constant 1 : i32
    %203 = arith.cmpi eq, %arg1, %c1_i32 : i32
    %204 = arith.extui %203 : i1 to i32
    %c0_i32_80 = arith.constant 0 : i32
    %205 = arith.cmpi ne, %204, %c0_i32_80 : i32
    scf.if %205 {
      %c0_81 = arith.constant 0 : index
      %c0_82 = arith.constant 0 : index
      %c0_83 = arith.constant 0 : index
      %206 = vector.load %arg15[%c0_81, %c0_82, %c0_83] : memref<1x1x128xf32, #tpu.memory_space<vmem>>, vector<1x1x128xf32>
      %207 = vector.shape_cast %206 : vector<1x1x128xf32> to vector<1x128xf32>
      %c0_84 = arith.constant 0 : index
      %c0_85 = arith.constant 0 : index
      %c0_86 = arith.constant 0 : index
      %208 = vector.load %arg16[%c0_84, %c0_85, %c0_86] : memref<1x1x128xf32, #tpu.memory_space<vmem>>, vector<1x1x128xf32>
      %209 = vector.shape_cast %208 : vector<1x1x128xf32> to vector<1x128xf32>
      %cst_87 = arith.constant dense<0.000000e+00> : vector<64xf32>
      %210 = vector.multi_reduction <add>, %201, %cst_87 [1] : vector<64x128xf32> to vector<64xf32>
      %211 = vector.shape_cast %210 : vector<64xf32> to vector<64x1xf32>
      %cst_88 = arith.constant 1.280000e+02 : f32
      %212 = vector.broadcast %cst_88 : f32 to vector<64x1xf32>
      %213 = arith.divf %211, %212 : vector<64x1xf32>
      %214 = vector.broadcast %213 : vector<64x1xf32> to vector<64x128xf32>
      %215 = arith.subf %201, %214 : vector<64x128xf32>
      %216 = arith.mulf %215, %215 : vector<64x128xf32>
      %cst_89 = arith.constant dense<0.000000e+00> : vector<64xf32>
      %217 = vector.multi_reduction <add>, %216, %cst_89 [1] : vector<64x128xf32> to vector<64xf32>
      %218 = vector.shape_cast %217 : vector<64xf32> to vector<64x1xf32>
      %cst_90 = arith.constant 1.280000e+02 : f32
      %219 = vector.broadcast %cst_90 : f32 to vector<64x1xf32>
      %220 = arith.divf %218, %219 : vector<64x1xf32>
      %221 = vector.broadcast %213 : vector<64x1xf32> to vector<64x128xf32>
      %222 = arith.subf %201, %221 : vector<64x128xf32>
      %cst_91 = arith.constant 9.99999996E-13 : f32
      %223 = vector.broadcast %cst_91 : f32 to vector<64x1xf32>
      %224 = arith.addf %220, %223 : vector<64x1xf32>
      %225 = math.rsqrt %224 : vector<64x1xf32>
      %226 = vector.broadcast %225 : vector<64x1xf32> to vector<64x128xf32>
      %227 = arith.mulf %222, %226 : vector<64x128xf32>
      %228 = vector.broadcast %207 : vector<1x128xf32> to vector<64x128xf32>
      %229 = arith.mulf %227, %228 : vector<64x128xf32>
      %230 = vector.broadcast %209 : vector<1x128xf32> to vector<64x128xf32>
      %231 = arith.addf %229, %230 : vector<64x128xf32>
      %232 = vector.shape_cast %231 : vector<64x128xf32> to vector<4x16x128xf32>
      %c0_92 = arith.constant 0 : index
      %c0_93 = arith.constant 0 : index
      %c0_94 = arith.constant 0 : index
      %233 = vector.load %arg17[%c0_92, %c0_93, %c0_94] : memref<4x16x128xf32, #tpu.memory_space<vmem>>, vector<4x16x128xf32>
      tpu.vector_store %arg17[%c0_92, %c0_93, %c0_94], %232 {strides = array<i32>} : memref<4x16x128xf32, #tpu.memory_space<vmem>>, vector<4x16x128xf32>,
    } else {
    }
    return
  }
  func.func @transform_0(%arg0: i32, %arg1: i32) -> (i32, i32, i32) {
    %c0_i32 = arith.constant 0 : i32
    %c0_i32_0 = arith.constant 0 : i32
    %c0_i32_1 = arith.constant 0 : i32
    return %arg0, %c0_i32, %c0_i32_0 : i32, i32, i32
  }
  func.func @transform_1(%arg0: i32, %arg1: i32) -> (i32, i32, i32) {
    %c0_i32 = arith.constant 0 : i32
    %c0_i32_0 = arith.constant 0 : i32
    %c0_i32_1 = arith.constant 0 : i32
    return %arg0, %c0_i32, %c0_i32_0 : i32, i32, i32
  }
  func.func @transform_2(%arg0: i32, %arg1: i32) -> (i32, i32, i32) {
    %c0_i32 = arith.constant 0 : i32
    %c0_i32_0 = arith.constant 0 : i32
    %c0_i32_1 = arith.constant 0 : i32
    return %arg1, %c0_i32, %c0_i32_0 : i32, i32, i32
  }
  func.func @transform_3(%arg0: i32, %arg1: i32) -> (i32, i32, i32) {
    %c0_i32 = arith.constant 0 : i32
    %c0_i32_0 = arith.constant 0 : i32
    %c0_i32_1 = arith.constant 0 : i32
    return %arg1, %c0_i32, %c0_i32_0 : i32, i32, i32
  }
  func.func @transform_4(%arg0: i32, %arg1: i32) -> (i32, i32, i32) {
    %c0_i32 = arith.constant 0 : i32
    %c0_i32_0 = arith.constant 0 : i32
    %c0_i32_1 = arith.constant 0 : i32
    return %arg1, %c0_i32, %c0_i32_0 : i32, i32, i32
  }
  func.func @transform_5(%arg0: i32, %arg1: i32) -> (i32, i32, i32) {
    %c0_i32 = arith.constant 0 : i32
    %c0_i32_0 = arith.constant 0 : i32
    %c0_i32_1 = arith.constant 0 : i32
    return %arg1, %c0_i32, %c0_i32_0 : i32, i32, i32
  }
  func.func @transform_6(%arg0: i32, %arg1: i32) -> (i32, i32, i32) {
    %c0_i32 = arith.constant 0 : i32
    %c0_i32_0 = arith.constant 0 : i32
    %c0_i32_1 = arith.constant 0 : i32
    return %arg1, %c0_i32, %c0_i32_0 : i32, i32, i32
  }
  func.func @transform_7(%arg0: i32, %arg1: i32) -> (i32, i32, i32) {
    %c0_i32 = arith.constant 0 : i32
    %c0_i32_0 = arith.constant 0 : i32
    %c0_i32_1 = arith.constant 0 : i32
    return %arg1, %c0_i32, %c0_i32_0 : i32, i32, i32
  }
  func.func @transform_8(%arg0: i32, %arg1: i32) -> (i32, i32, i32) {
    %c0_i32 = arith.constant 0 : i32
    %c0_i32_0 = arith.constant 0 : i32
    %c0_i32_1 = arith.constant 0 : i32
    return %arg1, %c0_i32, %c0_i32_0 : i32, i32, i32
  }
  func.func @transform_9(%arg0: i32, %arg1: i32) -> (i32, i32, i32) {
    %c0_i32 = arith.constant 0 : i32
    %c0_i32_0 = arith.constant 0 : i32
    %c0_i32_1 = arith.constant 0 : i32
    return %arg1, %c0_i32, %c0_i32_0 : i32, i32, i32
  }
  func.func @transform_10(%arg0: i32, %arg1: i32) -> (i32, i32, i32) {
    %c0_i32 = arith.constant 0 : i32
    %c0_i32_0 = arith.constant 0 : i32
    %c0_i32_1 = arith.constant 0 : i32
    return %arg1, %c0_i32, %c0_i32_0 : i32, i32, i32
  }
  func.func @transform_11(%arg0: i32, %arg1: i32) -> (i32, i32, i32) {
    %c0_i32 = arith.constant 0 : i32
    %c0_i32_0 = arith.constant 0 : i32
    %c0_i32_1 = arith.constant 0 : i32
    return %arg1, %c0_i32, %c0_i32_0 : i32, i32, i32
  }
  func.func @transform_12(%arg0: i32, %arg1: i32) -> (i32, i32, i32) {
    %c0_i32 = arith.constant 0 : i32
    %c0_i32_0 = arith.constant 0 : i32
    %c0_i32_1 = arith.constant 0 : i32
    return %arg1, %c0_i32, %c0_i32_0 : i32, i32, i32
  }
  func.func @transform_13(%arg0: i32, %arg1: i32) -> (i32, i32, i32) {
    %c0_i32 = arith.constant 0 : i32
    %c0_i32_0 = arith.constant 0 : i32
    %c0_i32_1 = arith.constant 0 : i32
    %c0_i32_2 = arith.constant 0 : i32
    return %c0_i32, %c0_i32_0, %c0_i32_1 : i32, i32, i32
  }
  func.func @transform_14(%arg0: i32, %arg1: i32) -> (i32, i32, i32) {
    %c0_i32 = arith.constant 0 : i32
    %c0_i32_0 = arith.constant 0 : i32
    %c0_i32_1 = arith.constant 0 : i32
    %c0_i32_2 = arith.constant 0 : i32
    return %c0_i32, %c0_i32_0, %c0_i32_1 : i32, i32, i32
  }
  func.func @transform_15(%arg0: i32, %arg1: i32) -> (i32, i32, i32) {
    %c0_i32 = arith.constant 0 : i32
    %c0_i32_0 = arith.constant 0 : i32
    %c0_i32_1 = arith.constant 0 : i32
    return %arg0, %c0_i32, %c0_i32_0 : i32, i32, i32
  }
}

</mosaic_0001>

<llo_original>
// kernel: tpu_custom_call.1
$region0: #{tpu_custom_call.1}
  #allocation0 [shape = 'u32[]', space=smem, size = 0x4, offset = 0x4, fixed_abs, tag = 'smem constant byte address 0x4 - core index']
  #allocation1 [shape = 'u32[144,128]{1,0:T(1,128)}', space=vmem, size = 0x12000, scoped, tag = 'internal scratch']
  #allocation2 [shape = 'f32[64,128]{1,0:T(8,128)}', space=vmem, size = 0x8000, scoped, tag = 'scratch operand']
  #allocation3 [shape = 'bf16[64,128]{1,0:T(16,128)(2,1)}', space=vmem, size = 0x4000, scoped, tag = 'scratch operand']
  %s0 = inlined_call_operand.hbm [shape: f32[4,16,128], index: 0, kind: input, shape index: {}]
  %s1 = inlined_call_operand.hbm [shape: f32[4,16,128], index: 1, kind: input, shape index: {}]
  %s2 = inlined_call_operand.vmem [shape: f32[2,1,128], index: 2, kind: input, shape index: {}]
  %s3 = inlined_call_operand.vmem [shape: f32[2,1,128], index: 3, kind: input, shape index: {}]
  %s4 = inlined_call_operand.hbm [shape: bf16[2,128,384], index: 4, kind: input, shape index: {}]
  %s5 = inlined_call_operand.hbm [shape: bf16[2,128,128], index: 5, kind: input, shape index: {}]
  %s6 = inlined_call_operand.vmem [shape: f32[2,1,128], index: 6, kind: input, shape index: {}]
  %s7 = inlined_call_operand.vmem [shape: f32[2,1,128], index: 7, kind: input, shape index: {}]
  %s8 = inlined_call_operand.vmem [shape: f32[2,1,128], index: 8, kind: input, shape index: {}]
  %s9 = inlined_call_operand.hbm [shape: bf16[2,128,512], index: 9, kind: input, shape index: {}]
  %s10 = inlined_call_operand.vmem [shape: f32[2,1,512], index: 10, kind: input, shape index: {}]
  %s11 = inlined_call_operand.hbm [shape: bf16[2,512,128], index: 11, kind: input, shape index: {}]
  %s12 = inlined_call_operand.vmem [shape: f32[2,1,128], index: 12, kind: input, shape index: {}]
  %s13 = inlined_call_operand.vmem [shape: f32[1,1,128], index: 13, kind: input, shape index: {}]
  %s14 = inlined_call_operand.vmem [shape: f32[1,1,128], index: 14, kind: input, shape index: {}]
  %s15 = inlined_call_operand.hbm [shape: f32[4,16,128], index: 15, kind: output, shape index: {}]
  %s16 = sld [smem:[#allocation0]]
  $region125: #{tpu_custom_call.1} parent=0
    _
  %s18 = ssub.s32 1, %s16
  %s19 = scalar_select 0, %s18, %s16
  $region1: #{tpu_custom_call.1} parent=0
    #allocation4 [shape = 'u8[32768]{0}', space=vmem, size = 0x8000, scoped, tag = 'input window, operand 0, single buffered']
    #allocation5 [shape = 's32[2]{0}', space=sflag, size = 0x8, scoped, tag = 'scoped memory for tpu_custom_call.1']
    #allocation6 [shape = 's32[2]{0}', space=sflag, size = 0x8, scoped, tag = 'scoped memory for tpu_custom_call.1']
    #allocation7 [shape = 'u8[32768]{0}', space=vmem, size = 0x8000, scoped, tag = 'input window, operand 1, single buffered']
    #allocation8 [shape = 's32[1]{0}', space=sflag, size = 0x4, scoped, tag = 'scoped memory for tpu_custom_call.1']
    #allocation9 [shape = 'u8[196608]{0}', space=vmem, size = 0x30000, scoped, tag = 'input window, operand 4']
    #allocation10 [shape = 'u8[65536]{0}', space=vmem, size = 0x10000, scoped, tag = 'input window, operand 5']
    #allocation11 [shape = 'u8[262144]{0}', space=vmem, size = 0x40000, scoped, tag = 'input window, operand 9']
    #allocation12 [shape = 'u8[262144]{0}', space=vmem, size = 0x40000, scoped, tag = 'input window, operand 11']
    #allocation13 [shape = 'u8[32768]{0}', space=vmem, size = 0x8000, scoped, tag = 'output window, operand 0, single buffered']
    %20 = vsyncpa [#allocation5], 0
    %21 = vsyncpa [#allocation8], 0
    %22 = vsyncpa [#allocation6], 0
    loop: start=0, step=1, limit=4
    $region2: #{tpu_custom_call.1} parent=1 // loop_pre_header
      _
    $region3: #{tpu_custom_call.1} parent=1 // loop_header
      %s24 = sphi 0, %s28
      %p25 = scmp.ge.s32.totalorder %s24, 4
      %s31 = sphi 0, %s43
      %s32 = sphi 0, %s39
      %s33 = sphi 0, %s31
      %s34 = sphi 0, %s32
      %s35 = sphi 0, %s33
      %s36 = sphi 0, %s34
      %s46 = sphi 0, %s48
      %s49 = sphi 0, %s46
      %s50 = sphi 0, %s49
      %s66 = sphi 0, %s50
      %s72 = sphi 0, %s74
      %s75 = sphi 0, %s72
      %s76 = sphi 0, %s75
      %s92 = sphi 0, %s76
      %s98 = sphi 0, %s100
      %s101 = sphi 0, %s98
      %s102 = sphi 0, %s101
      %s118 = sphi 0, %s102
      %s124 = sphi 0, %s126
      %s127 = sphi 0, %s124
      %s128 = sphi 0, %s127
      %s144 = sphi 0, %s128
      %s150 = sphi 0, %s152
      %s153 = sphi 0, %s150
      %s154 = sphi 0, %s153
      %s170 = sphi 0, %s154
      %s176 = sphi 0, %s178
      %s179 = sphi 0, %s176
      %s180 = sphi 0, %s179
      %s196 = sphi 0, %s180
      %s202 = sphi 0, %s204
      %s205 = sphi 0, %s202
      %s206 = sphi 0, %s205
      %s222 = sphi 0, %s206
      %s228 = sphi 0, %s230
      %s231 = sphi 0, %s228
      %s232 = sphi 0, %s231
      %s248 = sphi 0, %s232
      %s254 = sphi 0, %s256
      %s257 = sphi 0, %s254
      %s258 = sphi 0, %s257
      %s274 = sphi 0, %s258
      %s280 = sphi 0, %s282
      %s283 = sphi 0, %s280
      %s284 = sphi 0, %s283
      %s300 = sphi 0, %s284
      %s306 = sphi 0, %s308
      %s309 = sphi 0, %s306
      %s310 = sphi 0, %s309
      %s326 = sphi 0, %s310
      %s332 = sphi 0, %s334
      %s335 = sphi 0, %s332
      %s336 = sphi 0, %s335
      %s352 = sphi 0, %s336
      %s358 = sphi 0, %s360
      %s361 = sphi 0, %s358
      %s362 = sphi 0, %s361
      %s378 = sphi 0, %s362
      %s382 = sphi 0, %s382
      %s384 = sphi 0, %s382
      %s385 = sphi 0, %s384
      %s399 = sphi 0, %s385
      %s403 = sphi 0, %s403
      %s405 = sphi 0, %s403
      %s406 = sphi 0, %s405
      %s420 = sphi 0, %s406
      %s426 = sphi 0, %s428
      %s429 = sphi 0, %s426
      %s430 = sphi 0, %s429
      %s446 = sphi 0, %s430
    $region4: #{tpu_custom_call.1} parent=1 // loop_header_branch
      %27 = sbr.rel (%p25) target = $region8
    $region5: #{tpu_custom_call.1} parent=1 // loop_body
      %s29 = ssub.s32 %s24, 1
      %s30 = ssub.s32 %s24, 2
      %s37 = sadd.s32 1, %s32
      %p38 = scmp.ge.s32.totalorder %s37, 2
      %s39 = scalar_select %p38, 0, %s37
      %s40 = sadd.s32 1, %s31
      %s41 = scalar_select %p38, %s40, %s31
      %p42 = scmp.ge.s32.totalorder %s41, 1
      %s43 = scalar_select %p42, 0, %s41
      %s44 = ssub.s32 %s31, %s43
      %p45 = scmp.eq.s32.totalorder %s44, 0
      %s47 = sadd.s32 %s46, 1
      %s48 = scalar_select %p45, %s46, %s47
      %p51 = pneg %p45
      %p52 = scmp.eq.s32.totalorder %s24, 1
      %p53 = por %p51, %p52
      %p54 = scmp.ne.s32.totalorder %s46, %s49
      %p55 = scmp.eq.s32.totalorder %s24, 0
      %p56 = por %p54, %p55
      %p57 = scmp.ne.s32.totalorder %s46, %s49
      %p58 = scmp.eq.s32.totalorder %s29, 1
      %p59 = por %p57, %p58
      %p60 = scmp.ne.s32.totalorder %s49, %s50
      %p61 = scmp.eq.s32.totalorder %s29, 0
      %p62 = por %p60, %p61
      %p63 = scmp.ne.s32.totalorder %s49, %s50
      %p64 = scmp.eq.s32.totalorder %s30, 1
      %p65 = por %p63, %p64
      %p67 = scmp.ne.s32.totalorder %s50, %s66
      %p68 = scmp.eq.s32.totalorder %s30, 0
      %p69 = por %p67, %p68
      %s70 = ssub.s32 %s31, %s43
      %p71 = scmp.eq.s32.totalorder %s70, 0
      %s73 = sadd.s32 %s72, 1
      %s74 = scalar_select %p71, %s72, %s73
      %p77 = pneg %p71
      %p78 = scmp.eq.s32.totalorder %s24, 1
      %p79 = por %p77, %p78
      %p80 = scmp.ne.s32.totalorder %s72, %s75
      %p81 = scmp.eq.s32.totalorder %s24, 0
      %p82 = por %p80, %p81
      %p83 = scmp.ne.s32.totalorder %s72, %s75
      %p84 = scmp.eq.s32.totalorder %s29, 1
      %p85 = por %p83, %p84
      %p86 = scmp.ne.s32.totalorder %s75, %s76
      %p87 = scmp.eq.s32.totalorder %s29, 0
      %p88 = por %p86, %p87
      %p89 = scmp.ne.s32.totalorder %s75, %s76
      %p90 = scmp.eq.s32.totalorder %s30, 1
      %p91 = por %p89, %p90
      %p93 = scmp.ne.s32.totalorder %s76, %s92
      %p94 = scmp.eq.s32.totalorder %s30, 0
      %p95 = por %p93, %p94
      %s96 = ssub.s32 %s32, %s39
      %p97 = scmp.eq.s32.totalorder %s96, 0
      %s99 = sadd.s32 %s98, 1
      %s100 = scalar_select %p97, %s98, %s99
      %p103 = pneg %p97
      %p104 = scmp.eq.s32.totalorder %s24, 1
      %p105 = por %p103, %p104
      %p106 = scmp.ne.s32.totalorder %s98, %s101
      %p107 = scmp.eq.s32.totalorder %s24, 0
      %p108 = por %p106, %p107
      %p109 = scmp.ne.s32.totalorder %s98, %s101
      %p110 = scmp.eq.s32.totalorder %s29, 1
      %p111 = por %p109, %p110
      %p112 = scmp.ne.s32.totalorder %s101, %s102
      %p113 = scmp.eq.s32.totalorder %s29, 0
      %p114 = por %p112, %p113
      %p115 = scmp.ne.s32.totalorder %s101, %s102
      %p116 = scmp.eq.s32.totalorder %s30, 1
      %p117 = por %p115, %p116
      %p119 = scmp.ne.s32.totalorder %s102, %s118
      %p120 = scmp.eq.s32.totalorder %s30, 0
      %p121 = por %p119, %p120
      %s122 = ssub.s32 %s32, %s39
      %p123 = scmp.eq.s32.totalorder %s122, 0
      %s125 = sadd.s32 %s124, 1
      %s126 = scalar_select %p123, %s124, %s125
      %p129 = pneg %p123
      %p130 = scmp.eq.s32.totalorder %s24, 1
      %p131 = por %p129, %p130
      %p132 = scmp.ne.s32.totalorder %s124, %s127
      %p133 = scmp.eq.s32.totalorder %s24, 0
      %p134 = por %p132, %p133
      %p135 = scmp.ne.s32.totalorder %s124, %s127
      %p136 = scmp.eq.s32.totalorder %s29, 1
      %p137 = por %p135, %p136
      %p138 = scmp.ne.s32.totalorder %s127, %s128
      %p139 = scmp.eq.s32.totalorder %s29, 0
      %p140 = por %p138, %p139
      %p141 = scmp.ne.s32.totalorder %s127, %s128
      %p142 = scmp.eq.s32.totalorder %s30, 1
      %p143 = por %p141, %p142
      %p145 = scmp.ne.s32.totalorder %s128, %s144
      %p146 = scmp.eq.s32.totalorder %s30, 0
      %p147 = por %p145, %p146
      %s148 = ssub.s32 %s32, %s39
      %p149 = scmp.eq.s32.totalorder %s148, 0
      %s151 = sadd.s32 %s150, 1
      %s152 = scalar_select %p149, %s150, %s151
      %p155 = pneg %p149
      %p156 = scmp.eq.s32.totalorder %s24, 1
      %p157 = por %p155, %p156
      %p158 = scmp.ne.s32.totalorder %s150, %s153
      %p159 = scmp.eq.s32.totalorder %s24, 0
      %p160 = por %p158, %p159
      %p161 = scmp.ne.s32.totalorder %s150, %s153
      %p162 = scmp.eq.s32.totalorder %s29, 1
      %p163 = por %p161, %p162
      %p164 = scmp.ne.s32.totalorder %s153, %s154
      %p165 = scmp.eq.s32.totalorder %s29, 0
      %p166 = por %p164, %p165
      %p167 = scmp.ne.s32.totalorder %s153, %s154
      %p168 = scmp.eq.s32.totalorder %s30, 1
      %p169 = por %p167, %p168
      %p171 = scmp.ne.s32.totalorder %s154, %s170
      %p172 = scmp.eq.s32.totalorder %s30, 0
      %p173 = por %p171, %p172
      %s174 = ssub.s32 %s32, %s39
      %p175 = scmp.eq.s32.totalorder %s174, 0
      %s177 = sadd.s32 %s176, 1
      %s178 = scalar_select %p175, %s176, %s177
      %p181 = pneg %p175
      %p182 = scmp.eq.s32.totalorder %s24, 1
      %p183 = por %p181, %p182
      %p184 = scmp.ne.s32.totalorder %s176, %s179
      %p185 = scmp.eq.s32.totalorder %s24, 0
      %p186 = por %p184, %p185
      %p187 = scmp.ne.s32.totalorder %s176, %s179
      %p188 = scmp.eq.s32.totalorder %s29, 1
      %p189 = por %p187, %p188
      %p190 = scmp.ne.s32.totalorder %s179, %s180
      %p191 = scmp.eq.s32.totalorder %s29, 0
      %p192 = por %p190, %p191
      %p193 = scmp.ne.s32.totalorder %s179, %s180
      %p194 = scmp.eq.s32.totalorder %s30, 1
      %p195 = por %p193, %p194
      %p197 = scmp.ne.s32.totalorder %s180, %s196
      %p198 = scmp.eq.s32.totalorder %s30, 0
      %p199 = por %p197, %p198
      %s200 = ssub.s32 %s32, %s39
      %p201 = scmp.eq.s32.totalorder %s200, 0
      %s203 = sadd.s32 %s202, 1
      %s204 = scalar_select %p201, %s202, %s203
      %p207 = pneg %p201
      %p208 = scmp.eq.s32.totalorder %s24, 1
      %p209 = por %p207, %p208
      %p210 = scmp.ne.s32.totalorder %s202, %s205
      %p211 = scmp.eq.s32.totalorder %s24, 0
      %p212 = por %p210, %p211
      %p213 = scmp.ne.s32.totalorder %s202, %s205
      %p214 = scmp.eq.s32.totalorder %s29, 1
      %p215 = por %p213, %p214
      %p216 = scmp.ne.s32.totalorder %s205, %s206
      %p217 = scmp.eq.s32.totalorder %s29, 0
      %p218 = por %p216, %p217
      %p219 = scmp.ne.s32.totalorder %s205, %s206
      %p220 = scmp.eq.s32.totalorder %s30, 1
      %p221 = por %p219, %p220
      %p223 = scmp.ne.s32.totalorder %s206, %s222
      %p224 = scmp.eq.s32.totalorder %s30, 0
      %p225 = por %p223, %p224
      %s226 = ssub.s32 %s32, %s39
      %p227 = scmp.eq.s32.totalorder %s226, 0
      %s229 = sadd.s32 %s228, 1
      %s230 = scalar_select %p227, %s228, %s229
      %p233 = pneg %p227
      %p234 = scmp.eq.s32.totalorder %s24, 1
      %p235 = por %p233, %p234
      %p236 = scmp.ne.s32.totalorder %s228, %s231
      %p237 = scmp.eq.s32.totalorder %s24, 0
      %p238 = por %p236, %p237
      %p239 = scmp.ne.s32.totalorder %s228, %s231
      %p240 = scmp.eq.s32.totalorder %s29, 1
      %p241 = por %p239, %p240
      %p242 = scmp.ne.s32.totalorder %s231, %s232
      %p243 = scmp.eq.s32.totalorder %s29, 0
      %p244 = por %p242, %p243
      %p245 = scmp.ne.s32.totalorder %s231, %s232
      %p246 = scmp.eq.s32.totalorder %s30, 1
      %p247 = por %p245, %p246
      %p249 = scmp.ne.s32.totalorder %s232, %s248
      %p250 = scmp.eq.s32.totalorder %s30, 0
      %p251 = por %p249, %p250
      %s252 = ssub.s32 %s32, %s39
      %p253 = scmp.eq.s32.totalorder %s252, 0
      %s255 = sadd.s32 %s254, 1
      %s256 = scalar_select %p253, %s254, %s255
      %p259 = pneg %p253
      %p260 = scmp.eq.s32.totalorder %s24, 1
      %p261 = por %p259, %p260
      %p262 = scmp.ne.s32.totalorder %s254, %s257
      %p263 = scmp.eq.s32.totalorder %s24, 0
      %p264 = por %p262, %p263
      %p265 = scmp.ne.s32.totalorder %s254, %s257
      %p266 = scmp.eq.s32.totalorder %s29, 1
      %p267 = por %p265, %p266
      %p268 = scmp.ne.s32.totalorder %s257, %s258
      %p269 = scmp.eq.s32.totalorder %s29, 0
      %p270 = por %p268, %p269
      %p271 = scmp.ne.s32.totalorder %s257, %s258
      %p272 = scmp.eq.s32.totalorder %s30, 1
      %p273 = por %p271, %p272
      %p275 = scmp.ne.s32.totalorder %s258, %s274
      %p276 = scmp.eq.s32.totalorder %s30, 0
      %p277 = por %p275, %p276
      %s278 = ssub.s32 %s32, %s39
      %p279 = scmp.eq.s32.totalorder %s278, 0
      %s281 = sadd.s32 %s280, 1
      %s282 = scalar_select %p279, %s280, %s281
      %p285 = pneg %p279
      %p286 = scmp.eq.s32.totalorder %s24, 1
      %p287 = por %p285, %p286
      %p288 = scmp.ne.s32.totalorder %s280, %s283
      %p289 = scmp.eq.s32.totalorder %s24, 0
      %p290 = por %p288, %p289
      %p291 = scmp.ne.s32.totalorder %s280, %s283
      %p292 = scmp.eq.s32.totalorder %s29, 1
      %p293 = por %p291, %p292
      %p294 = scmp.ne.s32.totalorder %s283, %s284
      %p295 = scmp.eq.s32.totalorder %s29, 0
      %p296 = por %p294, %p295
      %p297 = scmp.ne.s32.totalorder %s283, %s284
      %p298 = scmp.eq.s32.totalorder %s30, 1
      %p299 = por %p297, %p298
      %p301 = scmp.ne.s32.totalorder %s284, %s300
      %p302 = scmp.eq.s32.totalorder %s30, 0
      %p303 = por %p301, %p302
      %s304 = ssub.s32 %s32, %s39
      %p305 = scmp.eq.s32.totalorder %s304, 0
      %s307 = sadd.s32 %s306, 1
      %s308 = scalar_select %p305, %s306, %s307
      %p311 = pneg %p305
      %p312 = scmp.eq.s32.totalorder %s24, 1
      %p313 = por %p311, %p312
      %p314 = scmp.ne.s32.totalorder %s306, %s309
      %p315 = scmp.eq.s32.totalorder %s24, 0
      %p316 = por %p314, %p315
      %p317 = scmp.ne.s32.totalorder %s306, %s309
      %p318 = scmp.eq.s32.totalorder %s29, 1
      %p319 = por %p317, %p318
      %p320 = scmp.ne.s32.totalorder %s309, %s310
      %p321 = scmp.eq.s32.totalorder %s29, 0
      %p322 = por %p320, %p321
      %p323 = scmp.ne.s32.totalorder %s309, %s310
      %p324 = scmp.eq.s32.totalorder %s30, 1
      %p325 = por %p323, %p324
      %p327 = scmp.ne.s32.totalorder %s310, %s326
      %p328 = scmp.eq.s32.totalorder %s30, 0
      %p329 = por %p327, %p328
      %s330 = ssub.s32 %s32, %s39
      %p331 = scmp.eq.s32.totalorder %s330, 0
      %s333 = sadd.s32 %s332, 1
      %s334 = scalar_select %p331, %s332, %s333
      %p337 = pneg %p331
      %p338 = scmp.eq.s32.totalorder %s24, 1
      %p339 = por %p337, %p338
      %p340 = scmp.ne.s32.totalorder %s332, %s335
      %p341 = scmp.eq.s32.totalorder %s24, 0
      %p342 = por %p340, %p341
      %p343 = scmp.ne.s32.totalorder %s332, %s335
      %p344 = scmp.eq.s32.totalorder %s29, 1
      %p345 = por %p343, %p344
      %p346 = scmp.ne.s32.totalorder %s335, %s336
      %p347 = scmp.eq.s32.totalorder %s29, 0
      %p348 = por %p346, %p347
      %p349 = scmp.ne.s32.totalorder %s335, %s336
      %p350 = scmp.eq.s32.totalorder %s30, 1
      %p351 = por %p349, %p350
      %p353 = scmp.ne.s32.totalorder %s336, %s352
      %p354 = scmp.eq.s32.totalorder %s30, 0
      %p355 = por %p353, %p354
      %s356 = ssub.s32 %s32, %s39
      %p357 = scmp.eq.s32.totalorder %s356, 0
      %s359 = sadd.s32 %s358, 1
      %s360 = scalar_select %p357, %s358, %s359
      %p363 = pneg %p357
      %p364 = scmp.eq.s32.totalorder %s24, 1
      %p365 = por %p363, %p364
      %p366 = scmp.ne.s32.totalorder %s358, %s361
      %p367 = scmp.eq.s32.totalorder %s24, 0
      %p368 = por %p366, %p367
      %p369 = scmp.ne.s32.totalorder %s358, %s361
      %p370 = scmp.eq.s32.totalorder %s29, 1
      %p371 = por %p369, %p370
      %p372 = scmp.ne.s32.totalorder %s361, %s362
      %p373 = scmp.eq.s32.totalorder %s29, 0
      %p374 = por %p372, %p373
      %p375 = scmp.ne.s32.totalorder %s361, %s362
      %p376 = scmp.eq.s32.totalorder %s30, 1
      %p377 = por %p375, %p376
      %p379 = scmp.ne.s32.totalorder %s362, %s378
      %p380 = scmp.eq.s32.totalorder %s30, 0
      %p381 = por %p379, %p380
      %s383 = sadd.s32 %s382, 1
      %p386 = scmp.eq.s32.totalorder %s24, 1
      %p387 = scmp.ne.s32.totalorder %s382, %s384
      %p388 = scmp.eq.s32.totalorder %s24, 0
      %p389 = por %p387, %p388
      %p390 = scmp.ne.s32.totalorder %s382, %s384
      %p391 = scmp.eq.s32.totalorder %s29, 1
      %p392 = por %p390, %p391
      %p393 = scmp.ne.s32.totalorder %s384, %s385
      %p394 = scmp.eq.s32.totalorder %s29, 0
      %p395 = por %p393, %p394
      %p396 = scmp.ne.s32.totalorder %s384, %s385
      %p397 = scmp.eq.s32.totalorder %s30, 1
      %p398 = por %p396, %p397
      %p400 = scmp.ne.s32.totalorder %s385, %s399
      %p401 = scmp.eq.s32.totalorder %s30, 0
      %p402 = por %p400, %p401
      %s404 = sadd.s32 %s403, 1
      %p407 = scmp.eq.s32.totalorder %s24, 1
      %p408 = scmp.ne.s32.totalorder %s403, %s405
      %p409 = scmp.eq.s32.totalorder %s24, 0
      %p410 = por %p408, %p409
      %p411 = scmp.ne.s32.totalorder %s403, %s405
      %p412 = scmp.eq.s32.totalorder %s29, 1
      %p413 = por %p411, %p412
      %p414 = scmp.ne.s32.totalorder %s405, %s406
      %p415 = scmp.eq.s32.totalorder %s29, 0
      %p416 = por %p414, %p415
      %p417 = scmp.ne.s32.totalorder %s405, %s406
      %p418 = scmp.eq.s32.totalorder %s30, 1
      %p419 = por %p417, %p418
      %p421 = scmp.ne.s32.totalorder %s406, %s420
      %p422 = scmp.eq.s32.totalorder %s30, 0
      %p423 = por %p421, %p422
      %s424 = ssub.s32 %s31, %s43
      %p425 = scmp.eq.s32.totalorder %s424, 0
      %s427 = sadd.s32 %s426, 1
      %s428 = scalar_select %p425, %s426, %s427
      %p431 = pneg %p425
      %p432 = scmp.eq.s32.totalorder %s24, 1
      %p433 = por %p431, %p432
      %p434 = scmp.ne.s32.totalorder %s426, %s429
      %p435 = scmp.eq.s32.totalorder %s24, 0
      %p436 = por %p434, %p435
      %p437 = scmp.ne.s32.totalorder %s426, %s429
      %p438 = scmp.eq.s32.totalorder %s29, 1
      %p439 = por %p437, %p438
      %p440 = scmp.ne.s32.totalorder %s429, %s430
      %p441 = scmp.eq.s32.totalorder %s29, 0
      %p442 = por %p440, %p441
      %p443 = scmp.ne.s32.totalorder %s429, %s430
      %p444 = scmp.eq.s32.totalorder %s30, 1
      %p445 = por %p443, %p444
      %p447 = scmp.ne.s32.totalorder %s430, %s446
      %p448 = scmp.eq.s32.totalorder %s30, 0
      %p449 = por %p447, %p448
      %p450 = scmp.le.s32.totalorder 1, %s24
      %p451 = scmp.lt.s32.totalorder %s24, 3
      %p452 = pnand %p450, %p451
      %p453 = pneg %p452
      // Predicated region
      $region9: #{tpu_custom_call.1} parent=5 // pred_check
        _
      $region10: #{tpu_custom_call.1} parent=5 // pred_check_branch
        %455 = sbr.rel (%p452) target = $region12
      $region11: #{tpu_custom_call.1} parent=5 // pred_region
        %s456 = ssub.s32 %s24, 1
        // Predicated region
        $region13: #{tpu_custom_call.1} parent=11 // pred_check
          %p457 = pneg %p62
        $region14: #{tpu_custom_call.1} parent=11 // pred_check_branch
          %459 = sbr.rel (%p457) target = $region16
        $region15: #{tpu_custom_call.1} parent=11 // pred_region
          %s460 = smul.u32 4, %s33
          %s462 = ssub.s32 1024, 1024
          %463 = vsyncadd [#allocation5], %s462
          %s464 = smul.addr %s460, 2
          %s465 = smul.addr %s464, 128
          %s466 = scalar_lea.hbm %s0, %s465
          %s467 = sshll.u32 [#allocation4], 4
          %s468 = int_to_ptr.vmem [resolvable:$true] %s467
          %473 = dma.hbm_to_vmem [thread:$0]  %s466, 1024, %s468, [#allocation5], 128, 128, 8
        $region16: #{tpu_custom_call.1} parent=11 // pred_fallthru
          _
        // Predicated region
        $region17: #{tpu_custom_call.1} parent=11 // pred_check
          %p474 = pneg %p88
        $region18: #{tpu_custom_call.1} parent=11 // pred_check_branch
          %476 = sbr.rel (%p474) target = $region20
        $region19: #{tpu_custom_call.1} parent=11 // pred_region
          %s477 = smul.u32 4, %s33
          %s479 = ssub.s32 1024, 1024
          %480 = vsyncadd [#allocation8], %s479
          %s481 = smul.addr %s477, 2
          %s482 = smul.addr %s481, 128
          %s483 = scalar_lea.hbm %s1, %s482
          %s484 = sshll.u32 [#allocation7], 4
          %s485 = int_to_ptr.vmem [resolvable:$true] %s484
          %490 = dma.hbm_to_vmem [thread:$0]  %s483, 1024, %s485, [#allocation8], 128, 128, 8
        $region20: #{tpu_custom_call.1} parent=11 // pred_fallthru
          _
        // Predicated region
        $region21: #{tpu_custom_call.1} parent=11 // pred_check
          %p491 = pneg %p395
        $region22: #{tpu_custom_call.1} parent=11 // pred_check_branch
          %493 = sbr.rel (%p491) target = $region24
        $region23: #{tpu_custom_call.1} parent=11 // pred_region
          _
        $region24: #{tpu_custom_call.1} parent=11 // pred_fallthru
          _
        // Predicated region
        $region25: #{tpu_custom_call.1} parent=11 // pred_check
          %p494 = pneg %p416
        $region26: #{tpu_custom_call.1} parent=11 // pred_check_branch
          %496 = sbr.rel (%p494) target = $region28
        $region27: #{tpu_custom_call.1} parent=11 // pred_region
          _
        $region28: #{tpu_custom_call.1} parent=11 // pred_fallthru
          _
      $region12: #{tpu_custom_call.1} parent=5 // pred_fallthru
        _
      %p497 = scmp.lt.s32.totalorder %s24, 2
      // Predicated region
      $region29: #{tpu_custom_call.1} parent=5 // pred_check
        %p498 = pneg %p497
      $region30: #{tpu_custom_call.1} parent=5 // pred_check_branch
        %500 = sbr.rel (%p498) target = $region32
      $region31: #{tpu_custom_call.1} parent=5 // pred_region
        // Predicated region
        $region33: #{tpu_custom_call.1} parent=31 // pred_check
          %p501 = pneg %p108
        $region34: #{tpu_custom_call.1} parent=31 // pred_check_branch
          %503 = sbr.rel (%p501) target = $region36
        $region35: #{tpu_custom_call.1} parent=31 // pred_region
          %p504 = scmp.lt.s32.totalorder %s32, 1
          %s505 = scalar_select %p504, %s32, 1
          %s506 = scalar_lea.vmem %s2, %s505
        $region36: #{tpu_custom_call.1} parent=31 // pred_fallthru
          _
        // Predicated region
        $region37: #{tpu_custom_call.1} parent=31 // pred_check
          %p507 = pneg %p134
        $region38: #{tpu_custom_call.1} parent=31 // pred_check_branch
          %509 = sbr.rel (%p507) target = $region40
        $region39: #{tpu_custom_call.1} parent=31 // pred_region
          %p510 = scmp.lt.s32.totalorder %s32, 1
          %s511 = scalar_select %p510, %s32, 1
          %s512 = scalar_lea.vmem %s3, %s511
        $region40: #{tpu_custom_call.1} parent=31 // pred_fallthru
          _
        // Predicated region
        $region41: #{tpu_custom_call.1} parent=31 // pred_check
          %p513 = pneg %p160
        $region42: #{tpu_custom_call.1} parent=31 // pred_check_branch
          %515 = sbr.rel (%p513) target = $region44
        $region43: #{tpu_custom_call.1} parent=31 // pred_region
          %s516 = sand.u32 %s24, 1
          %s517 = scalar_lea.sflag [#allocation5], %s516
          %s518 = sand.u32 %s150, 1
          %s519 = smul.addr %s518, 192
          %s520 = scalar_lea.vmem [#allocation9], %s519
          %s522 = ssub.s32 3072, 3072
          %523 = vsyncadd %s517, %s522
          %s524 = smul.addr %s32, 48
          %s525 = smul.addr %s524, 64
          %s526 = scalar_lea.hbm %s4, %s525
          %s527 = sshll.u32 %s520, 4
          %s528 = int_to_ptr.vmem [resolvable:$true] %s527
          %533 = dma.hbm_to_vmem [thread:$0]  %s526, 3072, %s528, %s517, 192, 192, 12
        $region44: #{tpu_custom_call.1} parent=31 // pred_fallthru
          _
        // Predicated region
        $region45: #{tpu_custom_call.1} parent=31 // pred_check
          %p534 = pneg %p186
        $region46: #{tpu_custom_call.1} parent=31 // pred_check_branch
          %536 = sbr.rel (%p534) target = $region48
        $region47: #{tpu_custom_call.1} parent=31 // pred_region
          %s537 = sand.u32 %s24, 1
          %s538 = scalar_lea.sflag [#allocation5], %s537
          %s539 = sand.u32 %s176, 1
          %s540 = smul.addr %s539, 64
          %s541 = scalar_lea.vmem [#allocation10], %s540
          %s543 = ssub.s32 1024, 1024
          %544 = vsyncadd %s538, %s543
          %s545 = smul.addr %s32, 16
          %s546 = smul.addr %s545, 64
          %s547 = scalar_lea.hbm %s5, %s546
          %s548 = sshll.u32 %s541, 4
          %s549 = int_to_ptr.vmem [resolvable:$true] %s548
          %554 = dma.hbm_to_vmem [thread:$0]  %s547, 1024, %s549, %s538, 64, 64, 4
        $region48: #{tpu_custom_call.1} parent=31 // pred_fallthru
          _
        // Predicated region
        $region49: #{tpu_custom_call.1} parent=31 // pred_check
          %p555 = pneg %p212
        $region50: #{tpu_custom_call.1} parent=31 // pred_check_branch
          %557 = sbr.rel (%p555) target = $region52
        $region51: #{tpu_custom_call.1} parent=31 // pred_region
          %p558 = scmp.lt.s32.totalorder %s32, 1
          %s559 = scalar_select %p558, %s32, 1
          %s560 = scalar_lea.vmem %s6, %s559
        $region52: #{tpu_custom_call.1} parent=31 // pred_fallthru
          _
        // Predicated region
        $region53: #{tpu_custom_call.1} parent=31 // pred_check
          %p561 = pneg %p238
        $region54: #{tpu_custom_call.1} parent=31 // pred_check_branch
          %563 = sbr.rel (%p561) target = $region56
        $region55: #{tpu_custom_call.1} parent=31 // pred_region
          %p564 = scmp.lt.s32.totalorder %s32, 1
          %s565 = scalar_select %p564, %s32, 1
          %s566 = scalar_lea.vmem %s7, %s565
        $region56: #{tpu_custom_call.1} parent=31 // pred_fallthru
          _
        // Predicated region
        $region57: #{tpu_custom_call.1} parent=31 // pred_check
          %p567 = pneg %p264
        $region58: #{tpu_custom_call.1} parent=31 // pred_check_branch
          %569 = sbr.rel (%p567) target = $region60
        $region59: #{tpu_custom_call.1} parent=31 // pred_region
          %p570 = scmp.lt.s32.totalorder %s32, 1
          %s571 = scalar_select %p570, %s32, 1
          %s572 = scalar_lea.vmem %s8, %s571
        $region60: #{tpu_custom_call.1} parent=31 // pred_fallthru
          _
        // Predicated region
        $region61: #{tpu_custom_call.1} parent=31 // pred_check
          %p573 = pneg %p290
        $region62: #{tpu_custom_call.1} parent=31 // pred_check_branch
          %575 = sbr.rel (%p573) target = $region64
        $region63: #{tpu_custom_call.1} parent=31 // pred_region
          %s576 = sand.u32 %s24, 1
          %s577 = scalar_lea.sflag [#allocation5], %s576
          %s578 = sand.u32 %s280, 1
          %s579 = smul.addr %s578, 256
          %s580 = scalar_lea.vmem [#allocation11], %s579
          %s582 = ssub.s32 4096, 4096
          %583 = vsyncadd %s577, %s582
          %s584 = smul.addr %s32, 64
          %s585 = smul.addr %s584, 64
          %s586 = scalar_lea.hbm %s9, %s585
          %s587 = sshll.u32 %s580, 4
          %s588 = int_to_ptr.vmem [resolvable:$true] %s587
          %593 = dma.hbm_to_vmem [thread:$0]  %s586, 4096, %s588, %s577, 256, 256, 16
        $region64: #{tpu_custom_call.1} parent=31 // pred_fallthru
          _
        // Predicated region
        $region65: #{tpu_custom_call.1} parent=31 // pred_check
          %p594 = pneg %p316
        $region66: #{tpu_custom_call.1} parent=31 // pred_check_branch
          %596 = sbr.rel (%p594) target = $region68
        $region67: #{tpu_custom_call.1} parent=31 // pred_region
          %p597 = scmp.lt.s32.totalorder %s32, 1
          %s598 = scalar_select %p597, %s32, 1
          %s599 = smul.addr %s598, 4
          %s600 = scalar_lea.vmem %s10, %s599
        $region68: #{tpu_custom_call.1} parent=31 // pred_fallthru
          _
        // Predicated region
        $region69: #{tpu_custom_call.1} parent=31 // pred_check
          %p601 = pneg %p342
        $region70: #{tpu_custom_call.1} parent=31 // pred_check_branch
          %603 = sbr.rel (%p601) target = $region72
        $region71: #{tpu_custom_call.1} parent=31 // pred_region
          %s604 = sand.u32 %s24, 1
          %s605 = scalar_lea.sflag [#allocation5], %s604
          %s606 = sand.u32 %s332, 1
          %s607 = smul.addr %s606, 256
          %s608 = scalar_lea.vmem [#allocation12], %s607
          %s610 = ssub.s32 4096, 4096
          %611 = vsyncadd %s605, %s610
          %s612 = smul.addr %s32, 64
          %s613 = smul.addr %s612, 64
          %s614 = scalar_lea.hbm %s11, %s613
          %s615 = sshll.u32 %s608, 4
          %s616 = int_to_ptr.vmem [resolvable:$true] %s615
          %621 = dma.hbm_to_vmem [thread:$0]  %s614, 4096, %s616, %s605, 64, 64, 4
        $region72: #{tpu_custom_call.1} parent=31 // pred_fallthru
          _
        // Predicated region
        $region73: #{tpu_custom_call.1} parent=31 // pred_check
          %p622 = pneg %p368
        $region74: #{tpu_custom_call.1} parent=31 // pred_check_branch
          %624 = sbr.rel (%p622) target = $region76
        $region75: #{tpu_custom_call.1} parent=31 // pred_region
          %p625 = scmp.lt.s32.totalorder %s32, 1
          %s626 = scalar_select %p625, %s32, 1
          %s627 = scalar_lea.vmem %s12, %s626
        $region76: #{tpu_custom_call.1} parent=31 // pred_fallthru
          _
      $region32: #{tpu_custom_call.1} parent=5 // pred_fallthru
        _
      %p628 = scmp.le.s32.totalorder 1, %s24
      %p629 = scmp.lt.s32.totalorder %s24, 3
      %p630 = pnand %p628, %p629
      %p631 = pneg %p630
      // Predicated region
      $region77: #{tpu_custom_call.1} parent=5 // pred_check
        _
      $region78: #{tpu_custom_call.1} parent=5 // pred_check_branch
        %633 = sbr.rel (%p630) target = $region80
      $region79: #{tpu_custom_call.1} parent=5 // pred_region
        %s634 = ssub.s32 %s24, 1
        // Predicated region
        $region81: #{tpu_custom_call.1} parent=79 // pred_check
          %p635 = pneg %p62
        $region82: #{tpu_custom_call.1} parent=79 // pred_check_branch
          %637 = sbr.rel (%p635) target = $region84
        $region83: #{tpu_custom_call.1} parent=79 // pred_region
          %638 = dma.done [#allocation5], 1024
        $region84: #{tpu_custom_call.1} parent=79 // pred_fallthru
          _
        // Predicated region
        $region85: #{tpu_custom_call.1} parent=79 // pred_check
          %p639 = pneg %p88
        $region86: #{tpu_custom_call.1} parent=79 // pred_check_branch
          %641 = sbr.rel (%p639) target = $region88
        $region87: #{tpu_custom_call.1} parent=79 // pred_region
          %642 = dma.done [#allocation8], 1024
        $region88: #{tpu_custom_call.1} parent=79 // pred_fallthru
          _
        %s643 = sand.u32 %s29, 1
        %s644 = scalar_lea.sflag [#allocation5], %s643
        %s645 = sand.u32 %s153, 1
        %s646 = smul.addr %s645, 192
        %s647 = scalar_lea.vmem [#allocation9], %s646
        // Predicated region
        $region89: #{tpu_custom_call.1} parent=79 // pred_check
          %p648 = pneg %p166
        $region90: #{tpu_custom_call.1} parent=79 // pred_check_branch
          %650 = sbr.rel (%p648) target = $region92
        $region91: #{tpu_custom_call.1} parent=79 // pred_region
          %651 = dma.done %s644, 3072
        $region92: #{tpu_custom_call.1} parent=79 // pred_fallthru
          _
        %s652 = sand.u32 %s29, 1
        %s653 = scalar_lea.sflag [#allocation5], %s652
        %s654 = sand.u32 %s179, 1
        %s655 = smul.addr %s654, 64
        %s656 = scalar_lea.vmem [#allocation10], %s655
        // Predicated region
        $region93: #{tpu_custom_call.1} parent=79 // pred_check
          %p657 = pneg %p192
        $region94: #{tpu_custom_call.1} parent=79 // pred_check_branch
          %659 = sbr.rel (%p657) target = $region96
        $region95: #{tpu_custom_call.1} parent=79 // pred_region
          %660 = dma.done %s653, 1024
        $region96: #{tpu_custom_call.1} parent=79 // pred_fallthru
          _
        %s661 = sand.u32 %s29, 1
        %s662 = scalar_lea.sflag [#allocation5], %s661
        %s663 = sand.u32 %s283, 1
        %s664 = smul.addr %s663, 256
        %s665 = scalar_lea.vmem [#allocation11], %s664
        // Predicated region
        $region97: #{tpu_custom_call.1} parent=79 // pred_check
          %p666 = pneg %p296
        $region98: #{tpu_custom_call.1} parent=79 // pred_check_branch
          %668 = sbr.rel (%p666) target = $region100
        $region99: #{tpu_custom_call.1} parent=79 // pred_region
          %669 = dma.done %s662, 4096
        $region100: #{tpu_custom_call.1} parent=79 // pred_fallthru
          _
        %s670 = sand.u32 %s29, 1
        %s671 = scalar_lea.sflag [#allocation5], %s670
        %s672 = sand.u32 %s335, 1
        %s673 = smul.addr %s672, 256
        %s674 = scalar_lea.vmem [#allocation12], %s673
        // Predicated region
        $region101: #{tpu_custom_call.1} parent=79 // pred_check
          %p675 = pneg %p348
        $region102: #{tpu_custom_call.1} parent=79 // pred_check_branch
          %677 = sbr.rel (%p675) target = $region104
        $region103: #{tpu_custom_call.1} parent=79 // pred_region
          %678 = dma.done %s671, 4096
        $region104: #{tpu_custom_call.1} parent=79 // pred_fallthru
          _
        %p679 = pneg %p62
        %p680 = pneg %p59
        %p681 = pneg %p88
        %p682 = pneg %p85
        %p683 = scmp.lt.s32.totalorder %s34, 1
        %s684 = scalar_select %p683, %s34, 1
        %s685 = scalar_lea.vmem %s2, %s684
        %p686 = pneg %p114
        %p687 = pneg %p111
        %p688 = scmp.lt.s32.totalorder %s34, 1
        %s689 = scalar_select %p688, %s34, 1
        %s690 = scalar_lea.vmem %s3, %s689
        %p691 = pneg %p140
        %p692 = pneg %p137
        %s693 = sand.u32 %s29, 1
        %s694 = scalar_lea.sflag [#allocation5], %s693
        %s695 = sand.u32 %s153, 1
        %s696 = smul.addr %s695, 192
        %s697 = scalar_lea.vmem [#allocation9], %s696
        %p698 = pneg %p166
        %p699 = pneg %p163
        %s700 = sand.u32 %s29, 1
        %s701 = scalar_lea.sflag [#allocation5], %s700
        %s702 = sand.u32 %s179, 1
        %s703 = smul.addr %s702, 64
        %s704 = scalar_lea.vmem [#allocation10], %s703
        %p705 = pneg %p192
        %p706 = pneg %p189
        %p707 = scmp.lt.s32.totalorder %s34, 1
        %s708 = scalar_select %p707, %s34, 1
        %s709 = scalar_lea.vmem %s6, %s708
        %p710 = pneg %p218
        %p711 = pneg %p215
        %p712 = scmp.lt.s32.totalorder %s34, 1
        %s713 = scalar_select %p712, %s34, 1
        %s714 = scalar_lea.vmem %s7, %s713
        %p715 = pneg %p244
        %p716 = pneg %p241
        %p717 = scmp.lt.s32.totalorder %s34, 1
        %s718 = scalar_select %p717, %s34, 1
        %s719 = scalar_lea.vmem %s8, %s718
        %p720 = pneg %p270
        %p721 = pneg %p267
        %s722 = sand.u32 %s29, 1
        %s723 = scalar_lea.sflag [#allocation5], %s722
        %s724 = sand.u32 %s283, 1
        %s725 = smul.addr %s724, 256
        %s726 = scalar_lea.vmem [#allocation11], %s725
        %p727 = pneg %p296
        %p728 = pneg %p293
        %p729 = scmp.lt.s32.totalorder %s34, 1
        %s730 = scalar_select %p729, %s34, 1
        %s731 = smul.addr %s730, 4
        %s732 = scalar_lea.vmem %s10, %s731
        %p733 = pneg %p322
        %p734 = pneg %p319
        %s735 = sand.u32 %s29, 1
        %s736 = scalar_lea.sflag [#allocation5], %s735
        %s737 = sand.u32 %s335, 1
        %s738 = smul.addr %s737, 256
        %s739 = scalar_lea.vmem [#allocation12], %s738
        %p740 = pneg %p348
        %p741 = pneg %p345
        %p742 = scmp.lt.s32.totalorder %s34, 1
        %s743 = scalar_select %p742, %s34, 1
        %s744 = scalar_lea.vmem %s12, %s743
        %p745 = pneg %p374
        %p746 = pneg %p371
        %p747 = pneg %p395
        %p748 = pneg %p392
        %p749 = pneg %p416
        %p750 = pneg %p413
        %p751 = pneg %p442
        %p752 = pneg %p439
        %s753 = smul.u32 4, %s33
        %s754 = smul.u32 4, %s33
        %p755 = scmp.lt.s32.totalorder %s34, 1
        %s756 = scalar_select %p755, %s34, 1
        %s757 = scalar_lea.vmem %s2, %s756
        %p758 = scmp.lt.s32.totalorder %s34, 1
        %s759 = scalar_select %p758, %s34, 1
        %s760 = scalar_lea.vmem %s3, %s759
        %p761 = scmp.lt.s32.totalorder %s34, 1
        %s762 = scalar_select %p761, %s34, 1
        %s763 = scalar_lea.vmem %s6, %s762
        %p764 = scmp.lt.s32.totalorder %s34, 1
        %s765 = scalar_select %p764, %s34, 1
        %s766 = scalar_lea.vmem %s7, %s765
        %p767 = scmp.lt.s32.totalorder %s34, 1
        %s768 = scalar_select %p767, %s34, 1
        %s769 = scalar_lea.vmem %s8, %s768
        %p770 = scmp.lt.s32.totalorder %s34, 1
        %s771 = scalar_select %p770, %s34, 1
        %s772 = smul.addr %s771, 4
        %s773 = scalar_lea.vmem %s10, %s772
        %p774 = scmp.lt.s32.totalorder %s34, 1
        %s775 = scalar_select %p774, %s34, 1
        %s776 = scalar_lea.vmem %s12, %s775
        %s777 = smul.u32 4, %s33
        %p779 = scmp.eq.s32.totalorder %s34, 0
        // Predicated region
        $region105: #{tpu_custom_call.1} parent=79 // pred_check
          %p780 = pneg %p779
        $region106: #{tpu_custom_call.1} parent=79 // pred_check_branch
          %782 = sbr.rel (%p780) target = $region108
        $region107: #{tpu_custom_call.1} parent=79 // pred_region
          %v783 = vld [vmem:[#allocation4] sm:$0xff]
          %v784 = vld [vmem:[#allocation4 + $0x8] sm:$0xff]
          %v785 = vld [vmem:[#allocation4 + $0x10] sm:$0xff]
          %v786 = vld [vmem:[#allocation4 + $0x18] sm:$0xff]
          %v787 = vld [vmem:[#allocation4 + $0x20] sm:$0xff]
          %v788 = vld [vmem:[#allocation4 + $0x28] sm:$0xff]
          %v789 = vld [vmem:[#allocation4 + $0x30] sm:$0xff]
          %v790 = vld [vmem:[#allocation4 + $0x38] sm:$0xff]
          %791 = vst [vmem:[#allocation2] sm:$0xff] %v783
          %792 = vst [vmem:[#allocation2 + $0x8] sm:$0xff] %v784
          %793 = vst [vmem:[#allocation2 + $0x10] sm:$0xff] %v785
          %794 = vst [vmem:[#allocation2 + $0x18] sm:$0xff] %v786
          %795 = vst [vmem:[#allocation2 + $0x20] sm:$0xff] %v787
          %796 = vst [vmem:[#allocation2 + $0x28] sm:$0xff] %v788
          %797 = vst [vmem:[#allocation2 + $0x30] sm:$0xff] %v789
          %798 = vst [vmem:[#allocation2 + $0x38] sm:$0xff] %v790
        $region108: #{tpu_custom_call.1} parent=79 // pred_fallthru
          _
        %v799 = vld [vmem:[#allocation2] sm:$0xff]
        %v800 = vld [vmem:[#allocation2 + $0x8] sm:$0xff]
        %v801 = vld [vmem:[#allocation2 + $0x10] sm:$0xff]
        %v802 = vld [vmem:[#allocation2 + $0x18] sm:$0xff]
        %v803 = vld [vmem:[#allocation2 + $0x20] sm:$0xff]
        %v804 = vld [vmem:[#allocation2 + $0x28] sm:$0xff]
        %v805 = vld [vmem:[#allocation2 + $0x30] sm:$0xff]
        %v806 = vld [vmem:[#allocation2 + $0x38] sm:$0xff]
        %v807 = vld [vmem:[#allocation7] sm:$0xff]
        %v808 = vld [vmem:[#allocation7 + $0x8] sm:$0xff]
        %v809 = vld [vmem:[#allocation7 + $0x10] sm:$0xff]
        %v810 = vld [vmem:[#allocation7 + $0x18] sm:$0xff]
        %v811 = vld [vmem:[#allocation7 + $0x20] sm:$0xff]
        %v812 = vld [vmem:[#allocation7 + $0x28] sm:$0xff]
        %v813 = vld [vmem:[#allocation7 + $0x30] sm:$0xff]
        %v814 = vld [vmem:[#allocation7 + $0x38] sm:$0xff]
        %v815 = vadd.f32 %v799, %v807
        %v816 = vadd.f32 %v800, %v808
        %v817 = vadd.f32 %v801, %v809
        %v818 = vadd.f32 %v802, %v810
        %v819 = vadd.f32 %v803, %v811
        %v820 = vadd.f32 %v804, %v812
        %v821 = vadd.f32 %v805, %v813
        %v822 = vadd.f32 %v806, %v814
        %v823 = vld [vmem:[%s757] sm:$0x1]
        %v824 = vld [vmem:[%s760] sm:$0x1]
        %825 = vadd.xlane.f32.xlu0 %v815
        %v826 = vpop.xlane.xlu0 %825
        %827 = vadd.xlane.f32.xlu0 %v816
        %v828 = vpop.xlane.xlu0 %827
        %829 = vadd.xlane.f32.xlu0 %v817
        %v830 = vpop.xlane.xlu0 %829
        %831 = vadd.xlane.f32.xlu0 %v818
        %v832 = vpop.xlane.xlu0 %831
        %833 = vadd.xlane.f32.xlu0 %v819
        %v834 = vpop.xlane.xlu0 %833
        %835 = vadd.xlane.f32.xlu0 %v820
        %v836 = vpop.xlane.xlu0 %835
        %837 = vadd.xlane.f32.xlu0 %v821
        %v838 = vpop.xlane.xlu0 %837
        %839 = vadd.xlane.f32.xlu0 %v822
        %v840 = vpop.xlane.xlu0 %839
        %v841 = vrcp.pop 128.0
        %v842 = vmul.f32 %v826, %v841
        %v843 = vmul.f32 %v828, %v841
        %v844 = vmul.f32 %v830, %v841
        %v845 = vmul.f32 %v832, %v841
        %v846 = vmul.f32 %v834, %v841
        %v847 = vmul.f32 %v836, %v841
        %v848 = vmul.f32 %v838, %v841
        %v849 = vmul.f32 %v840, %v841
        %v850 = vsub.f32 %v815, %v842
        %v851 = vsub.f32 %v816, %v843
        %v852 = vsub.f32 %v817, %v844
        %v853 = vsub.f32 %v818, %v845
        %v854 = vsub.f32 %v819, %v846
        %v855 = vsub.f32 %v820, %v847
        %v856 = vsub.f32 %v821, %v848
        %v857 = vsub.f32 %v822, %v849
        %v858 = vmul.f32 %v850, %v850
        %v859 = vmul.f32 %v851, %v851
        %v860 = vmul.f32 %v852, %v852
        %v861 = vmul.f32 %v853, %v853
        %v862 = vmul.f32 %v854, %v854
        %v863 = vmul.f32 %v855, %v855
        %v864 = vmul.f32 %v856, %v856
        %v865 = vmul.f32 %v857, %v857
        %866 = vadd.xlane.f32.xlu0 %v858
        %v867 = vpop.xlane.xlu0 %866
        %868 = vadd.xlane.f32.xlu0 %v859
        %v869 = vpop.xlane.xlu0 %868
        %870 = vadd.xlane.f32.xlu0 %v860
        %v871 = vpop.xlane.xlu0 %870
        %872 = vadd.xlane.f32.xlu0 %v861
        %v873 = vpop.xlane.xlu0 %872
        %874 = vadd.xlane.f32.xlu0 %v862
        %v875 = vpop.xlane.xlu0 %874
        %876 = vadd.xlane.f32.xlu0 %v863
        %v877 = vpop.xlane.xlu0 %876
        %878 = vadd.xlane.f32.xlu0 %v864
        %v879 = vpop.xlane.xlu0 %878
        %880 = vadd.xlane.f32.xlu0 %v865
        %v881 = vpop.xlane.xlu0 %880
        %v882 = vmul.f32 %v867, %v841
        %v883 = vmul.f32 %v869, %v841
        %v884 = vmul.f32 %v871, %v841
        %v885 = vmul.f32 %v873, %v841
        %v886 = vmul.f32 %v875, %v841
        %v887 = vmul.f32 %v877, %v841
        %v888 = vmul.f32 %v879, %v841
        %v889 = vmul.f32 %v881, %v841
        %v890 = vadd.f32 %v882, 1e-05
        %v891 = vadd.f32 %v883, 1e-05
        %v892 = vadd.f32 %v884, 1e-05
        %v893 = vadd.f32 %v885, 1e-05
        %v894 = vadd.f32 %v886, 1e-05
        %v895 = vadd.f32 %v887, 1e-05
        %v896 = vadd.f32 %v888, 1e-05
        %v897 = vadd.f32 %v889, 1e-05
        %v898 = vrsqrt.pop %v890
        %v899 = vrsqrt.pop %v891
        %v900 = vrsqrt.pop %v892
        %v901 = vrsqrt.pop %v893
        %v902 = vrsqrt.pop %v894
        %v903 = vrsqrt.pop %v895
        %v904 = vrsqrt.pop %v896
        %v905 = vrsqrt.pop %v897
        %v906 = vmul.f32 %v850, %v898
        %v907 = vmul.f32 %v851, %v899
        %v908 = vmul.f32 %v852, %v900
        %v909 = vmul.f32 %v853, %v901
        %v910 = vmul.f32 %v854, %v902
        %v911 = vmul.f32 %v855, %v903
        %v912 = vmul.f32 %v856, %v904
        %v913 = vmul.f32 %v857, %v905
        %v915 = vlaneseq
        %v916 = vshrl.u32 %v915, 7
        %v917 = vsub.s32 0, %v916
        %v918 = vrot.slane %v823, %v917
        %v920 = vmul.f32 %v906, %v918
        %v921 = vmul.f32 %v907, %v918
        %v922 = vmul.f32 %v908, %v918
        %v923 = vmul.f32 %v909, %v918
        %v924 = vmul.f32 %v910, %v918
        %v925 = vmul.f32 %v911, %v918
        %v926 = vmul.f32 %v912, %v918
        %v927 = vmul.f32 %v913, %v918
        %v929 = vlaneseq
        %v930 = vshrl.u32 %v929, 7
        %v931 = vsub.s32 0, %v930
        %v932 = vrot.slane %v824, %v931
        %v934 = vadd.f32 %v920, %v932
        %v935 = vadd.f32 %v921, %v932
        %v936 = vadd.f32 %v922, %v932
        %v937 = vadd.f32 %v923, %v932
        %v938 = vadd.f32 %v924, %v932
        %v939 = vadd.f32 %v925, %v932
        %v940 = vadd.f32 %v926, %v932
        %v941 = vadd.f32 %v927, %v932
        %v942 = vpack.c.bf16 %v935, %v934
        %v943 = vpack.c.bf16 %v937, %v936
        %v944 = vpack.c.bf16 %v939, %v938
        %v945 = vpack.c.bf16 %v941, %v940
        %v946 = vld [vmem:[%s647] sm:$0xff]
        %v947 = vld [vmem:[%s647 + $0x8] sm:$0xf]
        %v948 = vld [vmem:[%s647 + $0xc] sm:$0xff]
        %v949 = vld [vmem:[%s647 + $0x14] sm:$0xf]
        %v950 = vld [vmem:[%s647 + $0x18] sm:$0xff]
        %v951 = vld [vmem:[%s647 + $0x20] sm:$0xf]
        %v952 = vld [vmem:[%s647 + $0x24] sm:$0xff]
        %v953 = vld [vmem:[%s647 + $0x2c] sm:$0xf]
        %v954 = vld [vmem:[%s647 + $0x30] sm:$0xff]
        %v955 = vld [vmem:[%s647 + $0x38] sm:$0xf]
        %v956 = vld [vmem:[%s647 + $0x3c] sm:$0xff]
        %v957 = vld [vmem:[%s647 + $0x44] sm:$0xf]
        %v958 = vld [vmem:[%s647 + $0x48] sm:$0xff]
        %v959 = vld [vmem:[%s647 + $0x50] sm:$0xf]
        %v960 = vld [vmem:[%s647 + $0x54] sm:$0xff]
        %v961 = vld [vmem:[%s647 + $0x5c] sm:$0xf]
        %v962 = vld [vmem:[%s647 + $0x60] sm:$0xff]
        %v963 = vld [vmem:[%s647 + $0x68] sm:$0xf]
        %v964 = vld [vmem:[%s647 + $0x6c] sm:$0xff]
        %v965 = vld [vmem:[%s647 + $0x74] sm:$0xf]
        %v966 = vld [vmem:[%s647 + $0x78] sm:$0xff]
        %v967 = vld [vmem:[%s647 + $0x80] sm:$0xf]
        %v968 = vld [vmem:[%s647 + $0x84] sm:$0xff]
        %v969 = vld [vmem:[%s647 + $0x8c] sm:$0xf]
        %v970 = vld [vmem:[%s647 + $0x90] sm:$0xff]
        %v971 = vld [vmem:[%s647 + $0x98] sm:$0xf]
        %v972 = vld [vmem:[%s647 + $0x9c] sm:$0xff]
        %v973 = vld [vmem:[%s647 + $0xa4] sm:$0xf]
        %v974 = vld [vmem:[%s647 + $0xa8] sm:$0xff]
        %v975 = vld [vmem:[%s647 + $0xb0] sm:$0xf]
        %v976 = vld [vmem:[%s647 + $0xb4] sm:$0xff]
        %v977 = vld [vmem:[%s647 + $0xbc] sm:$0xf]
        %v1010 = vunpack.c.l.b16 %v946
        %v1011 = vunpack.c.h.b16 %v946
        %v1012 = vunpack.c.l.b16 %v947
        %v1013 = vunpack.c.l.b16 %v948
        %v1014 = vunpack.c.h.b16 %v948
        %v1015 = vunpack.c.l.b16 %v949
        %v1016 = vunpack.c.l.b16 %v950
        %v1017 = vunpack.c.h.b16 %v950
        %v1018 = vunpack.c.l.b16 %v951
        %v1019 = vunpack.c.l.b16 %v952
        %v1020 = vunpack.c.h.b16 %v952
        %v1021 = vunpack.c.l.b16 %v953
        %v1022 = vunpack.c.l.b16 %v954
        %v1023 = vunpack.c.h.b16 %v954
        %v1024 = vunpack.c.l.b16 %v955
        %v1025 = vunpack.c.l.b16 %v956
        %v1026 = vunpack.c.h.b16 %v956
        %v1027 = vunpack.c.l.b16 %v957
        %v1028 = vunpack.c.l.b16 %v958
        %v1029 = vunpack.c.h.b16 %v958
        %v1030 = vunpack.c.l.b16 %v959
        %v1031 = vunpack.c.l.b16 %v960
        %v1032 = vunpack.c.h.b16 %v960
        %v1033 = vunpack.c.l.b16 %v961
        %v1034 = vunpack.c.l.b16 %v962
        %v1035 = vunpack.c.h.b16 %v962
        %v1036 = vunpack.c.l.b16 %v963
        %v1037 = vunpack.c.l.b16 %v964
        %v1038 = vunpack.c.h.b16 %v964
        %v1039 = vunpack.c.l.b16 %v965
        %v1040 = vunpack.c.l.b16 %v966
        %v1041 = vunpack.c.h.b16 %v966
        %v1042 = vunpack.c.l.b16 %v967
        %v1043 = vunpack.c.l.b16 %v968
        %v1044 = vunpack.c.h.b16 %v968
        %v1045 = vunpack.c.l.b16 %v969
        %v1046 = vunpack.c.l.b16 %v970
        %v1047 = vunpack.c.h.b16 %v970
        %v1048 = vunpack.c.l.b16 %v971
        %v1049 = vunpack.c.l.b16 %v972
        %v1050 = vunpack.c.h.b16 %v972
        %v1051 = vunpack.c.l.b16 %v973
        %v1052 = vunpack.c.l.b16 %v974
        %v1053 = vunpack.c.h.b16 %v974
        %v1054 = vunpack.c.l.b16 %v975
        %v1055 = vunpack.c.l.b16 %v976
        %v1056 = vunpack.c.h.b16 %v976
        %v1057 = vunpack.c.l.b16 %v977
        %v1058 = vpack.c.b16 %v1013, %v1010
        %v1059 = vpack.c.b16 %v1014, %v1011
        %v1060 = vpack.c.b16 %v1015, %v1012
        %v1061 = vpack.c.b16 %v1019, %v1016
        %v1062 = vpack.c.b16 %v1020, %v1017
        %v1063 = vpack.c.b16 %v1021, %v1018
        %v1064 = vpack.c.b16 %v1025, %v1022
        %v1065 = vpack.c.b16 %v1026, %v1023
        %v1066 = vpack.c.b16 %v1027, %v1024
        %v1067 = vpack.c.b16 %v1031, %v1028
        %v1068 = vpack.c.b16 %v1032, %v1029
        %v1069 = vpack.c.b16 %v1033, %v1030
        %v1070 = vpack.c.b16 %v1037, %v1034
        %v1071 = vpack.c.b16 %v1038, %v1035
        %v1072 = vpack.c.b16 %v1039, %v1036
        %v1073 = vpack.c.b16 %v1043, %v1040
        %v1074 = vpack.c.b16 %v1044, %v1041
        %v1075 = vpack.c.b16 %v1045, %v1042
        %v1076 = vpack.c.b16 %v1049, %v1046
        %v1077 = vpack.c.b16 %v1050, %v1047
        %v1078 = vpack.c.b16 %v1051, %v1048
        %v1079 = vpack.c.b16 %v1055, %v1052
        %v1080 = vpack.c.b16 %v1056, %v1053
        %v1081 = vpack.c.b16 %v1057, %v1054
        %1106 = vmatprep.subr.bf16.mxu0 %v1059
        %1107 = vmatpush1.bf16.msra.mxu0 %v1058
        %1108 = vmatprep.subr.bf16.mxu0 %v1062
        %1109 = vmatpush1.bf16.msra.mxu0 %v1061
        %1110 = vmatprep.subr.bf16.mxu0 %v1065
        %1111 = vmatpush1.bf16.msra.mxu0 %v1064
        %1112 = vmatprep.subr.bf16.mxu0 %v1068
        %1113 = vmatpush1.bf16.msra.mxu0 %v1067
        %1114 = vmatprep.subr.bf16.mxu0 %v1071
        %1115 = vmatpush1.bf16.msra.mxu0 %v1070
        %1116 = vmatprep.subr.bf16.mxu0 %v1074
        %1117 = vmatpush1.bf16.msra.mxu0 %v1073
        %1118 = vmatprep.subr.bf16.mxu0 %v1077
        %1119 = vmatpush1.bf16.msra.mxu0 %v1076
        %1120 = vmatprep.subr.bf16.mxu0 %v1080
        %1121 = vmatpush1.bf16.msra.mxu0 %v1079
        %1122 = vmatprep.subr.bf16.mxu0 0
        %1123 = vmatpush1.bf16.msra.mxu0 0
        %1124 = vmatprep.subr.bf16.mxu0 0
        %1125 = vmatpush1.bf16.msra.mxu0 0
        %1126 = vmatprep.subr.bf16.mxu0 0
        %1127 = vmatpush1.bf16.msra.mxu0 0
        %1128 = vmatprep.subr.bf16.mxu0 0
        %1129 = vmatpush1.bf16.msra.mxu0 0
        %1130 = vmatprep.subr.bf16.mxu0 0
        %1131 = vmatpush1.bf16.msra.mxu0 0
        %1132 = vmatprep.subr.bf16.mxu0 0
        %1133 = vmatpush1.bf16.msra.mxu0 0
        %1134 = vmatprep.subr.bf16.mxu0 0
        %1135 = vmatpush1.bf16.msra.mxu0 0
        %1136 = vmatprep.subr.bf16.mxu0 0
        %1137 = vmatpush1.bf16.msra.mxu0 0
        %1138 = vmatprep.mubr.bf16.mxu0 0
        %1139 = vmatmul.mubr.bf16.gmra.mrb[0].mxu0 %v942
        %v1140 = vpop.f32.mrb[0].mxu0
        %v1141 = vadd.f32 0.0, %v1140
        %v1142 = vpop.f32.mrb[0].mxu0
        %v1143 = vadd.f32 0.0, %v1142
        %v1144 = vpop.f32.mrb[0].mxu0
        %v1145 = vadd.f32 0.0, %v1144
        %v1146 = vpop.f32.mrb[0].mxu0
        %v1147 = vadd.f32 0.0, %v1146
        %1148 = vmatprep.mubr.bf16.mxu0 0
        %1149 = vmatmul.mubr.bf16.gmra.mrb[0].mxu0 %v943
        %v1150 = vpop.f32.mrb[0].mxu0
        %v1151 = vadd.f32 0.0, %v1150
        %v1152 = vpop.f32.mrb[0].mxu0
        %v1153 = vadd.f32 0.0, %v1152
        %v1154 = vpop.f32.mrb[0].mxu0
        %v1155 = vadd.f32 0.0, %v1154
        %v1156 = vpop.f32.mrb[0].mxu0
        %v1157 = vadd.f32 0.0, %v1156
        %1158 = vmatprep.mubr.bf16.mxu0 0
        %1159 = vmatmul.mubr.bf16.gmra.mrb[0].mxu0 %v944
        %v1160 = vpop.f32.mrb[0].mxu0
        %v1161 = vadd.f32 0.0, %v1160
        %v1162 = vpop.f32.mrb[0].mxu0
        %v1163 = vadd.f32 0.0, %v1162
        %v1164 = vpop.f32.mrb[0].mxu0
        %v1165 = vadd.f32 0.0, %v1164
        %v1166 = vpop.f32.mrb[0].mxu0
        %v1167 = vadd.f32 0.0, %v1166
        %1168 = vmatprep.mubr.bf16.mxu0 0
        %1169 = vmatmul.mubr.bf16.gmra.mrb[0].mxu0 %v945
        %v1170 = vpop.f32.mrb[0].mxu0
        %v1171 = vadd.f32 0.0, %v1170
        %v1172 = vpop.f32.mrb[0].mxu0
        %v1173 = vadd.f32 0.0, %v1172
        %v1174 = vpop.f32.mrb[0].mxu0
        %v1175 = vadd.f32 0.0, %v1174
        %v1176 = vpop.f32.mrb[0].mxu0
        %v1177 = vadd.f32 0.0, %v1176
        %1178 = vdwg.mxu0
        %1179 = vmatprep.subr.bf16.mxu0 0
        %1180 = vmatpush1.bf16.msra.mxu0 %v1060
        %1181 = vmatprep.subr.bf16.mxu0 0
        %1182 = vmatpush1.bf16.msra.mxu0 %v1063
        %1183 = vmatprep.subr.bf16.mxu0 0
        %1184 = vmatpush1.bf16.msra.mxu0 %v1066
        %1185 = vmatprep.subr.bf16.mxu0 0
        %1186 = vmatpush1.bf16.msra.mxu0 %v1069
        %1187 = vmatprep.subr.bf16.mxu0 0
        %1188 = vmatpush1.bf16.msra.mxu0 %v1072
        %1189 = vmatprep.subr.bf16.mxu0 0
        %1190 = vmatpush1.bf16.msra.mxu0 %v1075
        %1191 = vmatprep.subr.bf16.mxu0 0
        %1192 = vmatpush1.bf16.msra.mxu0 %v1078
        %1193 = vmatprep.subr.bf16.mxu0 0
        %1194 = vmatpush1.bf16.msra.mxu0 %v1081
        %1195 = vmatprep.subr.bf16.mxu0 0
        %1196 = vmatpush1.bf16.msra.mxu0 0
        %1197 = vmatprep.subr.bf16.mxu0 0
        %1198 = vmatpush1.bf16.msra.mxu0 0
        %1199 = vmatprep.subr.bf16.mxu0 0
        %1200 = vmatpush1.bf16.msra.mxu0 0
        %1201 = vmatprep.subr.bf16.mxu0 0
        %1202 = vmatpush1.bf16.msra.mxu0 0
        %1203 = vmatprep.subr.bf16.mxu0 0
        %1204 = vmatpush1.bf16.msra.mxu0 0
        %1205 = vmatprep.subr.bf16.mxu0 0
        %1206 = vmatpush1.bf16.msra.mxu0 0
        %1207 = vmatprep.subr.bf16.mxu0 0
        %1208 = vmatpush1.bf16.msra.mxu0 0
        %1209 = vmatprep.subr.bf16.mxu0 0
        %1210 = vmatpush1.bf16.msra.mxu0 0
        %1211 = vmatprep.mubr.bf16.mxu0 0
        %1212 = vmatmul.mubr.bf16.gmra.mrb[0].mxu0 %v942
        %v1213 = vpop.f32.mrb[0].mxu0
        %v1214 = vadd.f32 0.0, %v1213
        %v1215 = vpop.f32.mrb[0].mxu0
        %v1216 = vpop.f32.mrb[0].mxu0
        %v1217 = vadd.f32 0.0, %v1216
        %v1218 = vpop.f32.mrb[0].mxu0
        %1219 = vmatprep.mubr.bf16.mxu0 0
        %1220 = vmatmul.mubr.bf16.gmra.mrb[0].mxu0 %v943
        %v1221 = vpop.f32.mrb[0].mxu0
        %v1222 = vadd.f32 0.0, %v1221
        %v1223 = vpop.f32.mrb[0].mxu0
        %v1224 = vpop.f32.mrb[0].mxu0
        %v1225 = vadd.f32 0.0, %v1224
        %v1226 = vpop.f32.mrb[0].mxu0
        %1227 = vmatprep.mubr.bf16.mxu0 0
        %1228 = vmatmul.mubr.bf16.gmra.mrb[0].mxu0 %v944
        %v1229 = vpop.f32.mrb[0].mxu0
        %v1230 = vadd.f32 0.0, %v1229
        %v1231 = vpop.f32.mrb[0].mxu0
        %v1232 = vpop.f32.mrb[0].mxu0
        %v1233 = vadd.f32 0.0, %v1232
        %v1234 = vpop.f32.mrb[0].mxu0
        %1235 = vmatprep.mubr.bf16.mxu0 0
        %1236 = vmatmul.mubr.bf16.gmra.mrb[0].mxu0 %v945
        %v1237 = vpop.f32.mrb[0].mxu0
        %v1238 = vadd.f32 0.0, %v1237
        %v1239 = vpop.f32.mrb[0].mxu0
        %v1240 = vpop.f32.mrb[0].mxu0
        %v1241 = vadd.f32 0.0, %v1240
        %v1242 = vpop.f32.mrb[0].mxu0
        %1243 = vdwg.mxu0
        %v1244 = vpack.c.bf16 %v1145, %v1141
        %v1245 = vpack.c.bf16 %v1155, %v1151
        %v1246 = vpack.c.bf16 %v1165, %v1161
        %v1247 = vpack.c.bf16 %v1175, %v1171
        %v1248 = vpack.c.bf16 %v1147, %v1143
        %v1249 = vpack.c.bf16 %v1157, %v1153
        %v1250 = vpack.c.bf16 %v1167, %v1163
        %v1251 = vpack.c.bf16 %v1177, %v1173
        %v1252 = vpack.c.bf16 %v1217, %v1214
        %v1253 = vpack.c.bf16 %v1225, %v1222
        %v1254 = vpack.c.bf16 %v1233, %v1230
        %v1255 = vpack.c.bf16 %v1241, %v1238
        %vm1256 = vcmask 261120
        %v1258 = vsel %vm1256, %v1244, 0
        %v1261 = vsel %vm1256, %v1248, 0
        %1263 = vmatprep.subr.bf16.mxu0 0
        %1264 = vmatpush1.bf16.xpose.msra.mxu0 %v1261
        %1265 = vmatprep.subr.bf16.mxu0 0
        %1266 = vmatpush1.bf16.xpose.msra.mxu0 0
        %1267 = vmatprep.subr.bf16.mxu0 0
        %1268 = vmatpush1.bf16.xpose.msra.mxu0 0
        %1269 = vmatprep.subr.bf16.mxu0 0
        %1270 = vmatpush1.bf16.xpose.msra.mxu0 0
        %1271 = vmatprep.subr.bf16.mxu0 0
        %1272 = vmatpush1.bf16.xpose.msra.mxu0 0
        %1273 = vmatprep.subr.bf16.mxu0 0
        %1274 = vmatpush1.bf16.xpose.msra.mxu0 0
        %1275 = vmatprep.subr.bf16.mxu0 0
        %1276 = vmatpush1.bf16.xpose.msra.mxu0 0
        %1277 = vmatprep.subr.bf16.mxu0 0
        %1278 = vmatpush1.bf16.xpose.msra.mxu0 0
        %1279 = vmatprep.subr.bf16.mxu0 0
        %1280 = vmatpush1.bf16.xpose.msra.mxu0 0
        %1281 = vmatprep.subr.bf16.mxu0 0
        %1282 = vmatpush1.bf16.xpose.msra.mxu0 0
        %1283 = vmatprep.subr.bf16.mxu0 0
        %1284 = vmatpush1.bf16.xpose.msra.mxu0 0
        %1285 = vmatprep.subr.bf16.mxu0 0
        %1286 = vmatpush1.bf16.xpose.msra.mxu0 0
        %1287 = vmatprep.subr.bf16.mxu0 0
        %1288 = vmatpush1.bf16.xpose.msra.mxu0 0
        %1289 = vmatprep.subr.bf16.mxu0 0
        %1290 = vmatpush1.bf16.xpose.msra.mxu0 0
        %1291 = vmatprep.subr.bf16.mxu0 0
        %1292 = vmatpush1.bf16.xpose.msra.mxu0 0
        %1293 = vmatprep.subr.bf16.mxu0 0
        %1294 = vmatpush1.bf16.xpose.msra.mxu0 0
        %1295 = vmatprep.mubr.bf16.mxu0 0
        %1296 = vmatmul.mubr.bf16.gmra.mrb[0].mxu0 %v1258
        %v1297 = vpop.f32.mrb[0].mxu0
        %v1298 = vadd.f32 0.0, %v1297
        %v1299 = vpop.f32.mrb[0].mxu0
        %v1300 = vpop.f32.mrb[0].mxu0
        %v1301 = vadd.f32 0.0, %v1300
        %v1302 = vpop.f32.mrb[0].mxu0
        %1303 = vdwg.mxu0
        %v1305 = vsel %vm1256, %v1245, 0
        %v1308 = vsel %vm1256, %v1249, 0
        %1310 = vmatprep.subr.bf16.mxu0 0
        %1311 = vmatpush1.bf16.xpose.msra.mxu0 %v1308
        %1312 = vmatprep.subr.bf16.mxu0 0
        %1313 = vmatpush1.bf16.xpose.msra.mxu0 0
        %1314 = vmatprep.subr.bf16.mxu0 0
        %1315 = vmatpush1.bf16.xpose.msra.mxu0 0
        %1316 = vmatprep.subr.bf16.mxu0 0
        %1317 = vmatpush1.bf16.xpose.msra.mxu0 0
        %1318 = vmatprep.subr.bf16.mxu0 0
        %1319 = vmatpush1.bf16.xpose.msra.mxu0 0
        %1320 = vmatprep.subr.bf16.mxu0 0
        %1321 = vmatpush1.bf16.xpose.msra.mxu0 0
        %1322 = vmatprep.subr.bf16.mxu0 0
        %1323 = vmatpush1.bf16.xpose.msra.mxu0 0
        %1324 = vmatprep.subr.bf16.mxu0 0
        %1325 = vmatpush1.bf16.xpose.msra.mxu0 0
        %1326 = vmatprep.subr.bf16.mxu0 0
        %1327 = vmatpush1.bf16.xpose.msra.mxu0 0
        %1328 = vmatprep.subr.bf16.mxu0 0
        %1329 = vmatpush1.bf16.xpose.msra.mxu0 0
        %1330 = vmatprep.subr.bf16.mxu0 0
        %1331 = vmatpush1.bf16.xpose.msra.mxu0 0
        %1332 = vmatprep.subr.bf16.mxu0 0
        %1333 = vmatpush1.bf16.xpose.msra.mxu0 0
        %1334 = vmatprep.subr.bf16.mxu0 0
        %1335 = vmatpush1.bf16.xpose.msra.mxu0 0
        %1336 = vmatprep.subr.bf16.mxu0 0
        %1337 = vmatpush1.bf16.xpose.msra.mxu0 0
        %1338 = vmatprep.subr.bf16.mxu0 0
        %1339 = vmatpush1.bf16.xpose.msra.mxu0 0
        %1340 = vmatprep.subr.bf16.mxu0 0
        %1341 = vmatpush1.bf16.xpose.msra.mxu0 0
        %1342 = vmatprep.mubr.bf16.mxu0 0
        %1343 = vmatmul.mubr.bf16.gmra.mrb[0].mxu0 %v1305
        %v1344 = vpop.f32.mrb[0].mxu0
        %v1345 = vadd.f32 0.0, %v1344
        %v1346 = vpop.f32.mrb[0].mxu0
        %v1347 = vpop.f32.mrb[0].mxu0
        %v1348 = vadd.f32 0.0, %v1347
        %v1349 = vpop.f32.mrb[0].mxu0
        %1350 = vdwg.mxu0
        %v1352 = vsel %vm1256, %v1246, 0
        %v1355 = vsel %vm1256, %v1250, 0
        %1357 = vmatprep.subr.bf16.mxu0 0
        %1358 = vmatpush1.bf16.xpose.msra.mxu0 %v1355
        %1359 = vmatprep.subr.bf16.mxu0 0
        %1360 = vmatpush1.bf16.xpose.msra.mxu0 0
        %1361 = vmatprep.subr.bf16.mxu0 0
        %1362 = vmatpush1.bf16.xpose.msra.mxu0 0
        %1363 = vmatprep.subr.bf16.mxu0 0
        %1364 = vmatpush1.bf16.xpose.msra.mxu0 0
        %1365 = vmatprep.subr.bf16.mxu0 0
        %1366 = vmatpush1.bf16.xpose.msra.mxu0 0
        %1367 = vmatprep.subr.bf16.mxu0 0
        %1368 = vmatpush1.bf16.xpose.msra.mxu0 0
        %1369 = vmatprep.subr.bf16.mxu0 0
        %1370 = vmatpush1.bf16.xpose.msra.mxu0 0
        %1371 = vmatprep.subr.bf16.mxu0 0
        %1372 = vmatpush1.bf16.xpose.msra.mxu0 0
        %1373 = vmatprep.subr.bf16.mxu0 0
        %1374 = vmatpush1.bf16.xpose.msra.mxu0 0
        %1375 = vmatprep.subr.bf16.mxu0 0
        %1376 = vmatpush1.bf16.xpose.msra.mxu0 0
        %1377 = vmatprep.subr.bf16.mxu0 0
        %1378 = vmatpush1.bf16.xpose.msra.mxu0 0
        %1379 = vmatprep.subr.bf16.mxu0 0
        %1380 = vmatpush1.bf16.xpose.msra.mxu0 0
        %1381 = vmatprep.subr.bf16.mxu0 0
        %1382 = vmatpush1.bf16.xpose.msra.mxu0 0
        %1383 = vmatprep.subr.bf16.mxu0 0
        %1384 = vmatpush1.bf16.xpose.msra.mxu0 0
        %1385 = vmatprep.subr.bf16.mxu0 0
        %1386 = vmatpush1.bf16.xpose.msra.mxu0 0
        %1387 = vmatprep.subr.bf16.mxu0 0
        %1388 = vmatpush1.bf16.xpose.msra.mxu0 0
        %1389 = vmatprep.mubr.bf16.mxu0 0
        %1390 = vmatmul.mubr.bf16.gmra.mrb[0].mxu0 %v1352
        %v1391 = vpop.f32.mrb[0].mxu0
        %v1392 = vadd.f32 0.0, %v1391
        %v1393 = vpop.f32.mrb[0].mxu0
        %v1394 = vpop.f32.mrb[0].mxu0
        %v1395 = vadd.f32 0.0, %v1394
        %v1396 = vpop.f32.mrb[0].mxu0
        %1397 = vdwg.mxu0
        %v1399 = vsel %vm1256, %v1247, 0
        %v1402 = vsel %vm1256, %v1251, 0
        %1404 = vmatprep.subr.bf16.mxu0 0
        %1405 = vmatpush1.bf16.xpose.msra.mxu0 %v1402
        %1406 = vmatprep.subr.bf16.mxu0 0
        %1407 = vmatpush1.bf16.xpose.msra.mxu0 0
        %1408 = vmatprep.subr.bf16.mxu0 0
        %1409 = vmatpush1.bf16.xpose.msra.mxu0 0
        %1410 = vmatprep.subr.bf16.mxu0 0
        %1411 = vmatpush1.bf16.xpose.msra.mxu0 0
        %1412 = vmatprep.subr.bf16.mxu0 0
        %1413 = vmatpush1.bf16.xpose.msra.mxu0 0
        %1414 = vmatprep.subr.bf16.mxu0 0
        %1415 = vmatpush1.bf16.xpose.msra.mxu0 0
        %1416 = vmatprep.subr.bf16.mxu0 0
        %1417 = vmatpush1.bf16.xpose.msra.mxu0 0
        %1418 = vmatprep.subr.bf16.mxu0 0
        %1419 = vmatpush1.bf16.xpose.msra.mxu0 0
        %1420 = vmatprep.subr.bf16.mxu0 0
        %1421 = vmatpush1.bf16.xpose.msra.mxu0 0
        %1422 = vmatprep.subr.bf16.mxu0 0
        %1423 = vmatpush1.bf16.xpose.msra.mxu0 0
        %1424 = vmatprep.subr.bf16.mxu0 0
        %1425 = vmatpush1.bf16.xpose.msra.mxu0 0
        %1426 = vmatprep.subr.bf16.mxu0 0
        %1427 = vmatpush1.bf16.xpose.msra.mxu0 0
        %1428 = vmatprep.subr.bf16.mxu0 0
        %1429 = vmatpush1.bf16.xpose.msra.mxu0 0
        %1430 = vmatprep.subr.bf16.mxu0 0
        %1431 = vmatpush1.bf16.xpose.msra.mxu0 0
        %1432 = vmatprep.subr.bf16.mxu0 0
        %1433 = vmatpush1.bf16.xpose.msra.mxu0 0
        %1434 = vmatprep.subr.bf16.mxu0 0
        %1435 = vmatpush1.bf16.xpose.msra.mxu0 0
        %1436 = vmatprep.mubr.bf16.mxu0 0
        %1437 = vmatmul.mubr.bf16.gmra.mrb[0].mxu0 %v1399
        %v1438 = vpop.f32.mrb[0].mxu0
        %v1439 = vadd.f32 0.0, %v1438
        %v1440 = vpop.f32.mrb[0].mxu0
        %v1441 = vpop.f32.mrb[0].mxu0
        %v1442 = vadd.f32 0.0, %v1441
        %v1443 = vpop.f32.mrb[0].mxu0
        %1444 = vdwg.mxu0
        %vm1445 = vcmask 130048
        %v1446 = vsel %vm1445, %v1298, -inf
        %1447 = vmax.xlane.f32.xlu0 %v1446
        %v1448 = vpop.xlane.xlu0 %1447
        %v1449 = vsel %vm1445, %v1301, -inf
        %1450 = vmax.xlane.f32.xlu0 %v1449
        %v1451 = vpop.xlane.xlu0 %1450
        %v1452 = vsel %vm1445, %v1345, -inf
        %1453 = vmax.xlane.f32.xlu0 %v1452
        %v1454 = vpop.xlane.xlu0 %1453
        %v1455 = vsel %vm1445, %v1348, -inf
        %1456 = vmax.xlane.f32.xlu0 %v1455
        %v1457 = vpop.xlane.xlu0 %1456
        %v1458 = vsel %vm1445, %v1392, -inf
        %1459 = vmax.xlane.f32.xlu0 %v1458
        %v1460 = vpop.xlane.xlu0 %1459
        %v1461 = vsel %vm1445, %v1395, -inf
        %1462 = vmax.xlane.f32.xlu0 %v1461
        %v1463 = vpop.xlane.xlu0 %1462
        %v1464 = vsel %vm1445, %v1439, -inf
        %1465 = vmax.xlane.f32.xlu0 %v1464
        %v1466 = vpop.xlane.xlu0 %1465
        %v1467 = vsel %vm1445, %v1442, -inf
        %1468 = vmax.xlane.f32.xlu0 %v1467
        %v1469 = vpop.xlane.xlu0 %1468
        %v1470 = vsub.f32 %v1298, %v1448
        %v1471 = vsub.f32 %v1301, %v1451
        %v1472 = vsub.f32 %v1345, %v1454
        %v1473 = vsub.f32 %v1348, %v1457
        %v1474 = vsub.f32 %v1392, %v1460
        %v1475 = vsub.f32 %v1395, %v1463
        %v1476 = vsub.f32 %v1439, %v1466
        %v1477 = vsub.f32 %v1442, %v1469
        %v1478 = vmul.f32 %v1470, 1.442695
        %v1479 = vpow.pop %v1478
        %v1480 = vmul.f32 %v1471, 1.442695
        %v1481 = vpow.pop %v1480
        %v1482 = vmul.f32 %v1472, 1.442695
        %v1483 = vpow.pop %v1482
        %v1484 = vmul.f32 %v1473, 1.442695
        %v1485 = vpow.pop %v1484
        %v1486 = vmul.f32 %v1474, 1.442695
        %v1487 = vpow.pop %v1486
        %v1488 = vmul.f32 %v1475, 1.442695
        %v1489 = vpow.pop %v1488
        %v1490 = vmul.f32 %v1476, 1.442695
        %v1491 = vpow.pop %v1490
        %v1492 = vmul.f32 %v1477, 1.442695
        %v1493 = vpow.pop %v1492
        %v1494 = vsel %vm1445, %v1479, 0.0
        %1495 = vadd.xlane.f32.xlu0 %v1494
        %v1496 = vpop.xlane.xlu0 %1495
        %v1497 = vsel %vm1445, %v1481, 0.0
        %1498 = vadd.xlane.f32.xlu0 %v1497
        %v1499 = vpop.xlane.xlu0 %1498
        %v1500 = vsel %vm1445, %v1483, 0.0
        %1501 = vadd.xlane.f32.xlu0 %v1500
        %v1502 = vpop.xlane.xlu0 %1501
        %v1503 = vsel %vm1445, %v1485, 0.0
        %1504 = vadd.xlane.f32.xlu0 %v1503
        %v1505 = vpop.xlane.xlu0 %1504
        %v1506 = vsel %vm1445, %v1487, 0.0
        %1507 = vadd.xlane.f32.xlu0 %v1506
        %v1508 = vpop.xlane.xlu0 %1507
        %v1509 = vsel %vm1445, %v1489, 0.0
        %1510 = vadd.xlane.f32.xlu0 %v1509
        %v1511 = vpop.xlane.xlu0 %1510
        %v1512 = vsel %vm1445, %v1491, 0.0
        %1513 = vadd.xlane.f32.xlu0 %v1512
        %v1514 = vpop.xlane.xlu0 %1513
        %v1515 = vsel %vm1445, %v1493, 0.0
        %1516 = vadd.xlane.f32.xlu0 %v1515
        %v1517 = vpop.xlane.xlu0 %1516
        %v1518 = vrcp.pop %v1496
        %v1519 = vrcp.pop %v1499
        %v1520 = vrcp.pop %v1502
        %v1521 = vrcp.pop %v1505
        %v1522 = vrcp.pop %v1508
        %v1523 = vrcp.pop %v1511
        %v1524 = vrcp.pop %v1514
        %v1525 = vrcp.pop %v1517
        %v1526 = vmul.f32 %v1479, %v1518
        %v1527 = vmul.f32 %v1481, %v1519
        %v1528 = vmul.f32 %v1483, %v1520
        %v1529 = vmul.f32 %v1485, %v1521
        %v1530 = vmul.f32 %v1487, %v1522
        %v1531 = vmul.f32 %v1489, %v1523
        %v1532 = vmul.f32 %v1491, %v1524
        %v1533 = vmul.f32 %v1493, %v1525
        %v1534 = vpack.c.bf16 %v1527, %v1526
        %v1535 = vpack.c.bf16 %v1529, %v1528
        %v1536 = vpack.c.bf16 %v1531, %v1530
        %v1537 = vpack.c.bf16 %v1533, %v1532
        %v1539 = vsel %vm1445, %v1534, 0
        %1541 = vmatprep.subr.bf16.mxu0 0
        %1542 = vmatpush1.bf16.msra.mxu0 %v1252
        %1543 = vmatprep.subr.bf16.mxu0 0
        %1544 = vmatpush1.bf16.msra.mxu0 0
        %1545 = vmatprep.subr.bf16.mxu0 0
        %1546 = vmatpush1.bf16.msra.mxu0 0
        %1547 = vmatprep.subr.bf16.mxu0 0
        %1548 = vmatpush1.bf16.msra.mxu0 0
        %1549 = vmatprep.subr.bf16.mxu0 0
        %1550 = vmatpush1.bf16.msra.mxu0 0
        %1551 = vmatprep.subr.bf16.mxu0 0
        %1552 = vmatpush1.bf16.msra.mxu0 0
        %1553 = vmatprep.subr.bf16.mxu0 0
        %1554 = vmatpush1.bf16.msra.mxu0 0
        %1555 = vmatprep.subr.bf16.mxu0 0
        %1556 = vmatpush1.bf16.msra.mxu0 0
        %1557 = vmatprep.subr.bf16.mxu0 0
        %1558 = vmatpush1.bf16.msra.mxu0 0
        %1559 = vmatprep.subr.bf16.mxu0 0
        %1560 = vmatpush1.bf16.msra.mxu0 0
        %1561 = vmatprep.subr.bf16.mxu0 0
        %1562 = vmatpush1.bf16.msra.mxu0 0
        %1563 = vmatprep.subr.bf16.mxu0 0
        %1564 = vmatpush1.bf16.msra.mxu0 0
        %1565 = vmatprep.subr.bf16.mxu0 0
        %1566 = vmatpush1.bf16.msra.mxu0 0
        %1567 = vmatprep.subr.bf16.mxu0 0
        %1568 = vmatpush1.bf16.msra.mxu0 0
        %1569 = vmatprep.subr.bf16.mxu0 0
        %1570 = vmatpush1.bf16.msra.mxu0 0
        %1571 = vmatprep.subr.bf16.mxu0 0
        %1572 = vmatpush1.bf16.msra.mxu0 0
        %1573 = vmatprep.mubr.bf16.mxu0 0
        %1574 = vmatmul.mubr.bf16.gmra.mrb[0].mxu0 %v1539
        %v1575 = vpop.f32.mrb[0].mxu0
        %v1576 = vadd.f32 0.0, %v1575
        %v1577 = vpop.f32.mrb[0].mxu0
        %v1578 = vpop.f32.mrb[0].mxu0
        %v1579 = vadd.f32 0.0, %v1578
        %v1580 = vpop.f32.mrb[0].mxu0
        %1581 = vdwg.mxu0
        %v1583 = vsel %vm1445, %v1535, 0
        %1585 = vmatprep.subr.bf16.mxu0 0
        %1586 = vmatpush1.bf16.msra.mxu0 %v1253
        %1587 = vmatprep.subr.bf16.mxu0 0
        %1588 = vmatpush1.bf16.msra.mxu0 0
        %1589 = vmatprep.subr.bf16.mxu0 0
        %1590 = vmatpush1.bf16.msra.mxu0 0
        %1591 = vmatprep.subr.bf16.mxu0 0
        %1592 = vmatpush1.bf16.msra.mxu0 0
        %1593 = vmatprep.subr.bf16.mxu0 0
        %1594 = vmatpush1.bf16.msra.mxu0 0
        %1595 = vmatprep.subr.bf16.mxu0 0
        %1596 = vmatpush1.bf16.msra.mxu0 0
        %1597 = vmatprep.subr.bf16.mxu0 0
        %1598 = vmatpush1.bf16.msra.mxu0 0
        %1599 = vmatprep.subr.bf16.mxu0 0
        %1600 = vmatpush1.bf16.msra.mxu0 0
        %1601 = vmatprep.subr.bf16.mxu0 0
        %1602 = vmatpush1.bf16.msra.mxu0 0
        %1603 = vmatprep.subr.bf16.mxu0 0
        %1604 = vmatpush1.bf16.msra.mxu0 0
        %1605 = vmatprep.subr.bf16.mxu0 0
        %1606 = vmatpush1.bf16.msra.mxu0 0
        %1607 = vmatprep.subr.bf16.mxu0 0
        %1608 = vmatpush1.bf16.msra.mxu0 0
        %1609 = vmatprep.subr.bf16.mxu0 0
        %1610 = vmatpush1.bf16.msra.mxu0 0
        %1611 = vmatprep.subr.bf16.mxu0 0
        %1612 = vmatpush1.bf16.msra.mxu0 0
        %1613 = vmatprep.subr.bf16.mxu0 0
        %1614 = vmatpush1.bf16.msra.mxu0 0
        %1615 = vmatprep.subr.bf16.mxu0 0
        %1616 = vmatpush1.bf16.msra.mxu0 0
        %1617 = vmatprep.mubr.bf16.mxu0 0
        %1618 = vmatmul.mubr.bf16.gmra.mrb[0].mxu0 %v1583
        %v1619 = vpop.f32.mrb[0].mxu0
        %v1620 = vadd.f32 0.0, %v1619
        %v1621 = vpop.f32.mrb[0].mxu0
        %v1622 = vpop.f32.mrb[0].mxu0
        %v1623 = vadd.f32 0.0, %v1622
        %v1624 = vpop.f32.mrb[0].mxu0
        %1625 = vdwg.mxu0
        %v1627 = vsel %vm1445, %v1536, 0
        %1629 = vmatprep.subr.bf16.mxu0 0
        %1630 = vmatpush1.bf16.msra.mxu0 %v1254
        %1631 = vmatprep.subr.bf16.mxu0 0
        %1632 = vmatpush1.bf16.msra.mxu0 0
        %1633 = vmatprep.subr.bf16.mxu0 0
        %1634 = vmatpush1.bf16.msra.mxu0 0
        %1635 = vmatprep.subr.bf16.mxu0 0
        %1636 = vmatpush1.bf16.msra.mxu0 0
        %1637 = vmatprep.subr.bf16.mxu0 0
        %1638 = vmatpush1.bf16.msra.mxu0 0
        %1639 = vmatprep.subr.bf16.mxu0 0
        %1640 = vmatpush1.bf16.msra.mxu0 0
        %1641 = vmatprep.subr.bf16.mxu0 0
        %1642 = vmatpush1.bf16.msra.mxu0 0
        %1643 = vmatprep.subr.bf16.mxu0 0
        %1644 = vmatpush1.bf16.msra.mxu0 0
        %1645 = vmatprep.subr.bf16.mxu0 0
        %1646 = vmatpush1.bf16.msra.mxu0 0
        %1647 = vmatprep.subr.bf16.mxu0 0
        %1648 = vmatpush1.bf16.msra.mxu0 0
        %1649 = vmatprep.subr.bf16.mxu0 0
        %1650 = vmatpush1.bf16.msra.mxu0 0
        %1651 = vmatprep.subr.bf16.mxu0 0
        %1652 = vmatpush1.bf16.msra.mxu0 0
        %1653 = vmatprep.subr.bf16.mxu0 0
        %1654 = vmatpush1.bf16.msra.mxu0 0
        %1655 = vmatprep.subr.bf16.mxu0 0
        %1656 = vmatpush1.bf16.msra.mxu0 0
        %1657 = vmatprep.subr.bf16.mxu0 0
        %1658 = vmatpush1.bf16.msra.mxu0 0
        %1659 = vmatprep.subr.bf16.mxu0 0
        %1660 = vmatpush1.bf16.msra.mxu0 0
        %1661 = vmatprep.mubr.bf16.mxu0 0
        %1662 = vmatmul.mubr.bf16.gmra.mrb[0].mxu0 %v1627
        %v1663 = vpop.f32.mrb[0].mxu0
        %v1664 = vadd.f32 0.0, %v1663
        %v1665 = vpop.f32.mrb[0].mxu0
        %v1666 = vpop.f32.mrb[0].mxu0
        %v1667 = vadd.f32 0.0, %v1666
        %v1668 = vpop.f32.mrb[0].mxu0
        %1669 = vdwg.mxu0
        %v1671 = vsel %vm1445, %v1537, 0
        %1673 = vmatprep.subr.bf16.mxu0 0
        %1674 = vmatpush1.bf16.msra.mxu0 %v1255
        %1675 = vmatprep.subr.bf16.mxu0 0
        %1676 = vmatpush1.bf16.msra.mxu0 0
        %1677 = vmatprep.subr.bf16.mxu0 0
        %1678 = vmatpush1.bf16.msra.mxu0 0
        %1679 = vmatprep.subr.bf16.mxu0 0
        %1680 = vmatpush1.bf16.msra.mxu0 0
        %1681 = vmatprep.subr.bf16.mxu0 0
        %1682 = vmatpush1.bf16.msra.mxu0 0
        %1683 = vmatprep.subr.bf16.mxu0 0
        %1684 = vmatpush1.bf16.msra.mxu0 0
        %1685 = vmatprep.subr.bf16.mxu0 0
        %1686 = vmatpush1.bf16.msra.mxu0 0
        %1687 = vmatprep.subr.bf16.mxu0 0
        %1688 = vmatpush1.bf16.msra.mxu0 0
        %1689 = vmatprep.subr.bf16.mxu0 0
        %1690 = vmatpush1.bf16.msra.mxu0 0
        %1691 = vmatprep.subr.bf16.mxu0 0
        %1692 = vmatpush1.bf16.msra.mxu0 0
        %1693 = vmatprep.subr.bf16.mxu0 0
        %1694 = vmatpush1.bf16.msra.mxu0 0
        %1695 = vmatprep.subr.bf16.mxu0 0
        %1696 = vmatpush1.bf16.msra.mxu0 0
        %1697 = vmatprep.subr.bf16.mxu0 0
        %1698 = vmatpush1.bf16.msra.mxu0 0
        %1699 = vmatprep.subr.bf16.mxu0 0
        %1700 = vmatpush1.bf16.msra.mxu0 0
        %1701 = vmatprep.subr.bf16.mxu0 0
        %1702 = vmatpush1.bf16.msra.mxu0 0
        %1703 = vmatprep.subr.bf16.mxu0 0
        %1704 = vmatpush1.bf16.msra.mxu0 0
        %1705 = vmatprep.mubr.bf16.mxu0 0
        %1706 = vmatmul.mubr.bf16.gmra.mrb[0].mxu0 %v1671
        %v1707 = vpop.f32.mrb[0].mxu0
        %v1708 = vadd.f32 0.0, %v1707
        %v1709 = vpop.f32.mrb[0].mxu0
        %v1710 = vpop.f32.mrb[0].mxu0
        %v1711 = vadd.f32 0.0, %v1710
        %v1712 = vpop.f32.mrb[0].mxu0
        %1713 = vdwg.mxu0
        %v1714 = vpack.c.bf16 %v1579, %v1576
        %v1715 = vpack.c.bf16 %v1623, %v1620
        %v1716 = vpack.c.bf16 %v1667, %v1664
        %v1717 = vpack.c.bf16 %v1711, %v1708
        %1718 = vst.msk [vmem:[#allocation3] sm:$0xff] %vm1256, %v1714
        %1719 = vst.msk [vmem:[#allocation3 + $0x8] sm:$0xff] %vm1256, %v1715
        %1720 = vst.msk [vmem:[#allocation3 + $0x10] sm:$0xff] %vm1256, %v1716
        %1721 = vst.msk [vmem:[#allocation3 + $0x18] sm:$0xff] %vm1256, %v1717
        %1723 = vrot.lane.b32.xlu0 %v1244, 96
        %v1724 = vpop.permute.xlu0 %1723
        %1726 = vrot.lane.b32.xlu0 %v1248, 96
        %v1727 = vpop.permute.xlu0 %1726
        %v1729 = vsel %vm1256, %v1724, 0
        %v1732 = vsel %vm1256, %v1727, 0
        %1734 = vmatprep.subr.bf16.mxu0 0
        %1735 = vmatpush1.bf16.xpose.msra.mxu0 %v1732
        %1736 = vmatprep.subr.bf16.mxu0 0
        %1737 = vmatpush1.bf16.xpose.msra.mxu0 0
        %1738 = vmatprep.subr.bf16.mxu0 0
        %1739 = vmatpush1.bf16.xpose.msra.mxu0 0
        %1740 = vmatprep.subr.bf16.mxu0 0
        %1741 = vmatpush1.bf16.xpose.msra.mxu0 0
        %1742 = vmatprep.subr.bf16.mxu0 0
        %1743 = vmatpush1.bf16.xpose.msra.mxu0 0
        %1744 = vmatprep.subr.bf16.mxu0 0
        %1745 = vmatpush1.bf16.xpose.msra.mxu0 0
        %1746 = vmatprep.subr.bf16.mxu0 0
        %1747 = vmatpush1.bf16.xpose.msra.mxu0 0
        %1748 = vmatprep.subr.bf16.mxu0 0
        %1749 = vmatpush1.bf16.xpose.msra.mxu0 0
        %1750 = vmatprep.subr.bf16.mxu0 0
        %1751 = vmatpush1.bf16.xpose.msra.mxu0 0
        %1752 = vmatprep.subr.bf16.mxu0 0
        %1753 = vmatpush1.bf16.xpose.msra.mxu0 0
        %1754 = vmatprep.subr.bf16.mxu0 0
        %1755 = vmatpush1.bf16.xpose.msra.mxu0 0
        %1756 = vmatprep.subr.bf16.mxu0 0
        %1757 = vmatpush1.bf16.xpose.msra.mxu0 0
        %1758 = vmatprep.subr.bf16.mxu0 0
        %1759 = vmatpush1.bf16.xpose.msra.mxu0 0
        %1760 = vmatprep.subr.bf16.mxu0 0
        %1761 = vmatpush1.bf16.xpose.msra.mxu0 0
        %1762 = vmatprep.subr.bf16.mxu0 0
        %1763 = vmatpush1.bf16.xpose.msra.mxu0 0
        %1764 = vmatprep.subr.bf16.mxu0 0
        %1765 = vmatpush1.bf16.xpose.msra.mxu0 0
        %1766 = vmatprep.mubr.bf16.mxu0 0
        %1767 = vmatmul.mubr.bf16.gmra.mrb[0].mxu0 %v1729
        %v1768 = vpop.f32.mrb[0].mxu0
        %v1769 = vadd.f32 0.0, %v1768
        %v1770 = vpop.f32.mrb[0].mxu0
        %v1771 = vpop.f32.mrb[0].mxu0
        %v1772 = vadd.f32 0.0, %v1771
        %v1773 = vpop.f32.mrb[0].mxu0
        %1774 = vdwg.mxu0
        %1776 = vrot.lane.b32.xlu0 %v1245, 96
        %v1777 = vpop.permute.xlu0 %1776
        %1779 = vrot.lane.b32.xlu0 %v1249, 96
        %v1780 = vpop.permute.xlu0 %1779
        %v1782 = vsel %vm1256, %v1777, 0
        %v1785 = vsel %vm1256, %v1780, 0
        %1787 = vmatprep.subr.bf16.mxu0 0
        %1788 = vmatpush1.bf16.xpose.msra.mxu0 %v1785
        %1789 = vmatprep.subr.bf16.mxu0 0
        %1790 = vmatpush1.bf16.xpose.msra.mxu0 0
        %1791 = vmatprep.subr.bf16.mxu0 0
        %1792 = vmatpush1.bf16.xpose.msra.mxu0 0
        %1793 = vmatprep.subr.bf16.mxu0 0
        %1794 = vmatpush1.bf16.xpose.msra.mxu0 0
        %1795 = vmatprep.subr.bf16.mxu0 0
        %1796 = vmatpush1.bf16.xpose.msra.mxu0 0
        %1797 = vmatprep.subr.bf16.mxu0 0
        %1798 = vmatpush1.bf16.xpose.msra.mxu0 0
        %1799 = vmatprep.subr.bf16.mxu0 0
        %1800 = vmatpush1.bf16.xpose.msra.mxu0 0
        %1801 = vmatprep.subr.bf16.mxu0 0
        %1802 = vmatpush1.bf16.xpose.msra.mxu0 0
        %1803 = vmatprep.subr.bf16.mxu0 0
        %1804 = vmatpush1.bf16.xpose.msra.mxu0 0
        %1805 = vmatprep.subr.bf16.mxu0 0
        %1806 = vmatpush1.bf16.xpose.msra.mxu0 0
        %1807 = vmatprep.subr.bf16.mxu0 0
        %1808 = vmatpush1.bf16.xpose.msra.mxu0 0
        %1809 = vmatprep.subr.bf16.mxu0 0
        %1810 = vmatpush1.bf16.xpose.msra.mxu0 0
        %1811 = vmatprep.subr.bf16.mxu0 0
        %1812 = vmatpush1.bf16.xpose.msra.mxu0 0
        %1813 = vmatprep.subr.bf16.mxu0 0
        %1814 = vmatpush1.bf16.xpose.msra.mxu0 0
        %1815 = vmatprep.subr.bf16.mxu0 0
        %1816 = vmatpush1.bf16.xpose.msra.mxu0 0
        %1817 = vmatprep.subr.bf16.mxu0 0
        %1818 = vmatpush1.bf16.xpose.msra.mxu0 0
        %1819 = vmatprep.mubr.bf16.mxu0 0
        %1820 = vmatmul.mubr.bf16.gmra.mrb[0].mxu0 %v1782
        %v1821 = vpop.f32.mrb[0].mxu0
        %v1822 = vadd.f32 0.0, %v1821
        %v1823 = vpop.f32.mrb[0].mxu0
        %v1824 = vpop.f32.mrb[0].mxu0
        %v1825 = vadd.f32 0.0, %v1824
        %v1826 = vpop.f32.mrb[0].mxu0
        %1827 = vdwg.mxu0
        %1829 = vrot.lane.b32.xlu0 %v1246, 96
        %v1830 = vpop.permute.xlu0 %1829
        %1832 = vrot.lane.b32.xlu0 %v1250, 96
        %v1833 = vpop.permute.xlu0 %1832
        %v1835 = vsel %vm1256, %v1830, 0
        %v1838 = vsel %vm1256, %v1833, 0
        %1840 = vmatprep.subr.bf16.mxu0 0
        %1841 = vmatpush1.bf16.xpose.msra.mxu0 %v1838
        %1842 = vmatprep.subr.bf16.mxu0 0
        %1843 = vmatpush1.bf16.xpose.msra.mxu0 0
        %1844 = vmatprep.subr.bf16.mxu0 0
        %1845 = vmatpush1.bf16.xpose.msra.mxu0 0
        %1846 = vmatprep.subr.bf16.mxu0 0
        %1847 = vmatpush1.bf16.xpose.msra.mxu0 0
        %1848 = vmatprep.subr.bf16.mxu0 0
        %1849 = vmatpush1.bf16.xpose.msra.mxu0 0
        %1850 = vmatprep.subr.bf16.mxu0 0
        %1851 = vmatpush1.bf16.xpose.msra.mxu0 0
        %1852 = vmatprep.subr.bf16.mxu0 0
        %1853 = vmatpush1.bf16.xpose.msra.mxu0 0
        %1854 = vmatprep.subr.bf16.mxu0 0
        %1855 = vmatpush1.bf16.xpose.msra.mxu0 0
        %1856 = vmatprep.subr.bf16.mxu0 0
        %1857 = vmatpush1.bf16.xpose.msra.mxu0 0
        %1858 = vmatprep.subr.bf16.mxu0 0
        %1859 = vmatpush1.bf16.xpose.msra.mxu0 0
        %1860 = vmatprep.subr.bf16.mxu0 0
        %1861 = vmatpush1.bf16.xpose.msra.mxu0 0
        %1862 = vmatprep.subr.bf16.mxu0 0
        %1863 = vmatpush1.bf16.xpose.msra.mxu0 0
        %1864 = vmatprep.subr.bf16.mxu0 0
        %1865 = vmatpush1.bf16.xpose.msra.mxu0 0
        %1866 = vmatprep.subr.bf16.mxu0 0
        %1867 = vmatpush1.bf16.xpose.msra.mxu0 0
        %1868 = vmatprep.subr.bf16.mxu0 0
        %1869 = vmatpush1.bf16.xpose.msra.mxu0 0
        %1870 = vmatprep.subr.bf16.mxu0 0
        %1871 = vmatpush1.bf16.xpose.msra.mxu0 0
        %1872 = vmatprep.mubr.bf16.mxu0 0
        %1873 = vmatmul.mubr.bf16.gmra.mrb[0].mxu0 %v1835
        %v1874 = vpop.f32.mrb[0].mxu0
        %v1875 = vadd.f32 0.0, %v1874
        %v1876 = vpop.f32.mrb[0].mxu0
        %v1877 = vpop.f32.mrb[0].mxu0
        %v1878 = vadd.f32 0.0, %v1877
        %v1879 = vpop.f32.mrb[0].mxu0
        %1880 = vdwg.mxu0
        %1882 = vrot.lane.b32.xlu0 %v1247, 96
        %v1883 = vpop.permute.xlu0 %1882
        %1885 = vrot.lane.b32.xlu0 %v1251, 96
        %v1886 = vpop.permute.xlu0 %1885
        %v1888 = vsel %vm1256, %v1883, 0
        %v1891 = vsel %vm1256, %v1886, 0
        %1893 = vmatprep.subr.bf16.mxu0 0
        %1894 = vmatpush1.bf16.xpose.msra.mxu0 %v1891
        %1895 = vmatprep.subr.bf16.mxu0 0
        %1896 = vmatpush1.bf16.xpose.msra.mxu0 0
        %1897 = vmatprep.subr.bf16.mxu0 0
        %1898 = vmatpush1.bf16.xpose.msra.mxu0 0
        %1899 = vmatprep.subr.bf16.mxu0 0
        %1900 = vmatpush1.bf16.xpose.msra.mxu0 0
        %1901 = vmatprep.subr.bf16.mxu0 0
        %1902 = vmatpush1.bf16.xpose.msra.mxu0 0
        %1903 = vmatprep.subr.bf16.mxu0 0
        %1904 = vmatpush1.bf16.xpose.msra.mxu0 0
        %1905 = vmatprep.subr.bf16.mxu0 0
        %1906 = vmatpush1.bf16.xpose.msra.mxu0 0
        %1907 = vmatprep.subr.bf16.mxu0 0
        %1908 = vmatpush1.bf16.xpose.msra.mxu0 0
        %1909 = vmatprep.subr.bf16.mxu0 0
        %1910 = vmatpush1.bf16.xpose.msra.mxu0 0
        %1911 = vmatprep.subr.bf16.mxu0 0
        %1912 = vmatpush1.bf16.xpose.msra.mxu0 0
        %1913 = vmatprep.subr.bf16.mxu0 0
        %1914 = vmatpush1.bf16.xpose.msra.mxu0 0
        %1915 = vmatprep.subr.bf16.mxu0 0
        %1916 = vmatpush1.bf16.xpose.msra.mxu0 0
        %1917 = vmatprep.subr.bf16.mxu0 0
        %1918 = vmatpush1.bf16.xpose.msra.mxu0 0
        %1919 = vmatprep.subr.bf16.mxu0 0
        %1920 = vmatpush1.bf16.xpose.msra.mxu0 0
        %1921 = vmatprep.subr.bf16.mxu0 0
        %1922 = vmatpush1.bf16.xpose.msra.mxu0 0
        %1923 = vmatprep.subr.bf16.mxu0 0
        %1924 = vmatpush1.bf16.xpose.msra.mxu0 0
        %1925 = vmatprep.mubr.bf16.mxu0 0
        %1926 = vmatmul.mubr.bf16.gmra.mrb[0].mxu0 %v1888
        %v1927 = vpop.f32.mrb[0].mxu0
        %v1928 = vadd.f32 0.0, %v1927
        %v1929 = vpop.f32.mrb[0].mxu0
        %v1930 = vpop.f32.mrb[0].mxu0
        %v1931 = vadd.f32 0.0, %v1930
        %v1932 = vpop.f32.mrb[0].mxu0
        %1933 = vdwg.mxu0
        %v1934 = vsel %vm1445, %v1769, -inf
        %1935 = vmax.xlane.f32.xlu0 %v1934
        %v1936 = vpop.xlane.xlu0 %1935
        %v1937 = vsel %vm1445, %v1772, -inf
        %1938 = vmax.xlane.f32.xlu0 %v1937
        %v1939 = vpop.xlane.xlu0 %1938
        %v1940 = vsel %vm1445, %v1822, -inf
        %1941 = vmax.xlane.f32.xlu0 %v1940
        %v1942 = vpop.xlane.xlu0 %1941
        %v1943 = vsel %vm1445, %v1825, -inf
        %1944 = vmax.xlane.f32.xlu0 %v1943
        %v1945 = vpop.xlane.xlu0 %1944
        %v1946 = vsel %vm1445, %v1875, -inf
        %1947 = vmax.xlane.f32.xlu0 %v1946
        %v1948 = vpop.xlane.xlu0 %1947
        %v1949 = vsel %vm1445, %v1878, -inf
        %1950 = vmax.xlane.f32.xlu0 %v1949
        %v1951 = vpop.xlane.xlu0 %1950
        %v1952 = vsel %vm1445, %v1928, -inf
        %1953 = vmax.xlane.f32.xlu0 %v1952
        %v1954 = vpop.xlane.xlu0 %1953
        %v1955 = vsel %vm1445, %v1931, -inf
        %1956 = vmax.xlane.f32.xlu0 %v1955
        %v1957 = vpop.xlane.xlu0 %1956
        %v1958 = vsub.f32 %v1769, %v1936
        %v1959 = vsub.f32 %v1772, %v1939
        %v1960 = vsub.f32 %v1822, %v1942
        %v1961 = vsub.f32 %v1825, %v1945
        %v1962 = vsub.f32 %v1875, %v1948
        %v1963 = vsub.f32 %v1878, %v1951
        %v1964 = vsub.f32 %v1928, %v1954
        %v1965 = vsub.f32 %v1931, %v1957
        %v1966 = vmul.f32 %v1958, 1.442695
        %v1967 = vpow.pop %v1966
        %v1968 = vmul.f32 %v1959, 1.442695
        %v1969 = vpow.pop %v1968
        %v1970 = vmul.f32 %v1960, 1.442695
        %v1971 = vpow.pop %v1970
        %v1972 = vmul.f32 %v1961, 1.442695
        %v1973 = vpow.pop %v1972
        %v1974 = vmul.f32 %v1962, 1.442695
        %v1975 = vpow.pop %v1974
        %v1976 = vmul.f32 %v1963, 1.442695
        %v1977 = vpow.pop %v1976
        %v1978 = vmul.f32 %v1964, 1.442695
        %v1979 = vpow.pop %v1978
        %v1980 = vmul.f32 %v1965, 1.442695
        %v1981 = vpow.pop %v1980
        %v1982 = vsel %vm1445, %v1967, 0.0
        %1983 = vadd.xlane.f32.xlu0 %v1982
        %v1984 = vpop.xlane.xlu0 %1983
        %v1985 = vsel %vm1445, %v1969, 0.0
        %1986 = vadd.xlane.f32.xlu0 %v1985
        %v1987 = vpop.xlane.xlu0 %1986
        %v1988 = vsel %vm1445, %v1971, 0.0
        %1989 = vadd.xlane.f32.xlu0 %v1988
        %v1990 = vpop.xlane.xlu0 %1989
        %v1991 = vsel %vm1445, %v1973, 0.0
        %1992 = vadd.xlane.f32.xlu0 %v1991
        %v1993 = vpop.xlane.xlu0 %1992
        %v1994 = vsel %vm1445, %v1975, 0.0
        %1995 = vadd.xlane.f32.xlu0 %v1994
        %v1996 = vpop.xlane.xlu0 %1995
        %v1997 = vsel %vm1445, %v1977, 0.0
        %1998 = vadd.xlane.f32.xlu0 %v1997
        %v1999 = vpop.xlane.xlu0 %1998
        %v2000 = vsel %vm1445, %v1979, 0.0
        %2001 = vadd.xlane.f32.xlu0 %v2000
        %v2002 = vpop.xlane.xlu0 %2001
        %v2003 = vsel %vm1445, %v1981, 0.0
        %2004 = vadd.xlane.f32.xlu0 %v2003
        %v2005 = vpop.xlane.xlu0 %2004
        %v2006 = vrcp.pop %v1984
        %v2007 = vrcp.pop %v1987
        %v2008 = vrcp.pop %v1990
        %v2009 = vrcp.pop %v1993
        %v2010 = vrcp.pop %v1996
        %v2011 = vrcp.pop %v1999
        %v2012 = vrcp.pop %v2002
        %v2013 = vrcp.pop %v2005
        %v2014 = vmul.f32 %v1967, %v2006
        %v2015 = vmul.f32 %v1969, %v2007
        %v2016 = vmul.f32 %v1971, %v2008
        %v2017 = vmul.f32 %v1973, %v2009
        %v2018 = vmul.f32 %v1975, %v2010
        %v2019 = vmul.f32 %v1977, %v2011
        %v2020 = vmul.f32 %v1979, %v2012
        %v2021 = vmul.f32 %v1981, %v2013
        %v2022 = vpack.c.bf16 %v2015, %v2014
        %v2023 = vpack.c.bf16 %v2017, %v2016
        %v2024 = vpack.c.bf16 %v2019, %v2018
        %v2025 = vpack.c.bf16 %v2021, %v2020
        %2027 = vrot.lane.b32.xlu0 %v1252, 96
        %v2028 = vpop.permute.xlu0 %2027
        %v2031 = vsel %vm1445, %v2022, 0
        %2033 = vmatprep.subr.bf16.mxu0 0
        %2034 = vmatpush1.bf16.msra.mxu0 %v2028
        %2035 = vmatprep.subr.bf16.mxu0 0
        %2036 = vmatpush1.bf16.msra.mxu0 0
        %2037 = vmatprep.subr.bf16.mxu0 0
        %2038 = vmatpush1.bf16.msra.mxu0 0
        %2039 = vmatprep.subr.bf16.mxu0 0
        %2040 = vmatpush1.bf16.msra.mxu0 0
        %2041 = vmatprep.subr.bf16.mxu0 0
        %2042 = vmatpush1.bf16.msra.mxu0 0
        %2043 = vmatprep.subr.bf16.mxu0 0
        %2044 = vmatpush1.bf16.msra.mxu0 0
        %2045 = vmatprep.subr.bf16.mxu0 0
        %2046 = vmatpush1.bf16.msra.mxu0 0
        %2047 = vmatprep.subr.bf16.mxu0 0
        %2048 = vmatpush1.bf16.msra.mxu0 0
        %2049 = vmatprep.subr.bf16.mxu0 0
        %2050 = vmatpush1.bf16.msra.mxu0 0
        %2051 = vmatprep.subr.bf16.mxu0 0
        %2052 = vmatpush1.bf16.msra.mxu0 0
        %2053 = vmatprep.subr.bf16.mxu0 0
        %2054 = vmatpush1.bf16.msra.mxu0 0
        %2055 = vmatprep.subr.bf16.mxu0 0
        %2056 = vmatpush1.bf16.msra.mxu0 0
        %2057 = vmatprep.subr.bf16.mxu0 0
        %2058 = vmatpush1.bf16.msra.mxu0 0
        %2059 = vmatprep.subr.bf16.mxu0 0
        %2060 = vmatpush1.bf16.msra.mxu0 0
        %2061 = vmatprep.subr.bf16.mxu0 0
        %2062 = vmatpush1.bf16.msra.mxu0 0
        %2063 = vmatprep.subr.bf16.mxu0 0
        %2064 = vmatpush1.bf16.msra.mxu0 0
        %2065 = vmatprep.mubr.bf16.mxu0 0
        %2066 = vmatmul.mubr.bf16.gmra.mrb[0].mxu0 %v2031
        %v2067 = vpop.f32.mrb[0].mxu0
        %v2068 = vadd.f32 0.0, %v2067
        %v2069 = vpop.f32.mrb[0].mxu0
        %v2070 = vpop.f32.mrb[0].mxu0
        %v2071 = vadd.f32 0.0, %v2070
        %v2072 = vpop.f32.mrb[0].mxu0
        %2073 = vdwg.mxu0
        %2075 = vrot.lane.b32.xlu0 %v1253, 96
        %v2076 = vpop.permute.xlu0 %2075
        %v2079 = vsel %vm1445, %v2023, 0
        %2081 = vmatprep.subr.bf16.mxu0 0
        %2082 = vmatpush1.bf16.msra.mxu0 %v2076
        %2083 = vmatprep.subr.bf16.mxu0 0
        %2084 = vmatpush1.bf16.msra.mxu0 0
        %2085 = vmatprep.subr.bf16.mxu0 0
        %2086 = vmatpush1.bf16.msra.mxu0 0
        %2087 = vmatprep.subr.bf16.mxu0 0
        %2088 = vmatpush1.bf16.msra.mxu0 0
        %2089 = vmatprep.subr.bf16.mxu0 0
        %2090 = vmatpush1.bf16.msra.mxu0 0
        %2091 = vmatprep.subr.bf16.mxu0 0
        %2092 = vmatpush1.bf16.msra.mxu0 0
        %2093 = vmatprep.subr.bf16.mxu0 0
        %2094 = vmatpush1.bf16.msra.mxu0 0
        %2095 = vmatprep.subr.bf16.mxu0 0
        %2096 = vmatpush1.bf16.msra.mxu0 0
        %2097 = vmatprep.subr.bf16.mxu0 0
        %2098 = vmatpush1.bf16.msra.mxu0 0
        %2099 = vmatprep.subr.bf16.mxu0 0
        %2100 = vmatpush1.bf16.msra.mxu0 0
        %2101 = vmatprep.subr.bf16.mxu0 0
        %2102 = vmatpush1.bf16.msra.mxu0 0
        %2103 = vmatprep.subr.bf16.mxu0 0
        %2104 = vmatpush1.bf16.msra.mxu0 0
        %2105 = vmatprep.subr.bf16.mxu0 0
        %2106 = vmatpush1.bf16.msra.mxu0 0
        %2107 = vmatprep.subr.bf16.mxu0 0
        %2108 = vmatpush1.bf16.msra.mxu0 0
        %2109 = vmatprep.subr.bf16.mxu0 0
        %2110 = vmatpush1.bf16.msra.mxu0 0
        %2111 = vmatprep.subr.bf16.mxu0 0
        %2112 = vmatpush1.bf16.msra.mxu0 0
        %2113 = vmatprep.mubr.bf16.mxu0 0
        %2114 = vmatmul.mubr.bf16.gmra.mrb[0].mxu0 %v2079
        %v2115 = vpop.f32.mrb[0].mxu0
        %v2116 = vadd.f32 0.0, %v2115
        %v2117 = vpop.f32.mrb[0].mxu0
        %v2118 = vpop.f32.mrb[0].mxu0
        %v2119 = vadd.f32 0.0, %v2118
        %v2120 = vpop.f32.mrb[0].mxu0
        %2121 = vdwg.mxu0
        %2123 = vrot.lane.b32.xlu0 %v1254, 96
        %v2124 = vpop.permute.xlu0 %2123
        %v2127 = vsel %vm1445, %v2024, 0
        %2129 = vmatprep.subr.bf16.mxu0 0
        %2130 = vmatpush1.bf16.msra.mxu0 %v2124
        %2131 = vmatprep.subr.bf16.mxu0 0
        %2132 = vmatpush1.bf16.msra.mxu0 0
        %2133 = vmatprep.subr.bf16.mxu0 0
        %2134 = vmatpush1.bf16.msra.mxu0 0
        %2135 = vmatprep.subr.bf16.mxu0 0
        %2136 = vmatpush1.bf16.msra.mxu0 0
        %2137 = vmatprep.subr.bf16.mxu0 0
        %2138 = vmatpush1.bf16.msra.mxu0 0
        %2139 = vmatprep.subr.bf16.mxu0 0
        %2140 = vmatpush1.bf16.msra.mxu0 0
        %2141 = vmatprep.subr.bf16.mxu0 0
        %2142 = vmatpush1.bf16.msra.mxu0 0
        %2143 = vmatprep.subr.bf16.mxu0 0
        %2144 = vmatpush1.bf16.msra.mxu0 0
        %2145 = vmatprep.subr.bf16.mxu0 0
        %2146 = vmatpush1.bf16.msra.mxu0 0
        %2147 = vmatprep.subr.bf16.mxu0 0
        %2148 = vmatpush1.bf16.msra.mxu0 0
        %2149 = vmatprep.subr.bf16.mxu0 0
        %2150 = vmatpush1.bf16.msra.mxu0 0
        %2151 = vmatprep.subr.bf16.mxu0 0
        %2152 = vmatpush1.bf16.msra.mxu0 0
        %2153 = vmatprep.subr.bf16.mxu0 0
        %2154 = vmatpush1.bf16.msra.mxu0 0
        %2155 = vmatprep.subr.bf16.mxu0 0
        %2156 = vmatpush1.bf16.msra.mxu0 0
        %2157 = vmatprep.subr.bf16.mxu0 0
        %2158 = vmatpush1.bf16.msra.mxu0 0
        %2159 = vmatprep.subr.bf16.mxu0 0
        %2160 = vmatpush1.bf16.msra.mxu0 0
        %2161 = vmatprep.mubr.bf16.mxu0 0
        %2162 = vmatmul.mubr.bf16.gmra.mrb[0].mxu0 %v2127
        %v2163 = vpop.f32.mrb[0].mxu0
        %v2164 = vadd.f32 0.0, %v2163
        %v2165 = vpop.f32.mrb[0].mxu0
        %v2166 = vpop.f32.mrb[0].mxu0
        %v2167 = vadd.f32 0.0, %v2166
        %v2168 = vpop.f32.mrb[0].mxu0
        %2169 = vdwg.mxu0
        %2171 = vrot.lane.b32.xlu0 %v1255, 96
        %v2172 = vpop.permute.xlu0 %2171
        %v2175 = vsel %vm1445, %v2025, 0
        %2177 = vmatprep.subr.bf16.mxu0 0
        %2178 = vmatpush1.bf16.msra.mxu0 %v2172
        %2179 = vmatprep.subr.bf16.mxu0 0
        %2180 = vmatpush1.bf16.msra.mxu0 0
        %2181 = vmatprep.subr.bf16.mxu0 0
        %2182 = vmatpush1.bf16.msra.mxu0 0
        %2183 = vmatprep.subr.bf16.mxu0 0
        %2184 = vmatpush1.bf16.msra.mxu0 0
        %2185 = vmatprep.subr.bf16.mxu0 0
        %2186 = vmatpush1.bf16.msra.mxu0 0
        %2187 = vmatprep.subr.bf16.mxu0 0
        %2188 = vmatpush1.bf16.msra.mxu0 0
        %2189 = vmatprep.subr.bf16.mxu0 0
        %2190 = vmatpush1.bf16.msra.mxu0 0
        %2191 = vmatprep.subr.bf16.mxu0 0
        %2192 = vmatpush1.bf16.msra.mxu0 0
        %2193 = vmatprep.subr.bf16.mxu0 0
        %2194 = vmatpush1.bf16.msra.mxu0 0
        %2195 = vmatprep.subr.bf16.mxu0 0
        %2196 = vmatpush1.bf16.msra.mxu0 0
        %2197 = vmatprep.subr.bf16.mxu0 0
        %2198 = vmatpush1.bf16.msra.mxu0 0
        %2199 = vmatprep.subr.bf16.mxu0 0
        %2200 = vmatpush1.bf16.msra.mxu0 0
        %2201 = vmatprep.subr.bf16.mxu0 0
        %2202 = vmatpush1.bf16.msra.mxu0 0
        %2203 = vmatprep.subr.bf16.mxu0 0
        %2204 = vmatpush1.bf16.msra.mxu0 0
        %2205 = vmatprep.subr.bf16.mxu0 0
        %2206 = vmatpush1.bf16.msra.mxu0 0
        %2207 = vmatprep.subr.bf16.mxu0 0
        %2208 = vmatpush1.bf16.msra.mxu0 0
        %2209 = vmatprep.mubr.bf16.mxu0 0
        %2210 = vmatmul.mubr.bf16.gmra.mrb[0].mxu0 %v2175
        %v2211 = vpop.f32.mrb[0].mxu0
        %v2212 = vadd.f32 0.0, %v2211
        %v2213 = vpop.f32.mrb[0].mxu0
        %v2214 = vpop.f32.mrb[0].mxu0
        %v2215 = vadd.f32 0.0, %v2214
        %v2216 = vpop.f32.mrb[0].mxu0
        %2217 = vdwg.mxu0
        %v2218 = vpack.c.bf16 %v2071, %v2068
        %v2219 = vpack.c.bf16 %v2119, %v2116
        %v2220 = vpack.c.bf16 %v2167, %v2164
        %v2221 = vpack.c.bf16 %v2215, %v2212
        %2226 = vrot.lane.b32.xlu0 %v2218, 32
        %v2227 = vpop.permute.xlu0 %2226
        %2228 = vrot.lane.b32.xlu0 %v2219, 32
        %v2229 = vpop.permute.xlu0 %2228
        %2230 = vrot.lane.b32.xlu0 %v2220, 32
        %v2231 = vpop.permute.xlu0 %2230
        %2232 = vrot.lane.b32.xlu0 %v2221, 32
        %v2233 = vpop.permute.xlu0 %2232
        %vm2238 = vcmask 523520
        %2239 = vst.msk [vmem:[#allocation3] sm:$0xff] %vm2238, %v2227
        %2240 = vst.msk [vmem:[#allocation3 + $0x8] sm:$0xff] %vm2238, %v2229
        %2241 = vst.msk [vmem:[#allocation3 + $0x10] sm:$0xff] %vm2238, %v2231
        %2242 = vst.msk [vmem:[#allocation3 + $0x18] sm:$0xff] %vm2238, %v2233
        %2243 = vrot.lane.b32.xlu0 %v1244, 64
        %v2244 = vpop.permute.xlu0 %2243
        %2245 = vrot.lane.b32.xlu0 %v1248, 64
        %v2246 = vpop.permute.xlu0 %2245
        %v2248 = vsel %vm1256, %v2244, 0
        %v2251 = vsel %vm1256, %v2246, 0
        %2253 = vmatprep.subr.bf16.mxu0 0
        %2254 = vmatpush1.bf16.xpose.msra.mxu0 %v2251
        %2255 = vmatprep.subr.bf16.mxu0 0
        %2256 = vmatpush1.bf16.xpose.msra.mxu0 0
        %2257 = vmatprep.subr.bf16.mxu0 0
        %2258 = vmatpush1.bf16.xpose.msra.mxu0 0
        %2259 = vmatprep.subr.bf16.mxu0 0
        %2260 = vmatpush1.bf16.xpose.msra.mxu0 0
        %2261 = vmatprep.subr.bf16.mxu0 0
        %2262 = vmatpush1.bf16.xpose.msra.mxu0 0
        %2263 = vmatprep.subr.bf16.mxu0 0
        %2264 = vmatpush1.bf16.xpose.msra.mxu0 0
        %2265 = vmatprep.subr.bf16.mxu0 0
        %2266 = vmatpush1.bf16.xpose.msra.mxu0 0
        %2267 = vmatprep.subr.bf16.mxu0 0
        %2268 = vmatpush1.bf16.xpose.msra.mxu0 0
        %2269 = vmatprep.subr.bf16.mxu0 0
        %2270 = vmatpush1.bf16.xpose.msra.mxu0 0
        %2271 = vmatprep.subr.bf16.mxu0 0
        %2272 = vmatpush1.bf16.xpose.msra.mxu0 0
        %2273 = vmatprep.subr.bf16.mxu0 0
        %2274 = vmatpush1.bf16.xpose.msra.mxu0 0
        %2275 = vmatprep.subr.bf16.mxu0 0
        %2276 = vmatpush1.bf16.xpose.msra.mxu0 0
        %2277 = vmatprep.subr.bf16.mxu0 0
        %2278 = vmatpush1.bf16.xpose.msra.mxu0 0
        %2279 = vmatprep.subr.bf16.mxu0 0
        %2280 = vmatpush1.bf16.xpose.msra.mxu0 0
        %2281 = vmatprep.subr.bf16.mxu0 0
        %2282 = vmatpush1.bf16.xpose.msra.mxu0 0
        %2283 = vmatprep.subr.bf16.mxu0 0
        %2284 = vmatpush1.bf16.xpose.msra.mxu0 0
        %2285 = vmatprep.mubr.bf16.mxu0 0
        %2286 = vmatmul.mubr.bf16.gmra.mrb[0].mxu0 %v2248
        %v2287 = vpop.f32.mrb[0].mxu0
        %v2288 = vadd.f32 0.0, %v2287
        %v2289 = vpop.f32.mrb[0].mxu0
        %v2290 = vpop.f32.mrb[0].mxu0
        %v2291 = vadd.f32 0.0, %v2290
        %v2292 = vpop.f32.mrb[0].mxu0
        %2293 = vdwg.mxu0
        %2294 = vrot.lane.b32.xlu0 %v1245, 64
        %v2295 = vpop.permute.xlu0 %2294
        %2296 = vrot.lane.b32.xlu0 %v1249, 64
        %v2297 = vpop.permute.xlu0 %2296
        %v2299 = vsel %vm1256, %v2295, 0
        %v2302 = vsel %vm1256, %v2297, 0
        %2304 = vmatprep.subr.bf16.mxu0 0
        %2305 = vmatpush1.bf16.xpose.msra.mxu0 %v2302
        %2306 = vmatprep.subr.bf16.mxu0 0
        %2307 = vmatpush1.bf16.xpose.msra.mxu0 0
        %2308 = vmatprep.subr.bf16.mxu0 0
        %2309 = vmatpush1.bf16.xpose.msra.mxu0 0
        %2310 = vmatprep.subr.bf16.mxu0 0
        %2311 = vmatpush1.bf16.xpose.msra.mxu0 0
        %2312 = vmatprep.subr.bf16.mxu0 0
        %2313 = vmatpush1.bf16.xpose.msra.mxu0 0
        %2314 = vmatprep.subr.bf16.mxu0 0
        %2315 = vmatpush1.bf16.xpose.msra.mxu0 0
        %2316 = vmatprep.subr.bf16.mxu0 0
        %2317 = vmatpush1.bf16.xpose.msra.mxu0 0
        %2318 = vmatprep.subr.bf16.mxu0 0
        %2319 = vmatpush1.bf16.xpose.msra.mxu0 0
        %2320 = vmatprep.subr.bf16.mxu0 0
        %2321 = vmatpush1.bf16.xpose.msra.mxu0 0
        %2322 = vmatprep.subr.bf16.mxu0 0
        %2323 = vmatpush1.bf16.xpose.msra.mxu0 0
        %2324 = vmatprep.subr.bf16.mxu0 0
        %2325 = vmatpush1.bf16.xpose.msra.mxu0 0
        %2326 = vmatprep.subr.bf16.mxu0 0
        %2327 = vmatpush1.bf16.xpose.msra.mxu0 0
        %2328 = vmatprep.subr.bf16.mxu0 0
        %2329 = vmatpush1.bf16.xpose.msra.mxu0 0
        %2330 = vmatprep.subr.bf16.mxu0 0
        %2331 = vmatpush1.bf16.xpose.msra.mxu0 0
        %2332 = vmatprep.subr.bf16.mxu0 0
        %2333 = vmatpush1.bf16.xpose.msra.mxu0 0
        %2334 = vmatprep.subr.bf16.mxu0 0
        %2335 = vmatpush1.bf16.xpose.msra.mxu0 0
        %2336 = vmatprep.mubr.bf16.mxu0 0
        %2337 = vmatmul.mubr.bf16.gmra.mrb[0].mxu0 %v2299
        %v2338 = vpop.f32.mrb[0].mxu0
        %v2339 = vadd.f32 0.0, %v2338
        %v2340 = vpop.f32.mrb[0].mxu0
        %v2341 = vpop.f32.mrb[0].mxu0
        %v2342 = vadd.f32 0.0, %v2341
        %v2343 = vpop.f32.mrb[0].mxu0
        %2344 = vdwg.mxu0
        %2345 = vrot.lane.b32.xlu0 %v1246, 64
        %v2346 = vpop.permute.xlu0 %2345
        %2347 = vrot.lane.b32.xlu0 %v1250, 64
        %v2348 = vpop.permute.xlu0 %2347
        %v2350 = vsel %vm1256, %v2346, 0
        %v2353 = vsel %vm1256, %v2348, 0
        %2355 = vmatprep.subr.bf16.mxu0 0
        %2356 = vmatpush1.bf16.xpose.msra.mxu0 %v2353
        %2357 = vmatprep.subr.bf16.mxu0 0
        %2358 = vmatpush1.bf16.xpose.msra.mxu0 0
        %2359 = vmatprep.subr.bf16.mxu0 0
        %2360 = vmatpush1.bf16.xpose.msra.mxu0 0
        %2361 = vmatprep.subr.bf16.mxu0 0
        %2362 = vmatpush1.bf16.xpose.msra.mxu0 0
        %2363 = vmatprep.subr.bf16.mxu0 0
        %2364 = vmatpush1.bf16.xpose.msra.mxu0 0
        %2365 = vmatprep.subr.bf16.mxu0 0
        %2366 = vmatpush1.bf16.xpose.msra.mxu0 0
        %2367 = vmatprep.subr.bf16.mxu0 0
        %2368 = vmatpush1.bf16.xpose.msra.mxu0 0
        %2369 = vmatprep.subr.bf16.mxu0 0
        %2370 = vmatpush1.bf16.xpose.msra.mxu0 0
        %2371 = vmatprep.subr.bf16.mxu0 0
        %2372 = vmatpush1.bf16.xpose.msra.mxu0 0
        %2373 = vmatprep.subr.bf16.mxu0 0
        %2374 = vmatpush1.bf16.xpose.msra.mxu0 0
        %2375 = vmatprep.subr.bf16.mxu0 0
        %2376 = vmatpush1.bf16.xpose.msra.mxu0 0
        %2377 = vmatprep.subr.bf16.mxu0 0
        %2378 = vmatpush1.bf16.xpose.msra.mxu0 0
        %2379 = vmatprep.subr.bf16.mxu0 0
        %2380 = vmatpush1.bf16.xpose.msra.mxu0 0
        %2381 = vmatprep.subr.bf16.mxu0 0
        %2382 = vmatpush1.bf16.xpose.msra.mxu0 0
        %2383 = vmatprep.subr.bf16.mxu0 0
        %2384 = vmatpush1.bf16.xpose.msra.mxu0 0
        %2385 = vmatprep.subr.bf16.mxu0 0
        %2386 = vmatpush1.bf16.xpose.msra.mxu0 0
        %2387 = vmatprep.mubr.bf16.mxu0 0
        %2388 = vmatmul.mubr.bf16.gmra.mrb[0].mxu0 %v2350
        %v2389 = vpop.f32.mrb[0].mxu0
        %v2390 = vadd.f32 0.0, %v2389
        %v2391 = vpop.f32.mrb[0].mxu0
        %v2392 = vpop.f32.mrb[0].mxu0
        %v2393 = vadd.f32 0.0, %v2392
        %v2394 = vpop.f32.mrb[0].mxu0
        %2395 = vdwg.mxu0
        %2396 = vrot.lane.b32.xlu0 %v1247, 64
        %v2397 = vpop.permute.xlu0 %2396
        %2398 = vrot.lane.b32.xlu0 %v1251, 64
        %v2399 = vpop.permute.xlu0 %2398
        %v2401 = vsel %vm1256, %v2397, 0
        %v2404 = vsel %vm1256, %v2399, 0
        %2406 = vmatprep.subr.bf16.mxu0 0
        %2407 = vmatpush1.bf16.xpose.msra.mxu0 %v2404
        %2408 = vmatprep.subr.bf16.mxu0 0
        %2409 = vmatpush1.bf16.xpose.msra.mxu0 0
        %2410 = vmatprep.subr.bf16.mxu0 0
        %2411 = vmatpush1.bf16.xpose.msra.mxu0 0
        %2412 = vmatprep.subr.bf16.mxu0 0
        %2413 = vmatpush1.bf16.xpose.msra.mxu0 0
        %2414 = vmatprep.subr.bf16.mxu0 0
        %2415 = vmatpush1.bf16.xpose.msra.mxu0 0
        %2416 = vmatprep.subr.bf16.mxu0 0
        %2417 = vmatpush1.bf16.xpose.msra.mxu0 0
        %2418 = vmatprep.subr.bf16.mxu0 0
        %2419 = vmatpush1.bf16.xpose.msra.mxu0 0
        %2420 = vmatprep.subr.bf16.mxu0 0
        %2421 = vmatpush1.bf16.xpose.msra.mxu0 0
        %2422 = vmatprep.subr.bf16.mxu0 0
        %2423 = vmatpush1.bf16.xpose.msra.mxu0 0
        %2424 = vmatprep.subr.bf16.mxu0 0
        %2425 = vmatpush1.bf16.xpose.msra.mxu0 0
        %2426 = vmatprep.subr.bf16.mxu0 0
        %2427 = vmatpush1.bf16.xpose.msra.mxu0 0
        %2428 = vmatprep.subr.bf16.mxu0 0
        %2429 = vmatpush1.bf16.xpose.msra.mxu0 0
        %2430 = vmatprep.subr.bf16.mxu0 0
        %2431 = vmatpush1.bf16.xpose.msra.mxu0 0
        %2432 = vmatprep.subr.bf16.mxu0 0
        %2433 = vmatpush1.bf16.xpose.msra.mxu0 0
        %2434 = vmatprep.subr.bf16.mxu0 0
        %2435 = vmatpush1.bf16.xpose.msra.mxu0 0
        %2436 = vmatprep.subr.bf16.mxu0 0
        %2437 = vmatpush1.bf16.xpose.msra.mxu0 0
        %2438 = vmatprep.mubr.bf16.mxu0 0
        %2439 = vmatmul.mubr.bf16.gmra.mrb[0].mxu0 %v2401
        %v2440 = vpop.f32.mrb[0].mxu0
        %v2441 = vadd.f32 0.0, %v2440
        %v2442 = vpop.f32.mrb[0].mxu0
        %v2443 = vpop.f32.mrb[0].mxu0
        %v2444 = vadd.f32 0.0, %v2443
        %v2445 = vpop.f32.mrb[0].mxu0
        %2446 = vdwg.mxu0
        %v2447 = vsel %vm1445, %v2288, -inf
        %2448 = vmax.xlane.f32.xlu0 %v2447
        %v2449 = vpop.xlane.xlu0 %2448
        %v2450 = vsel %vm1445, %v2291, -inf
        %2451 = vmax.xlane.f32.xlu0 %v2450
        %v2452 = vpop.xlane.xlu0 %2451
        %v2453 = vsel %vm1445, %v2339, -inf
        %2454 = vmax.xlane.f32.xlu0 %v2453
        %v2455 = vpop.xlane.xlu0 %2454
        %v2456 = vsel %vm1445, %v2342, -inf
        %2457 = vmax.xlane.f32.xlu0 %v2456
        %v2458 = vpop.xlane.xlu0 %2457
        %v2459 = vsel %vm1445, %v2390, -inf
        %2460 = vmax.xlane.f32.xlu0 %v2459
        %v2461 = vpop.xlane.xlu0 %2460
        %v2462 = vsel %vm1445, %v2393, -inf
        %2463 = vmax.xlane.f32.xlu0 %v2462
        %v2464 = vpop.xlane.xlu0 %2463
        %v2465 = vsel %vm1445, %v2441, -inf
        %2466 = vmax.xlane.f32.xlu0 %v2465
        %v2467 = vpop.xlane.xlu0 %2466
        %v2468 = vsel %vm1445, %v2444, -inf
        %2469 = vmax.xlane.f32.xlu0 %v2468
        %v2470 = vpop.xlane.xlu0 %2469
        %v2471 = vsub.f32 %v2288, %v2449
        %v2472 = vsub.f32 %v2291, %v2452
        %v2473 = vsub.f32 %v2339, %v2455
        %v2474 = vsub.f32 %v2342, %v2458
        %v2475 = vsub.f32 %v2390, %v2461
        %v2476 = vsub.f32 %v2393, %v2464
        %v2477 = vsub.f32 %v2441, %v2467
        %v2478 = vsub.f32 %v2444, %v2470
        %v2479 = vmul.f32 %v2471, 1.442695
        %v2480 = vpow.pop %v2479
        %v2481 = vmul.f32 %v2472, 1.442695
        %v2482 = vpow.pop %v2481
        %v2483 = vmul.f32 %v2473, 1.442695
        %v2484 = vpow.pop %v2483
        %v2485 = vmul.f32 %v2474, 1.442695
        %v2486 = vpow.pop %v2485
        %v2487 = vmul.f32 %v2475, 1.442695
        %v2488 = vpow.pop %v2487
        %v2489 = vmul.f32 %v2476, 1.442695
        %v2490 = vpow.pop %v2489
        %v2491 = vmul.f32 %v2477, 1.442695
        %v2492 = vpow.pop %v2491
        %v2493 = vmul.f32 %v2478, 1.442695
        %v2494 = vpow.pop %v2493
        %v2495 = vsel %vm1445, %v2480, 0.0
        %2496 = vadd.xlane.f32.xlu0 %v2495
        %v2497 = vpop.xlane.xlu0 %2496
        %v2498 = vsel %vm1445, %v2482, 0.0
        %2499 = vadd.xlane.f32.xlu0 %v2498
        %v2500 = vpop.xlane.xlu0 %2499
        %v2501 = vsel %vm1445, %v2484, 0.0
        %2502 = vadd.xlane.f32.xlu0 %v2501
        %v2503 = vpop.xlane.xlu0 %2502
        %v2504 = vsel %vm1445, %v2486, 0.0
        %2505 = vadd.xlane.f32.xlu0 %v2504
        %v2506 = vpop.xlane.xlu0 %2505
        %v2507 = vsel %vm1445, %v2488, 0.0
        %2508 = vadd.xlane.f32.xlu0 %v2507
        %v2509 = vpop.xlane.xlu0 %2508
        %v2510 = vsel %vm1445, %v2490, 0.0
        %2511 = vadd.xlane.f32.xlu0 %v2510
        %v2512 = vpop.xlane.xlu0 %2511
        %v2513 = vsel %vm1445, %v2492, 0.0
        %2514 = vadd.xlane.f32.xlu0 %v2513
        %v2515 = vpop.xlane.xlu0 %2514
        %v2516 = vsel %vm1445, %v2494, 0.0
        %2517 = vadd.xlane.f32.xlu0 %v2516
        %v2518 = vpop.xlane.xlu0 %2517
        %v2519 = vrcp.pop %v2497
        %v2520 = vrcp.pop %v2500
        %v2521 = vrcp.pop %v2503
        %v2522 = vrcp.pop %v2506
        %v2523 = vrcp.pop %v2509
        %v2524 = vrcp.pop %v2512
        %v2525 = vrcp.pop %v2515
        %v2526 = vrcp.pop %v2518
        %v2527 = vmul.f32 %v2480, %v2519
        %v2528 = vmul.f32 %v2482, %v2520
        %v2529 = vmul.f32 %v2484, %v2521
        %v2530 = vmul.f32 %v2486, %v2522
        %v2531 = vmul.f32 %v2488, %v2523
        %v2532 = vmul.f32 %v2490, %v2524
        %v2533 = vmul.f32 %v2492, %v2525
        %v2534 = vmul.f32 %v2494, %v2526
        %v2535 = vpack.c.bf16 %v2528, %v2527
        %v2536 = vpack.c.bf16 %v2530, %v2529
        %v2537 = vpack.c.bf16 %v2532, %v2531
        %v2538 = vpack.c.bf16 %v2534, %v2533
        %2539 = vrot.lane.b32.xlu0 %v1252, 64
        %v2540 = vpop.permute.xlu0 %2539
        %v2543 = vsel %vm1445, %v2535, 0
        %2545 = vmatprep.subr.bf16.mxu0 0
        %2546 = vmatpush1.bf16.msra.mxu0 %v2540
        %2547 = vmatprep.subr.bf16.mxu0 0
        %2548 = vmatpush1.bf16.msra.mxu0 0
        %2549 = vmatprep.subr.bf16.mxu0 0
        %2550 = vmatpush1.bf16.msra.mxu0 0
        %2551 = vmatprep.subr.bf16.mxu0 0
        %2552 = vmatpush1.bf16.msra.mxu0 0
        %2553 = vmatprep.subr.bf16.mxu0 0
        %2554 = vmatpush1.bf16.msra.mxu0 0
        %2555 = vmatprep.subr.bf16.mxu0 0
        %2556 = vmatpush1.bf16.msra.mxu0 0
        %2557 = vmatprep.subr.bf16.mxu0 0
        %2558 = vmatpush1.bf16.msra.mxu0 0
        %2559 = vmatprep.subr.bf16.mxu0 0
        %2560 = vmatpush1.bf16.msra.mxu0 0
        %2561 = vmatprep.subr.bf16.mxu0 0
        %2562 = vmatpush1.bf16.msra.mxu0 0
        %2563 = vmatprep.subr.bf16.mxu0 0
        %2564 = vmatpush1.bf16.msra.mxu0 0
        %2565 = vmatprep.subr.bf16.mxu0 0
        %2566 = vmatpush1.bf16.msra.mxu0 0
        %2567 = vmatprep.subr.bf16.mxu0 0
        %2568 = vmatpush1.bf16.msra.mxu0 0
        %2569 = vmatprep.subr.bf16.mxu0 0
        %2570 = vmatpush1.bf16.msra.mxu0 0
        %2571 = vmatprep.subr.bf16.mxu0 0
        %2572 = vmatpush1.bf16.msra.mxu0 0
        %2573 = vmatprep.subr.bf16.mxu0 0
        %2574 = vmatpush1.bf16.msra.mxu0 0
        %2575 = vmatprep.subr.bf16.mxu0 0
        %2576 = vmatpush1.bf16.msra.mxu0 0
        %2577 = vmatprep.mubr.bf16.mxu0 0
        %2578 = vmatmul.mubr.bf16.gmra.mrb[0].mxu0 %v2543
        %v2579 = vpop.f32.mrb[0].mxu0
        %v2580 = vadd.f32 0.0, %v2579
        %v2581 = vpop.f32.mrb[0].mxu0
        %v2582 = vpop.f32.mrb[0].mxu0
        %v2583 = vadd.f32 0.0, %v2582
        %v2584 = vpop.f32.mrb[0].mxu0
        %2585 = vdwg.mxu0
        %2586 = vrot.lane.b32.xlu0 %v1253, 64
        %v2587 = vpop.permute.xlu0 %2586
        %v2590 = vsel %vm1445, %v2536, 0
        %2592 = vmatprep.subr.bf16.mxu0 0
        %2593 = vmatpush1.bf16.msra.mxu0 %v2587
        %2594 = vmatprep.subr.bf16.mxu0 0
        %2595 = vmatpush1.bf16.msra.mxu0 0
        %2596 = vmatprep.subr.bf16.mxu0 0
        %2597 = vmatpush1.bf16.msra.mxu0 0
        %2598 = vmatprep.subr.bf16.mxu0 0
        %2599 = vmatpush1.bf16.msra.mxu0 0
        %2600 = vmatprep.subr.bf16.mxu0 0
        %2601 = vmatpush1.bf16.msra.mxu0 0
        %2602 = vmatprep.subr.bf16.mxu0 0
        %2603 = vmatpush1.bf16.msra.mxu0 0
        %2604 = vmatprep.subr.bf16.mxu0 0
        %2605 = vmatpush1.bf16.msra.mxu0 0
        %2606 = vmatprep.subr.bf16.mxu0 0
        %2607 = vmatpush1.bf16.msra.mxu0 0
        %2608 = vmatprep.subr.bf16.mxu0 0
        %2609 = vmatpush1.bf16.msra.mxu0 0
        %2610 = vmatprep.subr.bf16.mxu0 0
        %2611 = vmatpush1.bf16.msra.mxu0 0
        %2612 = vmatprep.subr.bf16.mxu0 0
        %2613 = vmatpush1.bf16.msra.mxu0 0
        %2614 = vmatprep.subr.bf16.mxu0 0
        %2615 = vmatpush1.bf16.msra.mxu0 0
        %2616 = vmatprep.subr.bf16.mxu0 0
        %2617 = vmatpush1.bf16.msra.mxu0 0
        %2618 = vmatprep.subr.bf16.mxu0 0
        %2619 = vmatpush1.bf16.msra.mxu0 0
        %2620 = vmatprep.subr.bf16.mxu0 0
        %2621 = vmatpush1.bf16.msra.mxu0 0
        %2622 = vmatprep.subr.bf16.mxu0 0
        %2623 = vmatpush1.bf16.msra.mxu0 0
        %2624 = vmatprep.mubr.bf16.mxu0 0
        %2625 = vmatmul.mubr.bf16.gmra.mrb[0].mxu0 %v2590
        %v2626 = vpop.f32.mrb[0].mxu0
        %v2627 = vadd.f32 0.0, %v2626
        %v2628 = vpop.f32.mrb[0].mxu0
        %v2629 = vpop.f32.mrb[0].mxu0
        %v2630 = vadd.f32 0.0, %v2629
        %v2631 = vpop.f32.mrb[0].mxu0
        %2632 = vdwg.mxu0
        %2633 = vrot.lane.b32.xlu0 %v1254, 64
        %v2634 = vpop.permute.xlu0 %2633
        %v2637 = vsel %vm1445, %v2537, 0
        %2639 = vmatprep.subr.bf16.mxu0 0
        %2640 = vmatpush1.bf16.msra.mxu0 %v2634
        %2641 = vmatprep.subr.bf16.mxu0 0
        %2642 = vmatpush1.bf16.msra.mxu0 0
        %2643 = vmatprep.subr.bf16.mxu0 0
        %2644 = vmatpush1.bf16.msra.mxu0 0
        %2645 = vmatprep.subr.bf16.mxu0 0
        %2646 = vmatpush1.bf16.msra.mxu0 0
        %2647 = vmatprep.subr.bf16.mxu0 0
        %2648 = vmatpush1.bf16.msra.mxu0 0
        %2649 = vmatprep.subr.bf16.mxu0 0
        %2650 = vmatpush1.bf16.msra.mxu0 0
        %2651 = vmatprep.subr.bf16.mxu0 0
        %2652 = vmatpush1.bf16.msra.mxu0 0
        %2653 = vmatprep.subr.bf16.mxu0 0
        %2654 = vmatpush1.bf16.msra.mxu0 0
        %2655 = vmatprep.subr.bf16.mxu0 0
        %2656 = vmatpush1.bf16.msra.mxu0 0
        %2657 = vmatprep.subr.bf16.mxu0 0
        %2658 = vmatpush1.bf16.msra.mxu0 0
        %2659 = vmatprep.subr.bf16.mxu0 0
        %2660 = vmatpush1.bf16.msra.mxu0 0
        %2661 = vmatprep.subr.bf16.mxu0 0
        %2662 = vmatpush1.bf16.msra.mxu0 0
        %2663 = vmatprep.subr.bf16.mxu0 0
        %2664 = vmatpush1.bf16.msra.mxu0 0
        %2665 = vmatprep.subr.bf16.mxu0 0
        %2666 = vmatpush1.bf16.msra.mxu0 0
        %2667 = vmatprep.subr.bf16.mxu0 0
        %2668 = vmatpush1.bf16.msra.mxu0 0
        %2669 = vmatprep.subr.bf16.mxu0 0
        %2670 = vmatpush1.bf16.msra.mxu0 0
        %2671 = vmatprep.mubr.bf16.mxu0 0
        %2672 = vmatmul.mubr.bf16.gmra.mrb[0].mxu0 %v2637
        %v2673 = vpop.f32.mrb[0].mxu0
        %v2674 = vadd.f32 0.0, %v2673
        %v2675 = vpop.f32.mrb[0].mxu0
        %v2676 = vpop.f32.mrb[0].mxu0
        %v2677 = vadd.f32 0.0, %v2676
        %v2678 = vpop.f32.mrb[0].mxu0
        %2679 = vdwg.mxu0
        %2680 = vrot.lane.b32.xlu0 %v1255, 64
        %v2681 = vpop.permute.xlu0 %2680
        %v2684 = vsel %vm1445, %v2538, 0
        %2686 = vmatprep.subr.bf16.mxu0 0
        %2687 = vmatpush1.bf16.msra.mxu0 %v2681
        %2688 = vmatprep.subr.bf16.mxu0 0
        %2689 = vmatpush1.bf16.msra.mxu0 0
        %2690 = vmatprep.subr.bf16.mxu0 0
        %2691 = vmatpush1.bf16.msra.mxu0 0
        %2692 = vmatprep.subr.bf16.mxu0 0
        %2693 = vmatpush1.bf16.msra.mxu0 0
        %2694 = vmatprep.subr.bf16.mxu0 0
        %2695 = vmatpush1.bf16.msra.mxu0 0
        %2696 = vmatprep.subr.bf16.mxu0 0
        %2697 = vmatpush1.bf16.msra.mxu0 0
        %2698 = vmatprep.subr.bf16.mxu0 0
        %2699 = vmatpush1.bf16.msra.mxu0 0
        %2700 = vmatprep.subr.bf16.mxu0 0
        %2701 = vmatpush1.bf16.msra.mxu0 0
        %2702 = vmatprep.subr.bf16.mxu0 0
        %2703 = vmatpush1.bf16.msra.mxu0 0
        %2704 = vmatprep.subr.bf16.mxu0 0
        %2705 = vmatpush1.bf16.msra.mxu0 0
        %2706 = vmatprep.subr.bf16.mxu0 0
        %2707 = vmatpush1.bf16.msra.mxu0 0
        %2708 = vmatprep.subr.bf16.mxu0 0
        %2709 = vmatpush1.bf16.msra.mxu0 0
        %2710 = vmatprep.subr.bf16.mxu0 0
        %2711 = vmatpush1.bf16.msra.mxu0 0
        %2712 = vmatprep.subr.bf16.mxu0 0
        %2713 = vmatpush1.bf16.msra.mxu0 0
        %2714 = vmatprep.subr.bf16.mxu0 0
        %2715 = vmatpush1.bf16.msra.mxu0 0
        %2716 = vmatprep.subr.bf16.mxu0 0
        %2717 = vmatpush1.bf16.msra.mxu0 0
        %2718 = vmatprep.mubr.bf16.mxu0 0
        %2719 = vmatmul.mubr.bf16.gmra.mrb[0].mxu0 %v2684
        %v2720 = vpop.f32.mrb[0].mxu0
        %v2721 = vadd.f32 0.0, %v2720
        %v2722 = vpop.f32.mrb[0].mxu0
        %v2723 = vpop.f32.mrb[0].mxu0
        %v2724 = vadd.f32 0.0, %v2723
        %v2725 = vpop.f32.mrb[0].mxu0
        %2726 = vdwg.mxu0
        %v2727 = vpack.c.bf16 %v2583, %v2580
        %v2728 = vpack.c.bf16 %v2630, %v2627
        %v2729 = vpack.c.bf16 %v2677, %v2674
        %v2730 = vpack.c.bf16 %v2724, %v2721
        %2735 = vrot.lane.b32.xlu0 %v2727, 64
        %v2736 = vpop.permute.xlu0 %2735
        %2737 = vrot.lane.b32.xlu0 %v2728, 64
        %v2738 = vpop.permute.xlu0 %2737
        %2739 = vrot.lane.b32.xlu0 %v2729, 64
        %v2740 = vpop.permute.xlu0 %2739
        %2741 = vrot.lane.b32.xlu0 %v2730, 64
        %v2742 = vpop.permute.xlu0 %2741
        %vm2747 = vcmask 785920
        %2748 = vst.msk [vmem:[#allocation3] sm:$0xff] %vm2747, %v2736
        %2749 = vst.msk [vmem:[#allocation3 + $0x8] sm:$0xff] %vm2747, %v2738
        %2750 = vst.msk [vmem:[#allocation3 + $0x10] sm:$0xff] %vm2747, %v2740
        %2751 = vst.msk [vmem:[#allocation3 + $0x18] sm:$0xff] %vm2747, %v2742
        %2752 = vrot.lane.b32.xlu0 %v1244, 32
        %v2753 = vpop.permute.xlu0 %2752
        %2754 = vrot.lane.b32.xlu0 %v1248, 32
        %v2755 = vpop.permute.xlu0 %2754
        %v2757 = vsel %vm1256, %v2753, 0
        %v2760 = vsel %vm1256, %v2755, 0
        %2762 = vmatprep.subr.bf16.mxu0 0
        %2763 = vmatpush1.bf16.xpose.msra.mxu0 %v2760
        %2764 = vmatprep.subr.bf16.mxu0 0
        %2765 = vmatpush1.bf16.xpose.msra.mxu0 0
        %2766 = vmatprep.subr.bf16.mxu0 0
        %2767 = vmatpush1.bf16.xpose.msra.mxu0 0
        %2768 = vmatprep.subr.bf16.mxu0 0
        %2769 = vmatpush1.bf16.xpose.msra.mxu0 0
        %2770 = vmatprep.subr.bf16.mxu0 0
        %2771 = vmatpush1.bf16.xpose.msra.mxu0 0
        %2772 = vmatprep.subr.bf16.mxu0 0
        %2773 = vmatpush1.bf16.xpose.msra.mxu0 0
        %2774 = vmatprep.subr.bf16.mxu0 0
        %2775 = vmatpush1.bf16.xpose.msra.mxu0 0
        %2776 = vmatprep.subr.bf16.mxu0 0
        %2777 = vmatpush1.bf16.xpose.msra.mxu0 0
        %2778 = vmatprep.subr.bf16.mxu0 0
        %2779 = vmatpush1.bf16.xpose.msra.mxu0 0
        %2780 = vmatprep.subr.bf16.mxu0 0
        %2781 = vmatpush1.bf16.xpose.msra.mxu0 0
        %2782 = vmatprep.subr.bf16.mxu0 0
        %2783 = vmatpush1.bf16.xpose.msra.mxu0 0
        %2784 = vmatprep.subr.bf16.mxu0 0
        %2785 = vmatpush1.bf16.xpose.msra.mxu0 0
        %2786 = vmatprep.subr.bf16.mxu0 0
        %2787 = vmatpush1.bf16.xpose.msra.mxu0 0
        %2788 = vmatprep.subr.bf16.mxu0 0
        %2789 = vmatpush1.bf16.xpose.msra.mxu0 0
        %2790 = vmatprep.subr.bf16.mxu0 0
        %2791 = vmatpush1.bf16.xpose.msra.mxu0 0
        %2792 = vmatprep.subr.bf16.mxu0 0
        %2793 = vmatpush1.bf16.xpose.msra.mxu0 0
        %2794 = vmatprep.mubr.bf16.mxu0 0
        %2795 = vmatmul.mubr.bf16.gmra.mrb[0].mxu0 %v2757
        %v2796 = vpop.f32.mrb[0].mxu0
        %v2797 = vadd.f32 0.0, %v2796
        %v2798 = vpop.f32.mrb[0].mxu0
        %v2799 = vpop.f32.mrb[0].mxu0
        %v2800 = vadd.f32 0.0, %v2799
        %v2801 = vpop.f32.mrb[0].mxu0
        %2802 = vdwg.mxu0
        %2803 = vrot.lane.b32.xlu0 %v1245, 32
        %v2804 = vpop.permute.xlu0 %2803
        %2805 = vrot.lane.b32.xlu0 %v1249, 32
        %v2806 = vpop.permute.xlu0 %2805
        %v2808 = vsel %vm1256, %v2804, 0
        %v2811 = vsel %vm1256, %v2806, 0
        %2813 = vmatprep.subr.bf16.mxu0 0
        %2814 = vmatpush1.bf16.xpose.msra.mxu0 %v2811
        %2815 = vmatprep.subr.bf16.mxu0 0
        %2816 = vmatpush1.bf16.xpose.msra.mxu0 0
        %2817 = vmatprep.subr.bf16.mxu0 0
        %2818 = vmatpush1.bf16.xpose.msra.mxu0 0
        %2819 = vmatprep.subr.bf16.mxu0 0
        %2820 = vmatpush1.bf16.xpose.msra.mxu0 0
        %2821 = vmatprep.subr.bf16.mxu0 0
        %2822 = vmatpush1.bf16.xpose.msra.mxu0 0
        %2823 = vmatprep.subr.bf16.mxu0 0
        %2824 = vmatpush1.bf16.xpose.msra.mxu0 0
        %2825 = vmatprep.subr.bf16.mxu0 0
        %2826 = vmatpush1.bf16.xpose.msra.mxu0 0
        %2827 = vmatprep.subr.bf16.mxu0 0
        %2828 = vmatpush1.bf16.xpose.msra.mxu0 0
        %2829 = vmatprep.subr.bf16.mxu0 0
        %2830 = vmatpush1.bf16.xpose.msra.mxu0 0
        %2831 = vmatprep.subr.bf16.mxu0 0
        %2832 = vmatpush1.bf16.xpose.msra.mxu0 0
        %2833 = vmatprep.subr.bf16.mxu0 0
        %2834 = vmatpush1.bf16.xpose.msra.mxu0 0
        %2835 = vmatprep.subr.bf16.mxu0 0
        %2836 = vmatpush1.bf16.xpose.msra.mxu0 0
        %2837 = vmatprep.subr.bf16.mxu0 0
        %2838 = vmatpush1.bf16.xpose.msra.mxu0 0
        %2839 = vmatprep.subr.bf16.mxu0 0
        %2840 = vmatpush1.bf16.xpose.msra.mxu0 0
        %2841 = vmatprep.subr.bf16.mxu0 0
        %2842 = vmatpush1.bf16.xpose.msra.mxu0 0
        %2843 = vmatprep.subr.bf16.mxu0 0
        %2844 = vmatpush1.bf16.xpose.msra.mxu0 0
        %2845 = vmatprep.mubr.bf16.mxu0 0
        %2846 = vmatmul.mubr.bf16.gmra.mrb[0].mxu0 %v2808
        %v2847 = vpop.f32.mrb[0].mxu0
        %v2848 = vadd.f32 0.0, %v2847
        %v2849 = vpop.f32.mrb[0].mxu0
        %v2850 = vpop.f32.mrb[0].mxu0
        %v2851 = vadd.f32 0.0, %v2850
        %v2852 = vpop.f32.mrb[0].mxu0
        %2853 = vdwg.mxu0
        %2854 = vrot.lane.b32.xlu0 %v1246, 32
        %v2855 = vpop.permute.xlu0 %2854
        %2856 = vrot.lane.b32.xlu0 %v1250, 32
        %v2857 = vpop.permute.xlu0 %2856
        %v2859 = vsel %vm1256, %v2855, 0
        %v2862 = vsel %vm1256, %v2857, 0
        %2864 = vmatprep.subr.bf16.mxu0 0
        %2865 = vmatpush1.bf16.xpose.msra.mxu0 %v2862
        %2866 = vmatprep.subr.bf16.mxu0 0
        %2867 = vmatpush1.bf16.xpose.msra.mxu0 0
        %2868 = vmatprep.subr.bf16.mxu0 0
        %2869 = vmatpush1.bf16.xpose.msra.mxu0 0
        %2870 = vmatprep.subr.bf16.mxu0 0
        %2871 = vmatpush1.bf16.xpose.msra.mxu0 0
        %2872 = vmatprep.subr.bf16.mxu0 0
        %2873 = vmatpush1.bf16.xpose.msra.mxu0 0
        %2874 = vmatprep.subr.bf16.mxu0 0
        %2875 = vmatpush1.bf16.xpose.msra.mxu0 0
        %2876 = vmatprep.subr.bf16.mxu0 0
        %2877 = vmatpush1.bf16.xpose.msra.mxu0 0
        %2878 = vmatprep.subr.bf16.mxu0 0
        %2879 = vmatpush1.bf16.xpose.msra.mxu0 0
        %2880 = vmatprep.subr.bf16.mxu0 0
        %2881 = vmatpush1.bf16.xpose.msra.mxu0 0
        %2882 = vmatprep.subr.bf16.mxu0 0
        %2883 = vmatpush1.bf16.xpose.msra.mxu0 0
        %2884 = vmatprep.subr.bf16.mxu0 0
        %2885 = vmatpush1.bf16.xpose.msra.mxu0 0
        %2886 = vmatprep.subr.bf16.mxu0 0
        %2887 = vmatpush1.bf16.xpose.msra.mxu0 0
        %2888 = vmatprep.subr.bf16.mxu0 0
        %2889 = vmatpush1.bf16.xpose.msra.mxu0 0
        %2890 = vmatprep.subr.bf16.mxu0 0
        %2891 = vmatpush1.bf16.xpose.msra.mxu0 0
        %2892 = vmatprep.subr.bf16.mxu0 0
        %2893 = vmatpush1.bf16.xpose.msra.mxu0 0
        %2894 = vmatprep.subr.bf16.mxu0 0
        %2895 = vmatpush1.bf16.xpose.msra.mxu0 0
        %2896 = vmatprep.mubr.bf16.mxu0 0
        %2897 = vmatmul.mubr.bf16.gmra.mrb[0].mxu0 %v2859
        %v2898 = vpop.f32.mrb[0].mxu0
        %v2899 = vadd.f32 0.0, %v2898
        %v2900 = vpop.f32.mrb[0].mxu0
        %v2901 = vpop.f32.mrb[0].mxu0
        %v2902 = vadd.f32 0.0, %v2901
        %v2903 = vpop.f32.mrb[0].mxu0
        %2904 = vdwg.mxu0
        %2905 = vrot.lane.b32.xlu0 %v1247, 32
        %v2906 = vpop.permute.xlu0 %2905
        %2907 = vrot.lane.b32.xlu0 %v1251, 32
        %v2908 = vpop.permute.xlu0 %2907
        %v2910 = vsel %vm1256, %v2906, 0
        %v2913 = vsel %vm1256, %v2908, 0
        %2915 = vmatprep.subr.bf16.mxu0 0
        %2916 = vmatpush1.bf16.xpose.msra.mxu0 %v2913
        %2917 = vmatprep.subr.bf16.mxu0 0
        %2918 = vmatpush1.bf16.xpose.msra.mxu0 0
        %2919 = vmatprep.subr.bf16.mxu0 0
        %2920 = vmatpush1.bf16.xpose.msra.mxu0 0
        %2921 = vmatprep.subr.bf16.mxu0 0
        %2922 = vmatpush1.bf16.xpose.msra.mxu0 0
        %2923 = vmatprep.subr.bf16.mxu0 0
        %2924 = vmatpush1.bf16.xpose.msra.mxu0 0
        %2925 = vmatprep.subr.bf16.mxu0 0
        %2926 = vmatpush1.bf16.xpose.msra.mxu0 0
        %2927 = vmatprep.subr.bf16.mxu0 0
        %2928 = vmatpush1.bf16.xpose.msra.mxu0 0
        %2929 = vmatprep.subr.bf16.mxu0 0
        %2930 = vmatpush1.bf16.xpose.msra.mxu0 0
        %2931 = vmatprep.subr.bf16.mxu0 0
        %2932 = vmatpush1.bf16.xpose.msra.mxu0 0
        %2933 = vmatprep.subr.bf16.mxu0 0
        %2934 = vmatpush1.bf16.xpose.msra.mxu0 0
        %2935 = vmatprep.subr.bf16.mxu0 0
        %2936 = vmatpush1.bf16.xpose.msra.mxu0 0
        %2937 = vmatprep.subr.bf16.mxu0 0
        %2938 = vmatpush1.bf16.xpose.msra.mxu0 0
        %2939 = vmatprep.subr.bf16.mxu0 0
        %2940 = vmatpush1.bf16.xpose.msra.mxu0 0
        %2941 = vmatprep.subr.bf16.mxu0 0
        %2942 = vmatpush1.bf16.xpose.msra.mxu0 0
        %2943 = vmatprep.subr.bf16.mxu0 0
        %2944 = vmatpush1.bf16.xpose.msra.mxu0 0
        %2945 = vmatprep.subr.bf16.mxu0 0
        %2946 = vmatpush1.bf16.xpose.msra.mxu0 0
        %2947 = vmatprep.mubr.bf16.mxu0 0
        %2948 = vmatmul.mubr.bf16.gmra.mrb[0].mxu0 %v2910
        %v2949 = vpop.f32.mrb[0].mxu0
        %v2950 = vadd.f32 0.0, %v2949
        %v2951 = vpop.f32.mrb[0].mxu0
        %v2952 = vpop.f32.mrb[0].mxu0
        %v2953 = vadd.f32 0.0, %v2952
        %v2954 = vpop.f32.mrb[0].mxu0
        %2955 = vdwg.mxu0
        %v2956 = vsel %vm1445, %v2797, -inf
        %2957 = vmax.xlane.f32.xlu0 %v2956
        %v2958 = vpop.xlane.xlu0 %2957
        %v2959 = vsel %vm1445, %v2800, -inf
        %2960 = vmax.xlane.f32.xlu0 %v2959
        %v2961 = vpop.xlane.xlu0 %2960
        %v2962 = vsel %vm1445, %v2848, -inf
        %2963 = vmax.xlane.f32.xlu0 %v2962
        %v2964 = vpop.xlane.xlu0 %2963
        %v2965 = vsel %vm1445, %v2851, -inf
        %2966 = vmax.xlane.f32.xlu0 %v2965
        %v2967 = vpop.xlane.xlu0 %2966
        %v2968 = vsel %vm1445, %v2899, -inf
        %2969 = vmax.xlane.f32.xlu0 %v2968
        %v2970 = vpop.xlane.xlu0 %2969
        %v2971 = vsel %vm1445, %v2902, -inf
        %2972 = vmax.xlane.f32.xlu0 %v2971
        %v2973 = vpop.xlane.xlu0 %2972
        %v2974 = vsel %vm1445, %v2950, -inf
        %2975 = vmax.xlane.f32.xlu0 %v2974
        %v2976 = vpop.xlane.xlu0 %2975
        %v2977 = vsel %vm1445, %v2953, -inf
        %2978 = vmax.xlane.f32.xlu0 %v2977
        %v2979 = vpop.xlane.xlu0 %2978
        %v2980 = vsub.f32 %v2797, %v2958
        %v2981 = vsub.f32 %v2800, %v2961
        %v2982 = vsub.f32 %v2848, %v2964
        %v2983 = vsub.f32 %v2851, %v2967
        %v2984 = vsub.f32 %v2899, %v2970
        %v2985 = vsub.f32 %v2902, %v2973
        %v2986 = vsub.f32 %v2950, %v2976
        %v2987 = vsub.f32 %v2953, %v2979
        %v2988 = vmul.f32 %v2980, 1.442695
        %v2989 = vpow.pop %v2988
        %v2990 = vmul.f32 %v2981, 1.442695
        %v2991 = vpow.pop %v2990
        %v2992 = vmul.f32 %v2982, 1.442695
        %v2993 = vpow.pop %v2992
        %v2994 = vmul.f32 %v2983, 1.442695
        %v2995 = vpow.pop %v2994
        %v2996 = vmul.f32 %v2984, 1.442695
        %v2997 = vpow.pop %v2996
        %v2998 = vmul.f32 %v2985, 1.442695
        %v2999 = vpow.pop %v2998
        %v3000 = vmul.f32 %v2986, 1.442695
        %v3001 = vpow.pop %v3000
        %v3002 = vmul.f32 %v2987, 1.442695
        %v3003 = vpow.pop %v3002
        %v3004 = vsel %vm1445, %v2989, 0.0
        %3005 = vadd.xlane.f32.xlu0 %v3004
        %v3006 = vpop.xlane.xlu0 %3005
        %v3007 = vsel %vm1445, %v2991, 0.0
        %3008 = vadd.xlane.f32.xlu0 %v3007
        %v3009 = vpop.xlane.xlu0 %3008
        %v3010 = vsel %vm1445, %v2993, 0.0
        %3011 = vadd.xlane.f32.xlu0 %v3010
        %v3012 = vpop.xlane.xlu0 %3011
        %v3013 = vsel %vm1445, %v2995, 0.0
        %3014 = vadd.xlane.f32.xlu0 %v3013
        %v3015 = vpop.xlane.xlu0 %3014
        %v3016 = vsel %vm1445, %v2997, 0.0
        %3017 = vadd.xlane.f32.xlu0 %v3016
        %v3018 = vpop.xlane.xlu0 %3017
        %v3019 = vsel %vm1445, %v2999, 0.0
        %3020 = vadd.xlane.f32.xlu0 %v3019
        %v3021 = vpop.xlane.xlu0 %3020
        %v3022 = vsel %vm1445, %v3001, 0.0
        %3023 = vadd.xlane.f32.xlu0 %v3022
        %v3024 = vpop.xlane.xlu0 %3023
        %v3025 = vsel %vm1445, %v3003, 0.0
        %3026 = vadd.xlane.f32.xlu0 %v3025
        %v3027 = vpop.xlane.xlu0 %3026
        %v3028 = vrcp.pop %v3006
        %v3029 = vrcp.pop %v3009
        %v3030 = vrcp.pop %v3012
        %v3031 = vrcp.pop %v3015
        %v3032 = vrcp.pop %v3018
        %v3033 = vrcp.pop %v3021
        %v3034 = vrcp.pop %v3024
        %v3035 = vrcp.pop %v3027
        %v3036 = vmul.f32 %v2989, %v3028
        %v3037 = vmul.f32 %v2991, %v3029
        %v3038 = vmul.f32 %v2993, %v3030
        %v3039 = vmul.f32 %v2995, %v3031
        %v3040 = vmul.f32 %v2997, %v3032
        %v3041 = vmul.f32 %v2999, %v3033
        %v3042 = vmul.f32 %v3001, %v3034
        %v3043 = vmul.f32 %v3003, %v3035
        %v3044 = vpack.c.bf16 %v3037, %v3036
        %v3045 = vpack.c.bf16 %v3039, %v3038
        %v3046 = vpack.c.bf16 %v3041, %v3040
        %v3047 = vpack.c.bf16 %v3043, %v3042
        %3048 = vrot.lane.b32.xlu0 %v1252, 32
        %v3049 = vpop.permute.xlu0 %3048
        %v3052 = vsel %vm1445, %v3044, 0
        %3054 = vmatprep.subr.bf16.mxu0 0
        %3055 = vmatpush1.bf16.msra.mxu0 %v3049
        %3056 = vmatprep.subr.bf16.mxu0 0
        %3057 = vmatpush1.bf16.msra.mxu0 0
        %3058 = vmatprep.subr.bf16.mxu0 0
        %3059 = vmatpush1.bf16.msra.mxu0 0
        %3060 = vmatprep.subr.bf16.mxu0 0
        %3061 = vmatpush1.bf16.msra.mxu0 0
        %3062 = vmatprep.subr.bf16.mxu0 0
        %3063 = vmatpush1.bf16.msra.mxu0 0
        %3064 = vmatprep.subr.bf16.mxu0 0
        %3065 = vmatpush1.bf16.msra.mxu0 0
        %3066 = vmatprep.subr.bf16.mxu0 0
        %3067 = vmatpush1.bf16.msra.mxu0 0
        %3068 = vmatprep.subr.bf16.mxu0 0
        %3069 = vmatpush1.bf16.msra.mxu0 0
        %3070 = vmatprep.subr.bf16.mxu0 0
        %3071 = vmatpush1.bf16.msra.mxu0 0
        %3072 = vmatprep.subr.bf16.mxu0 0
        %3073 = vmatpush1.bf16.msra.mxu0 0
        %3074 = vmatprep.subr.bf16.mxu0 0
        %3075 = vmatpush1.bf16.msra.mxu0 0
        %3076 = vmatprep.subr.bf16.mxu0 0
        %3077 = vmatpush1.bf16.msra.mxu0 0
        %3078 = vmatprep.subr.bf16.mxu0 0
        %3079 = vmatpush1.bf16.msra.mxu0 0
        %3080 = vmatprep.subr.bf16.mxu0 0
        %3081 = vmatpush1.bf16.msra.mxu0 0
        %3082 = vmatprep.subr.bf16.mxu0 0
        %3083 = vmatpush1.bf16.msra.mxu0 0
        %3084 = vmatprep.subr.bf16.mxu0 0
        %3085 = vmatpush1.bf16.msra.mxu0 0
        %3086 = vmatprep.mubr.bf16.mxu0 0
        %3087 = vmatmul.mubr.bf16.gmra.mrb[0].mxu0 %v3052
        %v3088 = vpop.f32.mrb[0].mxu0
        %v3089 = vadd.f32 0.0, %v3088
        %v3090 = vpop.f32.mrb[0].mxu0
        %v3091 = vpop.f32.mrb[0].mxu0
        %v3092 = vadd.f32 0.0, %v3091
        %v3093 = vpop.f32.mrb[0].mxu0
        %3094 = vdwg.mxu0
        %3095 = vrot.lane.b32.xlu0 %v1253, 32
        %v3096 = vpop.permute.xlu0 %3095
        %v3099 = vsel %vm1445, %v3045, 0
        %3101 = vmatprep.subr.bf16.mxu0 0
        %3102 = vmatpush1.bf16.msra.mxu0 %v3096
        %3103 = vmatprep.subr.bf16.mxu0 0
        %3104 = vmatpush1.bf16.msra.mxu0 0
        %3105 = vmatprep.subr.bf16.mxu0 0
        %3106 = vmatpush1.bf16.msra.mxu0 0
        %3107 = vmatprep.subr.bf16.mxu0 0
        %3108 = vmatpush1.bf16.msra.mxu0 0
        %3109 = vmatprep.subr.bf16.mxu0 0
        %3110 = vmatpush1.bf16.msra.mxu0 0
        %3111 = vmatprep.subr.bf16.mxu0 0
        %3112 = vmatpush1.bf16.msra.mxu0 0
        %3113 = vmatprep.subr.bf16.mxu0 0
        %3114 = vmatpush1.bf16.msra.mxu0 0
        %3115 = vmatprep.subr.bf16.mxu0 0
        %3116 = vmatpush1.bf16.msra.mxu0 0
        %3117 = vmatprep.subr.bf16.mxu0 0
        %3118 = vmatpush1.bf16.msra.mxu0 0
        %3119 = vmatprep.subr.bf16.mxu0 0
        %3120 = vmatpush1.bf16.msra.mxu0 0
        %3121 = vmatprep.subr.bf16.mxu0 0
        %3122 = vmatpush1.bf16.msra.mxu0 0
        %3123 = vmatprep.subr.bf16.mxu0 0
        %3124 = vmatpush1.bf16.msra.mxu0 0
        %3125 = vmatprep.subr.bf16.mxu0 0
        %3126 = vmatpush1.bf16.msra.mxu0 0
        %3127 = vmatprep.subr.bf16.mxu0 0
        %3128 = vmatpush1.bf16.msra.mxu0 0
        %3129 = vmatprep.subr.bf16.mxu0 0
        %3130 = vmatpush1.bf16.msra.mxu0 0
        %3131 = vmatprep.subr.bf16.mxu0 0
        %3132 = vmatpush1.bf16.msra.mxu0 0
        %3133 = vmatprep.mubr.bf16.mxu0 0
        %3134 = vmatmul.mubr.bf16.gmra.mrb[0].mxu0 %v3099
        %v3135 = vpop.f32.mrb[0].mxu0
        %v3136 = vadd.f32 0.0, %v3135
        %v3137 = vpop.f32.mrb[0].mxu0
        %v3138 = vpop.f32.mrb[0].mxu0
        %v3139 = vadd.f32 0.0, %v3138
        %v3140 = vpop.f32.mrb[0].mxu0
        %3141 = vdwg.mxu0
        %3142 = vrot.lane.b32.xlu0 %v1254, 32
        %v3143 = vpop.permute.xlu0 %3142
        %v3146 = vsel %vm1445, %v3046, 0
        %3148 = vmatprep.subr.bf16.mxu0 0
        %3149 = vmatpush1.bf16.msra.mxu0 %v3143
        %3150 = vmatprep.subr.bf16.mxu0 0
        %3151 = vmatpush1.bf16.msra.mxu0 0
        %3152 = vmatprep.subr.bf16.mxu0 0
        %3153 = vmatpush1.bf16.msra.mxu0 0
        %3154 = vmatprep.subr.bf16.mxu0 0
        %3155 = vmatpush1.bf16.msra.mxu0 0
        %3156 = vmatprep.subr.bf16.mxu0 0
        %3157 = vmatpush1.bf16.msra.mxu0 0
        %3158 = vmatprep.subr.bf16.mxu0 0
        %3159 = vmatpush1.bf16.msra.mxu0 0
        %3160 = vmatprep.subr.bf16.mxu0 0
        %3161 = vmatpush1.bf16.msra.mxu0 0
        %3162 = vmatprep.subr.bf16.mxu0 0
        %3163 = vmatpush1.bf16.msra.mxu0 0
        %3164 = vmatprep.subr.bf16.mxu0 0
        %3165 = vmatpush1.bf16.msra.mxu0 0
        %3166 = vmatprep.subr.bf16.mxu0 0
        %3167 = vmatpush1.bf16.msra.mxu0 0
        %3168 = vmatprep.subr.bf16.mxu0 0
        %3169 = vmatpush1.bf16.msra.mxu0 0
        %3170 = vmatprep.subr.bf16.mxu0 0
        %3171 = vmatpush1.bf16.msra.mxu0 0
        %3172 = vmatprep.subr.bf16.mxu0 0
        %3173 = vmatpush1.bf16.msra.mxu0 0
        %3174 = vmatprep.subr.bf16.mxu0 0
        %3175 = vmatpush1.bf16.msra.mxu0 0
        %3176 = vmatprep.subr.bf16.mxu0 0
        %3177 = vmatpush1.bf16.msra.mxu0 0
        %3178 = vmatprep.subr.bf16.mxu0 0
        %3179 = vmatpush1.bf16.msra.mxu0 0
        %3180 = vmatprep.mubr.bf16.mxu0 0
        %3181 = vmatmul.mubr.bf16.gmra.mrb[0].mxu0 %v3146
        %v3182 = vpop.f32.mrb[0].mxu0
        %v3183 = vadd.f32 0.0, %v3182
        %v3184 = vpop.f32.mrb[0].mxu0
        %v3185 = vpop.f32.mrb[0].mxu0
        %v3186 = vadd.f32 0.0, %v3185
        %v3187 = vpop.f32.mrb[0].mxu0
        %3188 = vdwg.mxu0
        %3189 = vrot.lane.b32.xlu0 %v1255, 32
        %v3190 = vpop.permute.xlu0 %3189
        %v3193 = vsel %vm1445, %v3047, 0
        %3195 = vmatprep.subr.bf16.mxu0 0
        %3196 = vmatpush1.bf16.msra.mxu0 %v3190
        %3197 = vmatprep.subr.bf16.mxu0 0
        %3198 = vmatpush1.bf16.msra.mxu0 0
        %3199 = vmatprep.subr.bf16.mxu0 0
        %3200 = vmatpush1.bf16.msra.mxu0 0
        %3201 = vmatprep.subr.bf16.mxu0 0
        %3202 = vmatpush1.bf16.msra.mxu0 0
        %3203 = vmatprep.subr.bf16.mxu0 0
        %3204 = vmatpush1.bf16.msra.mxu0 0
        %3205 = vmatprep.subr.bf16.mxu0 0
        %3206 = vmatpush1.bf16.msra.mxu0 0
        %3207 = vmatprep.subr.bf16.mxu0 0
        %3208 = vmatpush1.bf16.msra.mxu0 0
        %3209 = vmatprep.subr.bf16.mxu0 0
        %3210 = vmatpush1.bf16.msra.mxu0 0
        %3211 = vmatprep.subr.bf16.mxu0 0
        %3212 = vmatpush1.bf16.msra.mxu0 0
        %3213 = vmatprep.subr.bf16.mxu0 0
        %3214 = vmatpush1.bf16.msra.mxu0 0
        %3215 = vmatprep.subr.bf16.mxu0 0
        %3216 = vmatpush1.bf16.msra.mxu0 0
        %3217 = vmatprep.subr.bf16.mxu0 0
        %3218 = vmatpush1.bf16.msra.mxu0 0
        %3219 = vmatprep.subr.bf16.mxu0 0
        %3220 = vmatpush1.bf16.msra.mxu0 0
        %3221 = vmatprep.subr.bf16.mxu0 0
        %3222 = vmatpush1.bf16.msra.mxu0 0
        %3223 = vmatprep.subr.bf16.mxu0 0
        %3224 = vmatpush1.bf16.msra.mxu0 0
        %3225 = vmatprep.subr.bf16.mxu0 0
        %3226 = vmatpush1.bf16.msra.mxu0 0
        %3227 = vmatprep.mubr.bf16.mxu0 0
        %3228 = vmatmul.mubr.bf16.gmra.mrb[0].mxu0 %v3193
        %v3229 = vpop.f32.mrb[0].mxu0
        %v3230 = vadd.f32 0.0, %v3229
        %v3231 = vpop.f32.mrb[0].mxu0
        %v3232 = vpop.f32.mrb[0].mxu0
        %v3233 = vadd.f32 0.0, %v3232
        %v3234 = vpop.f32.mrb[0].mxu0
        %3235 = vdwg.mxu0
        %v3236 = vpack.c.bf16 %v3092, %v3089
        %v3237 = vpack.c.bf16 %v3139, %v3136
        %v3238 = vpack.c.bf16 %v3186, %v3183
        %v3239 = vpack.c.bf16 %v3233, %v3230
        %3244 = vrot.lane.b32.xlu0 %v3236, 96
        %v3245 = vpop.permute.xlu0 %3244
        %3246 = vrot.lane.b32.xlu0 %v3237, 96
        %v3247 = vpop.permute.xlu0 %3246
        %3248 = vrot.lane.b32.xlu0 %v3238, 96
        %v3249 = vpop.permute.xlu0 %3248
        %3250 = vrot.lane.b32.xlu0 %v3239, 96
        %v3251 = vpop.permute.xlu0 %3250
        %vm3256 = vcmask 1048320
        %3257 = vst.msk [vmem:[#allocation3] sm:$0xff] %vm3256, %v3245
        %3258 = vst.msk [vmem:[#allocation3 + $0x8] sm:$0xff] %vm3256, %v3247
        %3259 = vst.msk [vmem:[#allocation3 + $0x10] sm:$0xff] %vm3256, %v3249
        %3260 = vst.msk [vmem:[#allocation3 + $0x18] sm:$0xff] %vm3256, %v3251
        %v3261 = vld [vmem:[#allocation3] sm:$0xff]
        %v3262 = vld [vmem:[#allocation3 + $0x8] sm:$0xff]
        %v3263 = vld [vmem:[#allocation3 + $0x10] sm:$0xff]
        %v3264 = vld [vmem:[#allocation3 + $0x18] sm:$0xff]
        %v3265 = vld [vmem:[%s656] sm:$0xf]
        %v3266 = vld [vmem:[%s656 + $0x4] sm:$0xf]
        %v3267 = vld [vmem:[%s656 + $0x8] sm:$0xf]
        %v3268 = vld [vmem:[%s656 + $0xc] sm:$0xf]
        %v3269 = vld [vmem:[%s656 + $0x10] sm:$0xf]
        %v3270 = vld [vmem:[%s656 + $0x14] sm:$0xf]
        %v3271 = vld [vmem:[%s656 + $0x18] sm:$0xf]
        %v3272 = vld [vmem:[%s656 + $0x1c] sm:$0xf]
        %v3273 = vld [vmem:[%s656 + $0x20] sm:$0xf]
        %v3274 = vld [vmem:[%s656 + $0x24] sm:$0xf]
        %v3275 = vld [vmem:[%s656 + $0x28] sm:$0xf]
        %v3276 = vld [vmem:[%s656 + $0x2c] sm:$0xf]
        %v3277 = vld [vmem:[%s656 + $0x30] sm:$0xf]
        %v3278 = vld [vmem:[%s656 + $0x34] sm:$0xf]
        %v3279 = vld [vmem:[%s656 + $0x38] sm:$0xf]
        %v3280 = vld [vmem:[%s656 + $0x3c] sm:$0xf]
        %v3281 = vld [vmem:[%s763] sm:$0x1]
        %v3283 = vlaneseq
        %v3284 = vshrl.u32 %v3283, 7
        %v3285 = vsub.s32 0, %v3284
        %v3286 = vrot.slane %v3281, %v3285
        %v3304 = vunpack.c.l.b16 %v3265
        %v3305 = vunpack.c.l.b16 %v3266
        %v3306 = vunpack.c.l.b16 %v3267
        %v3307 = vunpack.c.l.b16 %v3268
        %v3308 = vunpack.c.l.b16 %v3269
        %v3309 = vunpack.c.l.b16 %v3270
        %v3310 = vunpack.c.l.b16 %v3271
        %v3311 = vunpack.c.l.b16 %v3272
        %v3312 = vunpack.c.l.b16 %v3273
        %v3313 = vunpack.c.l.b16 %v3274
        %v3314 = vunpack.c.l.b16 %v3275
        %v3315 = vunpack.c.l.b16 %v3276
        %v3316 = vunpack.c.l.b16 %v3277
        %v3317 = vunpack.c.l.b16 %v3278
        %v3318 = vunpack.c.l.b16 %v3279
        %v3319 = vunpack.c.l.b16 %v3280
        %v3320 = vpack.c.b16 %v3305, %v3304
        %v3321 = vpack.c.b16 %v3307, %v3306
        %v3322 = vpack.c.b16 %v3309, %v3308
        %v3323 = vpack.c.b16 %v3311, %v3310
        %v3324 = vpack.c.b16 %v3313, %v3312
        %v3325 = vpack.c.b16 %v3315, %v3314
        %v3326 = vpack.c.b16 %v3317, %v3316
        %v3327 = vpack.c.b16 %v3319, %v3318
        %3336 = vmatprep.subr.bf16.mxu0 0
        %3337 = vmatpush1.bf16.msra.mxu0 %v3320
        %3338 = vmatprep.subr.bf16.mxu0 0
        %3339 = vmatpush1.bf16.msra.mxu0 %v3321
        %3340 = vmatprep.subr.bf16.mxu0 0
        %3341 = vmatpush1.bf16.msra.mxu0 %v3322
        %3342 = vmatprep.subr.bf16.mxu0 0
        %3343 = vmatpush1.bf16.msra.mxu0 %v3323
        %3344 = vmatprep.subr.bf16.mxu0 0
        %3345 = vmatpush1.bf16.msra.mxu0 %v3324
        %3346 = vmatprep.subr.bf16.mxu0 0
        %3347 = vmatpush1.bf16.msra.mxu0 %v3325
        %3348 = vmatprep.subr.bf16.mxu0 0
        %3349 = vmatpush1.bf16.msra.mxu0 %v3326
        %3350 = vmatprep.subr.bf16.mxu0 0
        %3351 = vmatpush1.bf16.msra.mxu0 %v3327
        %3352 = vmatprep.subr.bf16.mxu0 0
        %3353 = vmatpush1.bf16.msra.mxu0 0
        %3354 = vmatprep.subr.bf16.mxu0 0
        %3355 = vmatpush1.bf16.msra.mxu0 0
        %3356 = vmatprep.subr.bf16.mxu0 0
        %3357 = vmatpush1.bf16.msra.mxu0 0
        %3358 = vmatprep.subr.bf16.mxu0 0
        %3359 = vmatpush1.bf16.msra.mxu0 0
        %3360 = vmatprep.subr.bf16.mxu0 0
        %3361 = vmatpush1.bf16.msra.mxu0 0
        %3362 = vmatprep.subr.bf16.mxu0 0
        %3363 = vmatpush1.bf16.msra.mxu0 0
        %3364 = vmatprep.subr.bf16.mxu0 0
        %3365 = vmatpush1.bf16.msra.mxu0 0
        %3366 = vmatprep.subr.bf16.mxu0 0
        %3367 = vmatpush1.bf16.msra.mxu0 0
        %3368 = vmatprep.mubr.bf16.mxu0 0
        %3369 = vmatmul.mubr.bf16.gmra.mrb[0].mxu0 %v3261
        %v3370 = vpop.f32.mrb[0].mxu0
        %v3371 = vadd.f32 %v3286, %v3370
        %v3372 = vpop.f32.mrb[0].mxu0
        %v3373 = vpop.f32.mrb[0].mxu0
        %v3374 = vadd.f32 %v3286, %v3373
        %v3375 = vpop.f32.mrb[0].mxu0
        %3376 = vmatprep.mubr.bf16.mxu0 0
        %3377 = vmatmul.mubr.bf16.gmra.mrb[0].mxu0 %v3262
        %v3378 = vpop.f32.mrb[0].mxu0
        %v3379 = vadd.f32 %v3286, %v3378
        %v3380 = vpop.f32.mrb[0].mxu0
        %v3381 = vpop.f32.mrb[0].mxu0
        %v3382 = vadd.f32 %v3286, %v3381
        %v3383 = vpop.f32.mrb[0].mxu0
        %3384 = vmatprep.mubr.bf16.mxu0 0
        %3385 = vmatmul.mubr.bf16.gmra.mrb[0].mxu0 %v3263
        %v3386 = vpop.f32.mrb[0].mxu0
        %v3387 = vadd.f32 %v3286, %v3386
        %v3388 = vpop.f32.mrb[0].mxu0
        %v3389 = vpop.f32.mrb[0].mxu0
        %v3390 = vadd.f32 %v3286, %v3389
        %v3391 = vpop.f32.mrb[0].mxu0
        %3392 = vmatprep.mubr.bf16.mxu0 0
        %3393 = vmatmul.mubr.bf16.gmra.mrb[0].mxu0 %v3264
        %v3394 = vpop.f32.mrb[0].mxu0
        %v3395 = vadd.f32 %v3286, %v3394
        %v3396 = vpop.f32.mrb[0].mxu0
        %v3397 = vpop.f32.mrb[0].mxu0
        %v3398 = vadd.f32 %v3286, %v3397
        %v3399 = vpop.f32.mrb[0].mxu0
        %3400 = vdwg.mxu0
        %v3401 = vadd.f32 %v815, %v3371
        %v3402 = vadd.f32 %v816, %v3374
        %v3403 = vadd.f32 %v817, %v3379
        %v3404 = vadd.f32 %v818, %v3382
        %v3405 = vadd.f32 %v819, %v3387
        %v3406 = vadd.f32 %v820, %v3390
        %v3407 = vadd.f32 %v821, %v3395
        %v3408 = vadd.f32 %v822, %v3398
        %v3409 = vld [vmem:[%s766] sm:$0x1]
        %v3410 = vld [vmem:[%s769] sm:$0x1]
        %3411 = vadd.xlane.f32.xlu0 %v3401
        %v3412 = vpop.xlane.xlu0 %3411
        %3413 = vadd.xlane.f32.xlu0 %v3402
        %v3414 = vpop.xlane.xlu0 %3413
        %3415 = vadd.xlane.f32.xlu0 %v3403
        %v3416 = vpop.xlane.xlu0 %3415
        %3417 = vadd.xlane.f32.xlu0 %v3404
        %v3418 = vpop.xlane.xlu0 %3417
        %3419 = vadd.xlane.f32.xlu0 %v3405
        %v3420 = vpop.xlane.xlu0 %3419
        %3421 = vadd.xlane.f32.xlu0 %v3406
        %v3422 = vpop.xlane.xlu0 %3421
        %3423 = vadd.xlane.f32.xlu0 %v3407
        %v3424 = vpop.xlane.xlu0 %3423
        %3425 = vadd.xlane.f32.xlu0 %v3408
        %v3426 = vpop.xlane.xlu0 %3425
        %v3427 = vmul.f32 %v3412, %v841
        %v3428 = vmul.f32 %v3414, %v841
        %v3429 = vmul.f32 %v3416, %v841
        %v3430 = vmul.f32 %v3418, %v841
        %v3431 = vmul.f32 %v3420, %v841
        %v3432 = vmul.f32 %v3422, %v841
        %v3433 = vmul.f32 %v3424, %v841
        %v3434 = vmul.f32 %v3426, %v841
        %v3435 = vsub.f32 %v3401, %v3427
        %v3436 = vsub.f32 %v3402, %v3428
        %v3437 = vsub.f32 %v3403, %v3429
        %v3438 = vsub.f32 %v3404, %v3430
        %v3439 = vsub.f32 %v3405, %v3431
        %v3440 = vsub.f32 %v3406, %v3432
        %v3441 = vsub.f32 %v3407, %v3433
        %v3442 = vsub.f32 %v3408, %v3434
        %v3443 = vmul.f32 %v3435, %v3435
        %v3444 = vmul.f32 %v3436, %v3436
        %v3445 = vmul.f32 %v3437, %v3437
        %v3446 = vmul.f32 %v3438, %v3438
        %v3447 = vmul.f32 %v3439, %v3439
        %v3448 = vmul.f32 %v3440, %v3440
        %v3449 = vmul.f32 %v3441, %v3441
        %v3450 = vmul.f32 %v3442, %v3442
        %3451 = vadd.xlane.f32.xlu0 %v3443
        %v3452 = vpop.xlane.xlu0 %3451
        %3453 = vadd.xlane.f32.xlu0 %v3444
        %v3454 = vpop.xlane.xlu0 %3453
        %3455 = vadd.xlane.f32.xlu0 %v3445
        %v3456 = vpop.xlane.xlu0 %3455
        %3457 = vadd.xlane.f32.xlu0 %v3446
        %v3458 = vpop.xlane.xlu0 %3457
        %3459 = vadd.xlane.f32.xlu0 %v3447
        %v3460 = vpop.xlane.xlu0 %3459
        %3461 = vadd.xlane.f32.xlu0 %v3448
        %v3462 = vpop.xlane.xlu0 %3461
        %3463 = vadd.xlane.f32.xlu0 %v3449
        %v3464 = vpop.xlane.xlu0 %3463
        %3465 = vadd.xlane.f32.xlu0 %v3450
        %v3466 = vpop.xlane.xlu0 %3465
        %v3467 = vmul.f32 %v3452, %v841
        %v3468 = vmul.f32 %v3454, %v841
        %v3469 = vmul.f32 %v3456, %v841
        %v3470 = vmul.f32 %v3458, %v841
        %v3471 = vmul.f32 %v3460, %v841
        %v3472 = vmul.f32 %v3462, %v841
        %v3473 = vmul.f32 %v3464, %v841
        %v3474 = vmul.f32 %v3466, %v841
        %v3475 = vadd.f32 %v3467, 1e-05
        %v3476 = vadd.f32 %v3468, 1e-05
        %v3477 = vadd.f32 %v3469, 1e-05
        %v3478 = vadd.f32 %v3470, 1e-05
        %v3479 = vadd.f32 %v3471, 1e-05
        %v3480 = vadd.f32 %v3472, 1e-05
        %v3481 = vadd.f32 %v3473, 1e-05
        %v3482 = vadd.f32 %v3474, 1e-05
        %v3483 = vrsqrt.pop %v3475
        %v3484 = vrsqrt.pop %v3476
        %v3485 = vrsqrt.pop %v3477
        %v3486 = vrsqrt.pop %v3478
        %v3487 = vrsqrt.pop %v3479
        %v3488 = vrsqrt.pop %v3480
        %v3489 = vrsqrt.pop %v3481
        %v3490 = vrsqrt.pop %v3482
        %v3491 = vmul.f32 %v3435, %v3483
        %v3492 = vmul.f32 %v3436, %v3484
        %v3493 = vmul.f32 %v3437, %v3485
        %v3494 = vmul.f32 %v3438, %v3486
        %v3495 = vmul.f32 %v3439, %v3487
        %v3496 = vmul.f32 %v3440, %v3488
        %v3497 = vmul.f32 %v3441, %v3489
        %v3498 = vmul.f32 %v3442, %v3490
        %v3500 = vlaneseq
        %v3501 = vshrl.u32 %v3500, 7
        %v3502 = vsub.s32 0, %v3501
        %v3503 = vrot.slane %v3409, %v3502
        %v3505 = vmul.f32 %v3491, %v3503
        %v3506 = vmul.f32 %v3492, %v3503
        %v3507 = vmul.f32 %v3493, %v3503
        %v3508 = vmul.f32 %v3494, %v3503
        %v3509 = vmul.f32 %v3495, %v3503
        %v3510 = vmul.f32 %v3496, %v3503
        %v3511 = vmul.f32 %v3497, %v3503
        %v3512 = vmul.f32 %v3498, %v3503
        %v3514 = vlaneseq
        %v3515 = vshrl.u32 %v3514, 7
        %v3516 = vsub.s32 0, %v3515
        %v3517 = vrot.slane %v3410, %v3516
        %v3519 = vadd.f32 %v3505, %v3517
        %v3520 = vadd.f32 %v3506, %v3517
        %v3521 = vadd.f32 %v3507, %v3517
        %v3522 = vadd.f32 %v3508, %v3517
        %v3523 = vadd.f32 %v3509, %v3517
        %v3524 = vadd.f32 %v3510, %v3517
        %v3525 = vadd.f32 %v3511, %v3517
        %v3526 = vadd.f32 %v3512, %v3517
        %v3527 = vpack.c.bf16 %v3520, %v3519
        %v3528 = vpack.c.bf16 %v3522, %v3521
        %v3529 = vpack.c.bf16 %v3524, %v3523
        %v3530 = vpack.c.bf16 %v3526, %v3525
        %v3531 = vld [vmem:[%s665] sm:$0xff]
        %v3532 = vld [vmem:[%s665 + $0x8] sm:$0xff]
        %v3533 = vld [vmem:[%s665 + $0x10] sm:$0xff]
        %v3534 = vld [vmem:[%s665 + $0x18] sm:$0xff]
        %v3535 = vld [vmem:[%s665 + $0x20] sm:$0xff]
        %v3536 = vld [vmem:[%s665 + $0x28] sm:$0xff]
        %v3537 = vld [vmem:[%s665 + $0x30] sm:$0xff]
        %v3538 = vld [vmem:[%s665 + $0x38] sm:$0xff]
        %v3539 = vld [vmem:[%s665 + $0x40] sm:$0xff]
        %v3540 = vld [vmem:[%s665 + $0x48] sm:$0xff]
        %v3541 = vld [vmem:[%s665 + $0x50] sm:$0xff]
        %v3542 = vld [vmem:[%s665 + $0x58] sm:$0xff]
        %v3543 = vld [vmem:[%s665 + $0x60] sm:$0xff]
        %v3544 = vld [vmem:[%s665 + $0x68] sm:$0xff]
        %v3545 = vld [vmem:[%s665 + $0x70] sm:$0xff]
        %v3546 = vld [vmem:[%s665 + $0x78] sm:$0xff]
        %v3547 = vld [vmem:[%s665 + $0x80] sm:$0xff]
        %v3548 = vld [vmem:[%s665 + $0x88] sm:$0xff]
        %v3549 = vld [vmem:[%s665 + $0x90] sm:$0xff]
        %v3550 = vld [vmem:[%s665 + $0x98] sm:$0xff]
        %v3551 = vld [vmem:[%s665 + $0xa0] sm:$0xff]
        %v3552 = vld [vmem:[%s665 + $0xa8] sm:$0xff]
        %v3553 = vld [vmem:[%s665 + $0xb0] sm:$0xff]
        %v3554 = vld [vmem:[%s665 + $0xb8] sm:$0xff]
        %v3555 = vld [vmem:[%s665 + $0xc0] sm:$0xff]
        %v3556 = vld [vmem:[%s665 + $0xc8] sm:$0xff]
        %v3557 = vld [vmem:[%s665 + $0xd0] sm:$0xff]
        %v3558 = vld [vmem:[%s665 + $0xd8] sm:$0xff]
        %v3559 = vld [vmem:[%s665 + $0xe0] sm:$0xff]
        %v3560 = vld [vmem:[%s665 + $0xe8] sm:$0xff]
        %v3561 = vld [vmem:[%s665 + $0xf0] sm:$0xff]
        %v3562 = vld [vmem:[%s665 + $0xf8] sm:$0xff]
        %v3563 = vld [vmem:[%s773] sm:$0xf]
        %v3565 = vlaneseq
        %v3566 = vshrl.u32 %v3565, 7
        %v3567 = vsub.s32 0, %v3566
        %v3568 = vrot.slane %v3563, %v3567
        %v3569 = vlaneseq
        %v3570 = vshrl.u32 %v3569, 7
        %v3571 = vsub.s32 1, %v3570
        %v3572 = vrot.slane %v3563, %v3571
        %v3573 = vlaneseq
        %v3574 = vshrl.u32 %v3573, 7
        %v3575 = vsub.s32 2, %v3574
        %v3576 = vrot.slane %v3563, %v3575
        %v3577 = vlaneseq
        %v3578 = vshrl.u32 %v3577, 7
        %v3579 = vsub.s32 3, %v3578
        %v3580 = vrot.slane %v3563, %v3579
        %v3617 = vunpack.c.l.b16 %v3531
        %v3618 = vunpack.c.h.b16 %v3531
        %v3619 = vunpack.c.l.b16 %v3532
        %v3620 = vunpack.c.h.b16 %v3532
        %v3621 = vunpack.c.l.b16 %v3533
        %v3622 = vunpack.c.h.b16 %v3533
        %v3623 = vunpack.c.l.b16 %v3534
        %v3624 = vunpack.c.h.b16 %v3534
        %v3625 = vunpack.c.l.b16 %v3535
        %v3626 = vunpack.c.h.b16 %v3535
        %v3627 = vunpack.c.l.b16 %v3536
        %v3628 = vunpack.c.h.b16 %v3536
        %v3629 = vunpack.c.l.b16 %v3537
        %v3630 = vunpack.c.h.b16 %v3537
        %v3631 = vunpack.c.l.b16 %v3538
        %v3632 = vunpack.c.h.b16 %v3538
        %v3633 = vunpack.c.l.b16 %v3539
        %v3634 = vunpack.c.h.b16 %v3539
        %v3635 = vunpack.c.l.b16 %v3540
        %v3636 = vunpack.c.h.b16 %v3540
        %v3637 = vunpack.c.l.b16 %v3541
        %v3638 = vunpack.c.h.b16 %v3541
        %v3639 = vunpack.c.l.b16 %v3542
        %v3640 = vunpack.c.h.b16 %v3542
        %v3641 = vunpack.c.l.b16 %v3543
        %v3642 = vunpack.c.h.b16 %v3543
        %v3643 = vunpack.c.l.b16 %v3544
        %v3644 = vunpack.c.h.b16 %v3544
        %v3645 = vunpack.c.l.b16 %v3545
        %v3646 = vunpack.c.h.b16 %v3545
        %v3647 = vunpack.c.l.b16 %v3546
        %v3648 = vunpack.c.h.b16 %v3546
        %v3649 = vunpack.c.l.b16 %v3547
        %v3650 = vunpack.c.h.b16 %v3547
        %v3651 = vunpack.c.l.b16 %v3548
        %v3652 = vunpack.c.h.b16 %v3548
        %v3653 = vunpack.c.l.b16 %v3549
        %v3654 = vunpack.c.h.b16 %v3549
        %v3655 = vunpack.c.l.b16 %v3550
        %v3656 = vunpack.c.h.b16 %v3550
        %v3657 = vunpack.c.l.b16 %v3551
        %v3658 = vunpack.c.h.b16 %v3551
        %v3659 = vunpack.c.l.b16 %v3552
        %v3660 = vunpack.c.h.b16 %v3552
        %v3661 = vunpack.c.l.b16 %v3553
        %v3662 = vunpack.c.h.b16 %v3553
        %v3663 = vunpack.c.l.b16 %v3554
        %v3664 = vunpack.c.h.b16 %v3554
        %v3665 = vunpack.c.l.b16 %v3555
        %v3666 = vunpack.c.h.b16 %v3555
        %v3667 = vunpack.c.l.b16 %v3556
        %v3668 = vunpack.c.h.b16 %v3556
        %v3669 = vunpack.c.l.b16 %v3557
        %v3670 = vunpack.c.h.b16 %v3557
        %v3671 = vunpack.c.l.b16 %v3558
        %v3672 = vunpack.c.h.b16 %v3558
        %v3673 = vunpack.c.l.b16 %v3559
        %v3674 = vunpack.c.h.b16 %v3559
        %v3675 = vunpack.c.l.b16 %v3560
        %v3676 = vunpack.c.h.b16 %v3560
        %v3677 = vunpack.c.l.b16 %v3561
        %v3678 = vunpack.c.h.b16 %v3561
        %v3679 = vunpack.c.l.b16 %v3562
        %v3680 = vunpack.c.h.b16 %v3562
        %v3681 = vpack.c.b16 %v3621, %v3617
        %v3682 = vpack.c.b16 %v3622, %v3618
        %v3683 = vpack.c.b16 %v3623, %v3619
        %v3684 = vpack.c.b16 %v3624, %v3620
        %v3685 = vpack.c.b16 %v3629, %v3625
        %v3686 = vpack.c.b16 %v3630, %v3626
        %v3687 = vpack.c.b16 %v3631, %v3627
        %v3688 = vpack.c.b16 %v3632, %v3628
        %v3689 = vpack.c.b16 %v3637, %v3633
        %v3690 = vpack.c.b16 %v3638, %v3634
        %v3691 = vpack.c.b16 %v3639, %v3635
        %v3692 = vpack.c.b16 %v3640, %v3636
        %v3693 = vpack.c.b16 %v3645, %v3641
        %v3694 = vpack.c.b16 %v3646, %v3642
        %v3695 = vpack.c.b16 %v3647, %v3643
        %v3696 = vpack.c.b16 %v3648, %v3644
        %v3697 = vpack.c.b16 %v3653, %v3649
        %v3698 = vpack.c.b16 %v3654, %v3650
        %v3699 = vpack.c.b16 %v3655, %v3651
        %v3700 = vpack.c.b16 %v3656, %v3652
        %v3701 = vpack.c.b16 %v3661, %v3657
        %v3702 = vpack.c.b16 %v3662, %v3658
        %v3703 = vpack.c.b16 %v3663, %v3659
        %v3704 = vpack.c.b16 %v3664, %v3660
        %v3705 = vpack.c.b16 %v3669, %v3665
        %v3706 = vpack.c.b16 %v3670, %v3666
        %v3707 = vpack.c.b16 %v3671, %v3667
        %v3708 = vpack.c.b16 %v3672, %v3668
        %v3709 = vpack.c.b16 %v3677, %v3673
        %v3710 = vpack.c.b16 %v3678, %v3674
        %v3711 = vpack.c.b16 %v3679, %v3675
        %v3712 = vpack.c.b16 %v3680, %v3676
        %3745 = vmatprep.subr.bf16.mxu0 %v3682
        %3746 = vmatpush1.bf16.msra.mxu0 %v3681
        %3747 = vmatprep.subr.bf16.mxu0 %v3686
        %3748 = vmatpush1.bf16.msra.mxu0 %v3685
        %3749 = vmatprep.subr.bf16.mxu0 %v3690
        %3750 = vmatpush1.bf16.msra.mxu0 %v3689
        %3751 = vmatprep.subr.bf16.mxu0 %v3694
        %3752 = vmatpush1.bf16.msra.mxu0 %v3693
        %3753 = vmatprep.subr.bf16.mxu0 %v3698
        %3754 = vmatpush1.bf16.msra.mxu0 %v3697
        %3755 = vmatprep.subr.bf16.mxu0 %v3702
        %3756 = vmatpush1.bf16.msra.mxu0 %v3701
        %3757 = vmatprep.subr.bf16.mxu0 %v3706
        %3758 = vmatpush1.bf16.msra.mxu0 %v3705
        %3759 = vmatprep.subr.bf16.mxu0 %v3710
        %3760 = vmatpush1.bf16.msra.mxu0 %v3709
        %3761 = vmatprep.subr.bf16.mxu0 0
        %3762 = vmatpush1.bf16.msra.mxu0 0
        %3763 = vmatprep.subr.bf16.mxu0 0
        %3764 = vmatpush1.bf16.msra.mxu0 0
        %3765 = vmatprep.subr.bf16.mxu0 0
        %3766 = vmatpush1.bf16.msra.mxu0 0
        %3767 = vmatprep.subr.bf16.mxu0 0
        %3768 = vmatpush1.bf16.msra.mxu0 0
        %3769 = vmatprep.subr.bf16.mxu0 0
        %3770 = vmatpush1.bf16.msra.mxu0 0
        %3771 = vmatprep.subr.bf16.mxu0 0
        %3772 = vmatpush1.bf16.msra.mxu0 0
        %3773 = vmatprep.subr.bf16.mxu0 0
        %3774 = vmatpush1.bf16.msra.mxu0 0
        %3775 = vmatprep.subr.bf16.mxu0 0
        %3776 = vmatpush1.bf16.msra.mxu0 0
        %3777 = vmatprep.mubr.bf16.mxu0 0
        %3778 = vmatmul.mubr.bf16.gmra.mrb[0].mxu0 %v3527
        %v3779 = vpop.f32.mrb[0].mxu0
        %v3780 = vadd.f32 %v3568, %v3779
        %v3781 = vpop.f32.mrb[0].mxu0
        %v3782 = vadd.f32 %v3572, %v3781
        %v3783 = vpop.f32.mrb[0].mxu0
        %v3784 = vadd.f32 %v3568, %v3783
        %v3785 = vpop.f32.mrb[0].mxu0
        %v3786 = vadd.f32 %v3572, %v3785
        %3787 = vmatprep.mubr.bf16.mxu0 0
        %3788 = vmatmul.mubr.bf16.gmra.mrb[0].mxu0 %v3528
        %v3789 = vpop.f32.mrb[0].mxu0
        %v3790 = vadd.f32 %v3568, %v3789
        %v3791 = vpop.f32.mrb[0].mxu0
        %v3792 = vadd.f32 %v3572, %v3791
        %v3793 = vpop.f32.mrb[0].mxu0
        %v3794 = vadd.f32 %v3568, %v3793
        %v3795 = vpop.f32.mrb[0].mxu0
        %v3796 = vadd.f32 %v3572, %v3795
        %3797 = vmatprep.mubr.bf16.mxu0 0
        %3798 = vmatmul.mubr.bf16.gmra.mrb[0].mxu0 %v3529
        %v3799 = vpop.f32.mrb[0].mxu0
        %v3800 = vadd.f32 %v3568, %v3799
        %v3801 = vpop.f32.mrb[0].mxu0
        %v3802 = vadd.f32 %v3572, %v3801
        %v3803 = vpop.f32.mrb[0].mxu0
        %v3804 = vadd.f32 %v3568, %v3803
        %v3805 = vpop.f32.mrb[0].mxu0
        %v3806 = vadd.f32 %v3572, %v3805
        %3807 = vmatprep.mubr.bf16.mxu0 0
        %3808 = vmatmul.mubr.bf16.gmra.mrb[0].mxu0 %v3530
        %v3809 = vpop.f32.mrb[0].mxu0
        %v3810 = vadd.f32 %v3568, %v3809
        %v3811 = vpop.f32.mrb[0].mxu0
        %v3812 = vadd.f32 %v3572, %v3811
        %v3813 = vpop.f32.mrb[0].mxu0
        %v3814 = vadd.f32 %v3568, %v3813
        %v3815 = vpop.f32.mrb[0].mxu0
        %v3816 = vadd.f32 %v3572, %v3815
        %3817 = vdwg.mxu0
        %3818 = vmatprep.subr.bf16.mxu0 %v3684
        %3819 = vmatpush1.bf16.msra.mxu0 %v3683
        %3820 = vmatprep.subr.bf16.mxu0 %v3688
        %3821 = vmatpush1.bf16.msra.mxu0 %v3687
        %3822 = vmatprep.subr.bf16.mxu0 %v3692
        %3823 = vmatpush1.bf16.msra.mxu0 %v3691
        %3824 = vmatprep.subr.bf16.mxu0 %v3696
        %3825 = vmatpush1.bf16.msra.mxu0 %v3695
        %3826 = vmatprep.subr.bf16.mxu0 %v3700
        %3827 = vmatpush1.bf16.msra.mxu0 %v3699
        %3828 = vmatprep.subr.bf16.mxu0 %v3704
        %3829 = vmatpush1.bf16.msra.mxu0 %v3703
        %3830 = vmatprep.subr.bf16.mxu0 %v3708
        %3831 = vmatpush1.bf16.msra.mxu0 %v3707
        %3832 = vmatprep.subr.bf16.mxu0 %v3712
        %3833 = vmatpush1.bf16.msra.mxu0 %v3711
        %3834 = vmatprep.subr.bf16.mxu0 0
        %3835 = vmatpush1.bf16.msra.mxu0 0
        %3836 = vmatprep.subr.bf16.mxu0 0
        %3837 = vmatpush1.bf16.msra.mxu0 0
        %3838 = vmatprep.subr.bf16.mxu0 0
        %3839 = vmatpush1.bf16.msra.mxu0 0
        %3840 = vmatprep.subr.bf16.mxu0 0
        %3841 = vmatpush1.bf16.msra.mxu0 0
        %3842 = vmatprep.subr.bf16.mxu0 0
        %3843 = vmatpush1.bf16.msra.mxu0 0
        %3844 = vmatprep.subr.bf16.mxu0 0
        %3845 = vmatpush1.bf16.msra.mxu0 0
        %3846 = vmatprep.subr.bf16.mxu0 0
        %3847 = vmatpush1.bf16.msra.mxu0 0
        %3848 = vmatprep.subr.bf16.mxu0 0
        %3849 = vmatpush1.bf16.msra.mxu0 0
        %3850 = vmatprep.mubr.bf16.mxu0 0
        %3851 = vmatmul.mubr.bf16.gmra.mrb[0].mxu0 %v3527
        %v3852 = vpop.f32.mrb[0].mxu0
        %v3853 = vadd.f32 %v3576, %v3852
        %v3854 = vpop.f32.mrb[0].mxu0
        %v3855 = vadd.f32 %v3580, %v3854
        %v3856 = vpop.f32.mrb[0].mxu0
        %v3857 = vadd.f32 %v3576, %v3856
        %v3858 = vpop.f32.mrb[0].mxu0
        %v3859 = vadd.f32 %v3580, %v3858
        %3860 = vmatprep.mubr.bf16.mxu0 0
        %3861 = vmatmul.mubr.bf16.gmra.mrb[0].mxu0 %v3528
        %v3862 = vpop.f32.mrb[0].mxu0
        %v3863 = vadd.f32 %v3576, %v3862
        %v3864 = vpop.f32.mrb[0].mxu0
        %v3865 = vadd.f32 %v3580, %v3864
        %v3866 = vpop.f32.mrb[0].mxu0
        %v3867 = vadd.f32 %v3576, %v3866
        %v3868 = vpop.f32.mrb[0].mxu0
        %v3869 = vadd.f32 %v3580, %v3868
        %3870 = vmatprep.mubr.bf16.mxu0 0
        %3871 = vmatmul.mubr.bf16.gmra.mrb[0].mxu0 %v3529
        %v3872 = vpop.f32.mrb[0].mxu0
        %v3873 = vadd.f32 %v3576, %v3872
        %v3874 = vpop.f32.mrb[0].mxu0
        %v3875 = vadd.f32 %v3580, %v3874
        %v3876 = vpop.f32.mrb[0].mxu0
        %v3877 = vadd.f32 %v3576, %v3876
        %v3878 = vpop.f32.mrb[0].mxu0
        %v3879 = vadd.f32 %v3580, %v3878
        %3880 = vmatprep.mubr.bf16.mxu0 0
        %3881 = vmatmul.mubr.bf16.gmra.mrb[0].mxu0 %v3530
        %v3882 = vpop.f32.mrb[0].mxu0
        %v3883 = vadd.f32 %v3576, %v3882
        %v3884 = vpop.f32.mrb[0].mxu0
        %v3885 = vadd.f32 %v3580, %v3884
        %v3886 = vpop.f32.mrb[0].mxu0
        %v3887 = vadd.f32 %v3576, %v3886
        %v3888 = vpop.f32.mrb[0].mxu0
        %v3889 = vadd.f32 %v3580, %v3888
        %3890 = vdwg.mxu0
        %v3891 = vmul.f32 %v3780, %v3780
        %v3892 = vmul.f32 %v3782, %v3782
        %v3893 = vmul.f32 %v3853, %v3853
        %v3894 = vmul.f32 %v3855, %v3855
        %v3895 = vmul.f32 %v3784, %v3784
        %v3896 = vmul.f32 %v3786, %v3786
        %v3897 = vmul.f32 %v3857, %v3857
        %v3898 = vmul.f32 %v3859, %v3859
        %v3899 = vmul.f32 %v3790, %v3790
        %v3900 = vmul.f32 %v3792, %v3792
        %v3901 = vmul.f32 %v3863, %v3863
        %v3902 = vmul.f32 %v3865, %v3865
        %v3903 = vmul.f32 %v3794, %v3794
        %v3904 = vmul.f32 %v3796, %v3796
        %v3905 = vmul.f32 %v3867, %v3867
        %v3906 = vmul.f32 %v3869, %v3869
        %v3907 = vmul.f32 %v3800, %v3800
        %v3908 = vmul.f32 %v3802, %v3802
        %v3909 = vmul.f32 %v3873, %v3873
        %v3910 = vmul.f32 %v3875, %v3875
        %v3911 = vmul.f32 %v3804, %v3804
        %v3912 = vmul.f32 %v3806, %v3806
        %v3913 = vmul.f32 %v3877, %v3877
        %v3914 = vmul.f32 %v3879, %v3879
        %v3915 = vmul.f32 %v3810, %v3810
        %v3916 = vmul.f32 %v3812, %v3812
        %v3917 = vmul.f32 %v3883, %v3883
        %v3918 = vmul.f32 %v3885, %v3885
        %v3919 = vmul.f32 %v3814, %v3814
        %v3920 = vmul.f32 %v3816, %v3816
        %v3921 = vmul.f32 %v3887, %v3887
        %v3922 = vmul.f32 %v3889, %v3889
        %v3923 = vmul.f32 %v3780, %v3891
        %v3924 = vmul.f32 %v3782, %v3892
        %v3925 = vmul.f32 %v3853, %v3893
        %v3926 = vmul.f32 %v3855, %v3894
        %v3927 = vmul.f32 %v3784, %v3895
        %v3928 = vmul.f32 %v3786, %v3896
        %v3929 = vmul.f32 %v3857, %v3897
        %v3930 = vmul.f32 %v3859, %v3898
        %v3931 = vmul.f32 %v3790, %v3899
        %v3932 = vmul.f32 %v3792, %v3900
        %v3933 = vmul.f32 %v3863, %v3901
        %v3934 = vmul.f32 %v3865, %v3902
        %v3935 = vmul.f32 %v3794, %v3903
        %v3936 = vmul.f32 %v3796, %v3904
        %v3937 = vmul.f32 %v3867, %v3905
        %v3938 = vmul.f32 %v3869, %v3906
        %v3939 = vmul.f32 %v3800, %v3907
        %v3940 = vmul.f32 %v3802, %v3908
        %v3941 = vmul.f32 %v3873, %v3909
        %v3942 = vmul.f32 %v3875, %v3910
        %v3943 = vmul.f32 %v3804, %v3911
        %v3944 = vmul.f32 %v3806, %v3912
        %v3945 = vmul.f32 %v3877, %v3913
        %v3946 = vmul.f32 %v3879, %v3914
        %v3947 = vmul.f32 %v3810, %v3915
        %v3948 = vmul.f32 %v3812, %v3916
        %v3949 = vmul.f32 %v3883, %v3917
        %v3950 = vmul.f32 %v3885, %v3918
        %v3951 = vmul.f32 %v3814, %v3919
        %v3952 = vmul.f32 %v3816, %v3920
        %v3953 = vmul.f32 %v3887, %v3921
        %v3954 = vmul.f32 %v3889, %v3922
        %v3955 = vmul.f32 %v3923, 0.044715
        %v3956 = vmul.f32 %v3924, 0.044715
        %v3957 = vmul.f32 %v3925, 0.044715
        %v3958 = vmul.f32 %v3926, 0.044715
        %v3959 = vmul.f32 %v3927, 0.044715
        %v3960 = vmul.f32 %v3928, 0.044715
        %v3961 = vmul.f32 %v3929, 0.044715
        %v3962 = vmul.f32 %v3930, 0.044715
        %v3963 = vmul.f32 %v3931, 0.044715
        %v3964 = vmul.f32 %v3932, 0.044715
        %v3965 = vmul.f32 %v3933, 0.044715
        %v3966 = vmul.f32 %v3934, 0.044715
        %v3967 = vmul.f32 %v3935, 0.044715
        %v3968 = vmul.f32 %v3936, 0.044715
        %v3969 = vmul.f32 %v3937, 0.044715
        %v3970 = vmul.f32 %v3938, 0.044715
        %v3971 = vmul.f32 %v3939, 0.044715
        %v3972 = vmul.f32 %v3940, 0.044715
        %v3973 = vmul.f32 %v3941, 0.044715
        %v3974 = vmul.f32 %v3942, 0.044715
        %v3975 = vmul.f32 %v3943, 0.044715
        %v3976 = vmul.f32 %v3944, 0.044715
        %v3977 = vmul.f32 %v3945, 0.044715
        %v3978 = vmul.f32 %v3946, 0.044715
        %v3979 = vmul.f32 %v3947, 0.044715
        %v3980 = vmul.f32 %v3948, 0.044715
        %v3981 = vmul.f32 %v3949, 0.044715
        %v3982 = vmul.f32 %v3950, 0.044715
        %v3983 = vmul.f32 %v3951, 0.044715
        %v3984 = vmul.f32 %v3952, 0.044715
        %v3985 = vmul.f32 %v3953, 0.044715
        %v3986 = vmul.f32 %v3954, 0.044715
        %v3987 = vadd.f32 %v3780, %v3955
        %v3988 = vadd.f32 %v3782, %v3956
        %v3989 = vadd.f32 %v3853, %v3957
        %v3990 = vadd.f32 %v3855, %v3958
        %v3991 = vadd.f32 %v3784, %v3959
        %v3992 = vadd.f32 %v3786, %v3960
        %v3993 = vadd.f32 %v3857, %v3961
        %v3994 = vadd.f32 %v3859, %v3962
        %v3995 = vadd.f32 %v3790, %v3963
        %v3996 = vadd.f32 %v3792, %v3964
        %v3997 = vadd.f32 %v3863, %v3965
        %v3998 = vadd.f32 %v3865, %v3966
        %v3999 = vadd.f32 %v3794, %v3967
        %v4000 = vadd.f32 %v3796, %v3968
        %v4001 = vadd.f32 %v3867, %v3969
        %v4002 = vadd.f32 %v3869, %v3970
        %v4003 = vadd.f32 %v3800, %v3971
        %v4004 = vadd.f32 %v3802, %v3972
        %v4005 = vadd.f32 %v3873, %v3973
        %v4006 = vadd.f32 %v3875, %v3974
        %v4007 = vadd.f32 %v3804, %v3975
        %v4008 = vadd.f32 %v3806, %v3976
        %v4009 = vadd.f32 %v3877, %v3977
        %v4010 = vadd.f32 %v3879, %v3978
        %v4011 = vadd.f32 %v3810, %v3979
        %v4012 = vadd.f32 %v3812, %v3980
        %v4013 = vadd.f32 %v3883, %v3981
        %v4014 = vadd.f32 %v3885, %v3982
        %v4015 = vadd.f32 %v3814, %v3983
        %v4016 = vadd.f32 %v3816, %v3984
        %v4017 = vadd.f32 %v3887, %v3985
        %v4018 = vadd.f32 %v3889, %v3986
        %v4019 = vmul.f32 %v3987, 0.7978846
        %v4020 = vmul.f32 %v3988, 0.7978846
        %v4021 = vmul.f32 %v3989, 0.7978846
        %v4022 = vmul.f32 %v3990, 0.7978846
        %v4023 = vmul.f32 %v3991, 0.7978846
        %v4024 = vmul.f32 %v3992, 0.7978846
        %v4025 = vmul.f32 %v3993, 0.7978846
        %v4026 = vmul.f32 %v3994, 0.7978846
        %v4027 = vmul.f32 %v3995, 0.7978846
        %v4028 = vmul.f32 %v3996, 0.7978846
        %v4029 = vmul.f32 %v3997, 0.7978846
        %v4030 = vmul.f32 %v3998, 0.7978846
        %v4031 = vmul.f32 %v3999, 0.7978846
        %v4032 = vmul.f32 %v4000, 0.7978846
        %v4033 = vmul.f32 %v4001, 0.7978846
        %v4034 = vmul.f32 %v4002, 0.7978846
        %v4035 = vmul.f32 %v4003, 0.7978846
        %v4036 = vmul.f32 %v4004, 0.7978846
        %v4037 = vmul.f32 %v4005, 0.7978846
        %v4038 = vmul.f32 %v4006, 0.7978846
        %v4039 = vmul.f32 %v4007, 0.7978846
        %v4040 = vmul.f32 %v4008, 0.7978846
        %v4041 = vmul.f32 %v4009, 0.7978846
        %v4042 = vmul.f32 %v4010, 0.7978846
        %v4043 = vmul.f32 %v4011, 0.7978846
        %v4044 = vmul.f32 %v4012, 0.7978846
        %v4045 = vmul.f32 %v4013, 0.7978846
        %v4046 = vmul.f32 %v4014, 0.7978846
        %v4047 = vmul.f32 %v4015, 0.7978846
        %v4048 = vmul.f32 %v4016, 0.7978846
        %v4049 = vmul.f32 %v4017, 0.7978846
        %v4050 = vmul.f32 %v4018, 0.7978846
        %v4051 = vtanh.pop %v4019
        %v4052 = vtanh.pop %v4020
        %v4053 = vtanh.pop %v4021
        %v4054 = vtanh.pop %v4022
        %v4055 = vtanh.pop %v4023
        %v4056 = vtanh.pop %v4024
        %v4057 = vtanh.pop %v4025
        %v4058 = vtanh.pop %v4026
        %v4059 = vtanh.pop %v4027
        %v4060 = vtanh.pop %v4028
        %v4061 = vtanh.pop %v4029
        %v4062 = vtanh.pop %v4030
        %v4063 = vtanh.pop %v4031
        %v4064 = vtanh.pop %v4032
        %v4065 = vtanh.pop %v4033
        %v4066 = vtanh.pop %v4034
        %v4067 = vtanh.pop %v4035
        %v4068 = vtanh.pop %v4036
        %v4069 = vtanh.pop %v4037
        %v4070 = vtanh.pop %v4038
        %v4071 = vtanh.pop %v4039
        %v4072 = vtanh.pop %v4040
        %v4073 = vtanh.pop %v4041
        %v4074 = vtanh.pop %v4042
        %v4075 = vtanh.pop %v4043
        %v4076 = vtanh.pop %v4044
        %v4077 = vtanh.pop %v4045
        %v4078 = vtanh.pop %v4046
        %v4079 = vtanh.pop %v4047
        %v4080 = vtanh.pop %v4048
        %v4081 = vtanh.pop %v4049
        %v4082 = vtanh.pop %v4050
        %v4083 = vadd.f32 %v4051, 1.0
        %v4084 = vadd.f32 %v4052, 1.0
        %v4085 = vadd.f32 %v4053, 1.0
        %v4086 = vadd.f32 %v4054, 1.0
        %v4087 = vadd.f32 %v4055, 1.0
        %v4088 = vadd.f32 %v4056, 1.0
        %v4089 = vadd.f32 %v4057, 1.0
        %v4090 = vadd.f32 %v4058, 1.0
        %v4091 = vadd.f32 %v4059, 1.0
        %v4092 = vadd.f32 %v4060, 1.0
        %v4093 = vadd.f32 %v4061, 1.0
        %v4094 = vadd.f32 %v4062, 1.0
        %v4095 = vadd.f32 %v4063, 1.0
        %v4096 = vadd.f32 %v4064, 1.0
        %v4097 = vadd.f32 %v4065, 1.0
        %v4098 = vadd.f32 %v4066, 1.0
        %v4099 = vadd.f32 %v4067, 1.0
        %v4100 = vadd.f32 %v4068, 1.0
        %v4101 = vadd.f32 %v4069, 1.0
        %v4102 = vadd.f32 %v4070, 1.0
        %v4103 = vadd.f32 %v4071, 1.0
        %v4104 = vadd.f32 %v4072, 1.0
        %v4105 = vadd.f32 %v4073, 1.0
        %v4106 = vadd.f32 %v4074, 1.0
        %v4107 = vadd.f32 %v4075, 1.0
        %v4108 = vadd.f32 %v4076, 1.0
        %v4109 = vadd.f32 %v4077, 1.0
        %v4110 = vadd.f32 %v4078, 1.0
        %v4111 = vadd.f32 %v4079, 1.0
        %v4112 = vadd.f32 %v4080, 1.0
        %v4113 = vadd.f32 %v4081, 1.0
        %v4114 = vadd.f32 %v4082, 1.0
        %v4115 = vmul.f32 %v4083, 0.5
        %v4116 = vmul.f32 %v4084, 0.5
        %v4117 = vmul.f32 %v4085, 0.5
        %v4118 = vmul.f32 %v4086, 0.5
        %v4119 = vmul.f32 %v4087, 0.5
        %v4120 = vmul.f32 %v4088, 0.5
        %v4121 = vmul.f32 %v4089, 0.5
        %v4122 = vmul.f32 %v4090, 0.5
        %v4123 = vmul.f32 %v4091, 0.5
        %v4124 = vmul.f32 %v4092, 0.5
        %v4125 = vmul.f32 %v4093, 0.5
        %v4126 = vmul.f32 %v4094, 0.5
        %v4127 = vmul.f32 %v4095, 0.5
        %v4128 = vmul.f32 %v4096, 0.5
        %v4129 = vmul.f32 %v4097, 0.5
        %v4130 = vmul.f32 %v4098, 0.5
        %v4131 = vmul.f32 %v4099, 0.5
        %v4132 = vmul.f32 %v4100, 0.5
        %v4133 = vmul.f32 %v4101, 0.5
        %v4134 = vmul.f32 %v4102, 0.5
        %v4135 = vmul.f32 %v4103, 0.5
        %v4136 = vmul.f32 %v4104, 0.5
        %v4137 = vmul.f32 %v4105, 0.5
        %v4138 = vmul.f32 %v4106, 0.5
        %v4139 = vmul.f32 %v4107, 0.5
        %v4140 = vmul.f32 %v4108, 0.5
        %v4141 = vmul.f32 %v4109, 0.5
        %v4142 = vmul.f32 %v4110, 0.5
        %v4143 = vmul.f32 %v4111, 0.5
        %v4144 = vmul.f32 %v4112, 0.5
        %v4145 = vmul.f32 %v4113, 0.5
        %v4146 = vmul.f32 %v4114, 0.5
        %v4147 = vmul.f32 %v3780, %v4115
        %v4148 = vmul.f32 %v3782, %v4116
        %v4149 = vmul.f32 %v3853, %v4117
        %v4150 = vmul.f32 %v3855, %v4118
        %v4151 = vmul.f32 %v3784, %v4119
        %v4152 = vmul.f32 %v3786, %v4120
        %v4153 = vmul.f32 %v3857, %v4121
        %v4154 = vmul.f32 %v3859, %v4122
        %v4155 = vmul.f32 %v3790, %v4123
        %v4156 = vmul.f32 %v3792, %v4124
        %v4157 = vmul.f32 %v3863, %v4125
        %v4158 = vmul.f32 %v3865, %v4126
        %v4159 = vmul.f32 %v3794, %v4127
        %v4160 = vmul.f32 %v3796, %v4128
        %v4161 = vmul.f32 %v3867, %v4129
        %v4162 = vmul.f32 %v3869, %v4130
        %v4163 = vmul.f32 %v3800, %v4131
        %v4164 = vmul.f32 %v3802, %v4132
        %v4165 = vmul.f32 %v3873, %v4133
        %v4166 = vmul.f32 %v3875, %v4134
        %v4167 = vmul.f32 %v3804, %v4135
        %v4168 = vmul.f32 %v3806, %v4136
        %v4169 = vmul.f32 %v3877, %v4137
        %v4170 = vmul.f32 %v3879, %v4138
        %v4171 = vmul.f32 %v3810, %v4139
        %v4172 = vmul.f32 %v3812, %v4140
        %v4173 = vmul.f32 %v3883, %v4141
        %v4174 = vmul.f32 %v3885, %v4142
        %v4175 = vmul.f32 %v3814, %v4143
        %v4176 = vmul.f32 %v3816, %v4144
        %v4177 = vmul.f32 %v3887, %v4145
        %v4178 = vmul.f32 %v3889, %v4146
        %v4179 = vpack.c.bf16 %v4151, %v4147
        %v4180 = vpack.c.bf16 %v4152, %v4148
        %v4181 = vpack.c.bf16 %v4153, %v4149
        %v4182 = vpack.c.bf16 %v4154, %v4150
        %v4183 = vpack.c.bf16 %v4159, %v4155
        %v4184 = vpack.c.bf16 %v4160, %v4156
        %v4185 = vpack.c.bf16 %v4161, %v4157
        %v4186 = vpack.c.bf16 %v4162, %v4158
        %v4187 = vpack.c.bf16 %v4167, %v4163
        %v4188 = vpack.c.bf16 %v4168, %v4164
        %v4189 = vpack.c.bf16 %v4169, %v4165
        %v4190 = vpack.c.bf16 %v4170, %v4166
        %v4191 = vpack.c.bf16 %v4175, %v4171
        %v4192 = vpack.c.bf16 %v4176, %v4172
        %v4193 = vpack.c.bf16 %v4177, %v4173
        %v4194 = vpack.c.bf16 %v4178, %v4174
        %v4195 = vld [vmem:[%s674] sm:$0xf]
        %v4196 = vld [vmem:[%s674 + $0x4] sm:$0xf]
        %v4197 = vld [vmem:[%s674 + $0x8] sm:$0xf]
        %v4198 = vld [vmem:[%s674 + $0xc] sm:$0xf]
        %v4199 = vld [vmem:[%s674 + $0x10] sm:$0xf]
        %v4200 = vld [vmem:[%s674 + $0x14] sm:$0xf]
        %v4201 = vld [vmem:[%s674 + $0x18] sm:$0xf]
        %v4202 = vld [vmem:[%s674 + $0x1c] sm:$0xf]
        %v4203 = vld [vmem:[%s674 + $0x20] sm:$0xf]
        %v4204 = vld [vmem:[%s674 + $0x24] sm:$0xf]
        %v4205 = vld [vmem:[%s674 + $0x28] sm:$0xf]
        %v4206 = vld [vmem:[%s674 + $0x2c] sm:$0xf]
        %v4207 = vld [vmem:[%s674 + $0x30] sm:$0xf]
        %v4208 = vld [vmem:[%s674 + $0x34] sm:$0xf]
        %v4209 = vld [vmem:[%s674 + $0x38] sm:$0xf]
        %v4210 = vld [vmem:[%s674 + $0x3c] sm:$0xf]
        %v4211 = vld [vmem:[%s674 + $0x40] sm:$0xf]
        %v4212 = vld [vmem:[%s674 + $0x44] sm:$0xf]
        %v4213 = vld [vmem:[%s674 + $0x48] sm:$0xf]
        %v4214 = vld [vmem:[%s674 + $0x4c] sm:$0xf]
        %v4215 = vld [vmem:[%s674 + $0x50] sm:$0xf]
        %v4216 = vld [vmem:[%s674 + $0x54] sm:$0xf]
        %v4217 = vld [vmem:[%s674 + $0x58] sm:$0xf]
        %v4218 = vld [vmem:[%s674 + $0x5c] sm:$0xf]
        %v4219 = vld [vmem:[%s674 + $0x60] sm:$0xf]
        %v4220 = vld [vmem:[%s674 + $0x64] sm:$0xf]
        %v4221 = vld [vmem:[%s674 + $0x68] sm:$0xf]
        %v4222 = vld [vmem:[%s674 + $0x6c] sm:$0xf]
        %v4223 = vld [vmem:[%s674 + $0x70] sm:$0xf]
        %v4224 = vld [vmem:[%s674 + $0x74] sm:$0xf]
        %v4225 = vld [vmem:[%s674 + $0x78] sm:$0xf]
        %v4226 = vld [vmem:[%s674 + $0x7c] sm:$0xf]
        %v4227 = vld [vmem:[%s674 + $0x80] sm:$0xf]
        %v4228 = vld [vmem:[%s674 + $0x84] sm:$0xf]
        %v4229 = vld [vmem:[%s674 + $0x88] sm:$0xf]
        %v4230 = vld [vmem:[%s674 + $0x8c] sm:$0xf]
        %v4231 = vld [vmem:[%s674 + $0x90] sm:$0xf]
        %v4232 = vld [vmem:[%s674 + $0x94] sm:$0xf]
        %v4233 = vld [vmem:[%s674 + $0x98] sm:$0xf]
        %v4234 = vld [vmem:[%s674 + $0x9c] sm:$0xf]
        %v4235 = vld [vmem:[%s674 + $0xa0] sm:$0xf]
        %v4236 = vld [vmem:[%s674 + $0xa4] sm:$0xf]
        %v4237 = vld [vmem:[%s674 + $0xa8] sm:$0xf]
        %v4238 = vld [vmem:[%s674 + $0xac] sm:$0xf]
        %v4239 = vld [vmem:[%s674 + $0xb0] sm:$0xf]
        %v4240 = vld [vmem:[%s674 + $0xb4] sm:$0xf]
        %v4241 = vld [vmem:[%s674 + $0xb8] sm:$0xf]
        %v4242 = vld [vmem:[%s674 + $0xbc] sm:$0xf]
        %v4243 = vld [vmem:[%s674 + $0xc0] sm:$0xf]
        %v4244 = vld [vmem:[%s674 + $0xc4] sm:$0xf]
        %v4245 = vld [vmem:[%s674 + $0xc8] sm:$0xf]
        %v4246 = vld [vmem:[%s674 + $0xcc] sm:$0xf]
        %v4247 = vld [vmem:[%s674 + $0xd0] sm:$0xf]
        %v4248 = vld [vmem:[%s674 + $0xd4] sm:$0xf]
        %v4249 = vld [vmem:[%s674 + $0xd8] sm:$0xf]
        %v4250 = vld [vmem:[%s674 + $0xdc] sm:$0xf]
        %v4251 = vld [vmem:[%s674 + $0xe0] sm:$0xf]
        %v4252 = vld [vmem:[%s674 + $0xe4] sm:$0xf]
        %v4253 = vld [vmem:[%s674 + $0xe8] sm:$0xf]
        %v4254 = vld [vmem:[%s674 + $0xec] sm:$0xf]
        %v4255 = vld [vmem:[%s674 + $0xf0] sm:$0xf]
        %v4256 = vld [vmem:[%s674 + $0xf4] sm:$0xf]
        %v4257 = vld [vmem:[%s674 + $0xf8] sm:$0xf]
        %v4258 = vld [vmem:[%s674 + $0xfc] sm:$0xf]
        %v4259 = vld [vmem:[%s776] sm:$0x1]
        %v4261 = vlaneseq
        %v4262 = vshrl.u32 %v4261, 7
        %v4263 = vsub.s32 0, %v4262
        %v4264 = vrot.slane %v4259, %v4263
        %v4330 = vunpack.c.l.b16 %v4195
        %v4331 = vunpack.c.l.b16 %v4196
        %v4332 = vunpack.c.l.b16 %v4197
        %v4333 = vunpack.c.l.b16 %v4198
        %v4334 = vunpack.c.l.b16 %v4199
        %v4335 = vunpack.c.l.b16 %v4200
        %v4336 = vunpack.c.l.b16 %v4201
        %v4337 = vunpack.c.l.b16 %v4202
        %v4338 = vunpack.c.l.b16 %v4203
        %v4339 = vunpack.c.l.b16 %v4204
        %v4340 = vunpack.c.l.b16 %v4205
        %v4341 = vunpack.c.l.b16 %v4206
        %v4342 = vunpack.c.l.b16 %v4207
        %v4343 = vunpack.c.l.b16 %v4208
        %v4344 = vunpack.c.l.b16 %v4209
        %v4345 = vunpack.c.l.b16 %v4210
        %v4346 = vunpack.c.l.b16 %v4211
        %v4347 = vunpack.c.l.b16 %v4212
        %v4348 = vunpack.c.l.b16 %v4213
        %v4349 = vunpack.c.l.b16 %v4214
        %v4350 = vunpack.c.l.b16 %v4215
        %v4351 = vunpack.c.l.b16 %v4216
        %v4352 = vunpack.c.l.b16 %v4217
        %v4353 = vunpack.c.l.b16 %v4218
        %v4354 = vunpack.c.l.b16 %v4219
        %v4355 = vunpack.c.l.b16 %v4220
        %v4356 = vunpack.c.l.b16 %v4221
        %v4357 = vunpack.c.l.b16 %v4222
        %v4358 = vunpack.c.l.b16 %v4223
        %v4359 = vunpack.c.l.b16 %v4224
        %v4360 = vunpack.c.l.b16 %v4225
        %v4361 = vunpack.c.l.b16 %v4226
        %v4362 = vunpack.c.l.b16 %v4227
        %v4363 = vunpack.c.l.b16 %v4228
        %v4364 = vunpack.c.l.b16 %v4229
        %v4365 = vunpack.c.l.b16 %v4230
        %v4366 = vunpack.c.l.b16 %v4231
        %v4367 = vunpack.c.l.b16 %v4232
        %v4368 = vunpack.c.l.b16 %v4233
        %v4369 = vunpack.c.l.b16 %v4234
        %v4370 = vunpack.c.l.b16 %v4235
        %v4371 = vunpack.c.l.b16 %v4236
        %v4372 = vunpack.c.l.b16 %v4237
        %v4373 = vunpack.c.l.b16 %v4238
        %v4374 = vunpack.c.l.b16 %v4239
        %v4375 = vunpack.c.l.b16 %v4240
        %v4376 = vunpack.c.l.b16 %v4241
        %v4377 = vunpack.c.l.b16 %v4242
        %v4378 = vunpack.c.l.b16 %v4243
        %v4379 = vunpack.c.l.b16 %v4244
        %v4380 = vunpack.c.l.b16 %v4245
        %v4381 = vunpack.c.l.b16 %v4246
        %v4382 = vunpack.c.l.b16 %v4247
        %v4383 = vunpack.c.l.b16 %v4248
        %v4384 = vunpack.c.l.b16 %v4249
        %v4385 = vunpack.c.l.b16 %v4250
        %v4386 = vunpack.c.l.b16 %v4251
        %v4387 = vunpack.c.l.b16 %v4252
        %v4388 = vunpack.c.l.b16 %v4253
        %v4389 = vunpack.c.l.b16 %v4254
        %v4390 = vunpack.c.l.b16 %v4255
        %v4391 = vunpack.c.l.b16 %v4256
        %v4392 = vunpack.c.l.b16 %v4257
        %v4393 = vunpack.c.l.b16 %v4258
        %v4394 = vpack.c.b16 %v4331, %v4330
        %v4395 = vpack.c.b16 %v4333, %v4332
        %v4396 = vpack.c.b16 %v4335, %v4334
        %v4397 = vpack.c.b16 %v4337, %v4336
        %v4398 = vpack.c.b16 %v4339, %v4338
        %v4399 = vpack.c.b16 %v4341, %v4340
        %v4400 = vpack.c.b16 %v4343, %v4342
        %v4401 = vpack.c.b16 %v4345, %v4344
        %v4402 = vpack.c.b16 %v4347, %v4346
        %v4403 = vpack.c.b16 %v4349, %v4348
        %v4404 = vpack.c.b16 %v4351, %v4350
        %v4405 = vpack.c.b16 %v4353, %v4352
        %v4406 = vpack.c.b16 %v4355, %v4354
        %v4407 = vpack.c.b16 %v4357, %v4356
        %v4408 = vpack.c.b16 %v4359, %v4358
        %v4409 = vpack.c.b16 %v4361, %v4360
        %v4410 = vpack.c.b16 %v4363, %v4362
        %v4411 = vpack.c.b16 %v4365, %v4364
        %v4412 = vpack.c.b16 %v4367, %v4366
        %v4413 = vpack.c.b16 %v4369, %v4368
        %v4414 = vpack.c.b16 %v4371, %v4370
        %v4415 = vpack.c.b16 %v4373, %v4372
        %v4416 = vpack.c.b16 %v4375, %v4374
        %v4417 = vpack.c.b16 %v4377, %v4376
        %v4418 = vpack.c.b16 %v4379, %v4378
        %v4419 = vpack.c.b16 %v4381, %v4380
        %v4420 = vpack.c.b16 %v4383, %v4382
        %v4421 = vpack.c.b16 %v4385, %v4384
        %v4422 = vpack.c.b16 %v4387, %v4386
        %v4423 = vpack.c.b16 %v4389, %v4388
        %v4424 = vpack.c.b16 %v4391, %v4390
        %v4425 = vpack.c.b16 %v4393, %v4392
        %4458 = vmatprep.subr.bf16.mxu0 0
        %4459 = vmatpush1.bf16.msra.mxu0 %v4394
        %4460 = vmatprep.subr.bf16.mxu0 0
        %4461 = vmatpush1.bf16.msra.mxu0 %v4395
        %4462 = vmatprep.subr.bf16.mxu0 0
        %4463 = vmatpush1.bf16.msra.mxu0 %v4396
        %4464 = vmatprep.subr.bf16.mxu0 0
        %4465 = vmatpush1.bf16.msra.mxu0 %v4397
        %4466 = vmatprep.subr.bf16.mxu0 0
        %4467 = vmatpush1.bf16.msra.mxu0 %v4398
        %4468 = vmatprep.subr.bf16.mxu0 0
        %4469 = vmatpush1.bf16.msra.mxu0 %v4399
        %4470 = vmatprep.subr.bf16.mxu0 0
        %4471 = vmatpush1.bf16.msra.mxu0 %v4400
        %4472 = vmatprep.subr.bf16.mxu0 0
        %4473 = vmatpush1.bf16.msra.mxu0 %v4401
        %4474 = vmatprep.subr.bf16.mxu0 0
        %4475 = vmatpush1.bf16.msra.mxu0 %v4402
        %4476 = vmatprep.subr.bf16.mxu0 0
        %4477 = vmatpush1.bf16.msra.mxu0 %v4403
        %4478 = vmatprep.subr.bf16.mxu0 0
        %4479 = vmatpush1.bf16.msra.mxu0 %v4404
        %4480 = vmatprep.subr.bf16.mxu0 0
        %4481 = vmatpush1.bf16.msra.mxu0 %v4405
        %4482 = vmatprep.subr.bf16.mxu0 0
        %4483 = vmatpush1.bf16.msra.mxu0 %v4406
        %4484 = vmatprep.subr.bf16.mxu0 0
        %4485 = vmatpush1.bf16.msra.mxu0 %v4407
        %4486 = vmatprep.subr.bf16.mxu0 0
        %4487 = vmatpush1.bf16.msra.mxu0 %v4408
        %4488 = vmatprep.subr.bf16.mxu0 0
        %4489 = vmatpush1.bf16.msra.mxu0 %v4409
        %4490 = vmatprep.mubr.bf16.mxu0 %v4180
        %4491 = vmatmul.mubr.bf16.gmra.mrb[0].mxu0 %v4179
        %v4492 = vpop.f32.mrb[0].mxu0
        %v4493 = vadd.f32 %v4264, %v4492
        %v4494 = vpop.f32.mrb[0].mxu0
        %v4495 = vpop.f32.mrb[0].mxu0
        %v4496 = vadd.f32 %v4264, %v4495
        %v4497 = vpop.f32.mrb[0].mxu0
        %4498 = vmatprep.mubr.bf16.mxu0 %v4184
        %4499 = vmatmul.mubr.bf16.gmra.mrb[0].mxu0 %v4183
        %v4500 = vpop.f32.mrb[0].mxu0
        %v4501 = vadd.f32 %v4264, %v4500
        %v4502 = vpop.f32.mrb[0].mxu0
        %v4503 = vpop.f32.mrb[0].mxu0
        %v4504 = vadd.f32 %v4264, %v4503
        %v4505 = vpop.f32.mrb[0].mxu0
        %4506 = vmatprep.mubr.bf16.mxu0 %v4188
        %4507 = vmatmul.mubr.bf16.gmra.mrb[0].mxu0 %v4187
        %v4508 = vpop.f32.mrb[0].mxu0
        %v4509 = vadd.f32 %v4264, %v4508
        %v4510 = vpop.f32.mrb[0].mxu0
        %v4511 = vpop.f32.mrb[0].mxu0
        %v4512 = vadd.f32 %v4264, %v4511
        %v4513 = vpop.f32.mrb[0].mxu0
        %4514 = vmatprep.mubr.bf16.mxu0 %v4192
        %4515 = vmatmul.mubr.bf16.gmra.mrb[0].mxu0 %v4191
        %v4516 = vpop.f32.mrb[0].mxu0
        %v4517 = vadd.f32 %v4264, %v4516
        %v4518 = vpop.f32.mrb[0].mxu0
        %v4519 = vpop.f32.mrb[0].mxu0
        %v4520 = vadd.f32 %v4264, %v4519
        %v4521 = vpop.f32.mrb[0].mxu0
        %4522 = vdwg.mxu0
        %4523 = vmatprep.subr.bf16.mxu0 0
        %4524 = vmatpush1.bf16.msra.mxu0 %v4410
        %4525 = vmatprep.subr.bf16.mxu0 0
        %4526 = vmatpush1.bf16.msra.mxu0 %v4411
        %4527 = vmatprep.subr.bf16.mxu0 0
        %4528 = vmatpush1.bf16.msra.mxu0 %v4412
        %4529 = vmatprep.subr.bf16.mxu0 0
        %4530 = vmatpush1.bf16.msra.mxu0 %v4413
        %4531 = vmatprep.subr.bf16.mxu0 0
        %4532 = vmatpush1.bf16.msra.mxu0 %v4414
        %4533 = vmatprep.subr.bf16.mxu0 0
        %4534 = vmatpush1.bf16.msra.mxu0 %v4415
        %4535 = vmatprep.subr.bf16.mxu0 0
        %4536 = vmatpush1.bf16.msra.mxu0 %v4416
        %4537 = vmatprep.subr.bf16.mxu0 0
        %4538 = vmatpush1.bf16.msra.mxu0 %v4417
        %4539 = vmatprep.subr.bf16.mxu0 0
        %4540 = vmatpush1.bf16.msra.mxu0 %v4418
        %4541 = vmatprep.subr.bf16.mxu0 0
        %4542 = vmatpush1.bf16.msra.mxu0 %v4419
        %4543 = vmatprep.subr.bf16.mxu0 0
        %4544 = vmatpush1.bf16.msra.mxu0 %v4420
        %4545 = vmatprep.subr.bf16.mxu0 0
        %4546 = vmatpush1.bf16.msra.mxu0 %v4421
        %4547 = vmatprep.subr.bf16.mxu0 0
        %4548 = vmatpush1.bf16.msra.mxu0 %v4422
        %4549 = vmatprep.subr.bf16.mxu0 0
        %4550 = vmatpush1.bf16.msra.mxu0 %v4423
        %4551 = vmatprep.subr.bf16.mxu0 0
        %4552 = vmatpush1.bf16.msra.mxu0 %v4424
        %4553 = vmatprep.subr.bf16.mxu0 0
        %4554 = vmatpush1.bf16.msra.mxu0 %v4425
        %4555 = vmatprep.mubr.bf16.mxu0 %v4182
        %4556 = vmatmul.mubr.bf16.gmra.mrb[0].mxu0 %v4181
        %v4557 = vpop.f32.mrb[0].mxu0
        %v4558 = vadd.f32 %v4493, %v4557
        %v4559 = vpop.f32.mrb[0].mxu0
        %v4560 = vpop.f32.mrb[0].mxu0
        %v4561 = vadd.f32 %v4496, %v4560
        %v4562 = vpop.f32.mrb[0].mxu0
        %4563 = vmatprep.mubr.bf16.mxu0 %v4186
        %4564 = vmatmul.mubr.bf16.gmra.mrb[0].mxu0 %v4185
        %v4565 = vpop.f32.mrb[0].mxu0
        %v4566 = vadd.f32 %v4501, %v4565
        %v4567 = vpop.f32.mrb[0].mxu0
        %v4568 = vpop.f32.mrb[0].mxu0
        %v4569 = vadd.f32 %v4504, %v4568
        %v4570 = vpop.f32.mrb[0].mxu0
        %4571 = vmatprep.mubr.bf16.mxu0 %v4190
        %4572 = vmatmul.mubr.bf16.gmra.mrb[0].mxu0 %v4189
        %v4573 = vpop.f32.mrb[0].mxu0
        %v4574 = vadd.f32 %v4509, %v4573
        %v4575 = vpop.f32.mrb[0].mxu0
        %v4576 = vpop.f32.mrb[0].mxu0
        %v4577 = vadd.f32 %v4512, %v4576
        %v4578 = vpop.f32.mrb[0].mxu0
        %4579 = vmatprep.mubr.bf16.mxu0 %v4194
        %4580 = vmatmul.mubr.bf16.gmra.mrb[0].mxu0 %v4193
        %v4581 = vpop.f32.mrb[0].mxu0
        %v4582 = vadd.f32 %v4517, %v4581
        %v4583 = vpop.f32.mrb[0].mxu0
        %v4584 = vpop.f32.mrb[0].mxu0
        %v4585 = vadd.f32 %v4520, %v4584
        %v4586 = vpop.f32.mrb[0].mxu0
        %4587 = vdwg.mxu0
        %v4588 = vadd.f32 %v3401, %v4558
        %v4589 = vadd.f32 %v3402, %v4561
        %v4590 = vadd.f32 %v3403, %v4566
        %v4591 = vadd.f32 %v3404, %v4569
        %v4592 = vadd.f32 %v3405, %v4574
        %v4593 = vadd.f32 %v3406, %v4577
        %v4594 = vadd.f32 %v3407, %v4582
        %v4595 = vadd.f32 %v3408, %v4585
        %4596 = vst [vmem:[#allocation2] sm:$0xff] %v4588
        %4597 = vst [vmem:[#allocation2 + $0x8] sm:$0xff] %v4589
        %4598 = vst [vmem:[#allocation2 + $0x10] sm:$0xff] %v4590
        %4599 = vst [vmem:[#allocation2 + $0x18] sm:$0xff] %v4591
        %4600 = vst [vmem:[#allocation2 + $0x20] sm:$0xff] %v4592
        %4601 = vst [vmem:[#allocation2 + $0x28] sm:$0xff] %v4593
        %4602 = vst [vmem:[#allocation2 + $0x30] sm:$0xff] %v4594
        %4603 = vst [vmem:[#allocation2 + $0x38] sm:$0xff] %v4595
        %p4604 = scmp.eq.s32.totalorder %s34, 1
        // Predicated region
        $region109: #{tpu_custom_call.1} parent=79 // pred_check
          %p4605 = pneg %p4604
        $region110: #{tpu_custom_call.1} parent=79 // pred_check_branch
          %4607 = sbr.rel (%p4605) target = $region112
        $region111: #{tpu_custom_call.1} parent=79 // pred_region
          %v4608 = vld [vmem:[%s13] sm:$0x1]
          %v4609 = vld [vmem:[%s14] sm:$0x1]
          %4610 = vadd.xlane.f32.xlu0 %v4588
          %v4611 = vpop.xlane.xlu0 %4610
          %4612 = vadd.xlane.f32.xlu0 %v4589
          %v4613 = vpop.xlane.xlu0 %4612
          %4614 = vadd.xlane.f32.xlu0 %v4590
          %v4615 = vpop.xlane.xlu0 %4614
          %4616 = vadd.xlane.f32.xlu0 %v4591
          %v4617 = vpop.xlane.xlu0 %4616
          %4618 = vadd.xlane.f32.xlu0 %v4592
          %v4619 = vpop.xlane.xlu0 %4618
          %4620 = vadd.xlane.f32.xlu0 %v4593
          %v4621 = vpop.xlane.xlu0 %4620
          %4622 = vadd.xlane.f32.xlu0 %v4594
          %v4623 = vpop.xlane.xlu0 %4622
          %4624 = vadd.xlane.f32.xlu0 %v4595
          %v4625 = vpop.xlane.xlu0 %4624
          %v4626 = vmul.f32 %v4611, %v841
          %v4627 = vmul.f32 %v4613, %v841
          %v4628 = vmul.f32 %v4615, %v841
          %v4629 = vmul.f32 %v4617, %v841
          %v4630 = vmul.f32 %v4619, %v841
          %v4631 = vmul.f32 %v4621, %v841
          %v4632 = vmul.f32 %v4623, %v841
          %v4633 = vmul.f32 %v4625, %v841
          %v4634 = vsub.f32 %v4588, %v4626
          %v4635 = vsub.f32 %v4589, %v4627
          %v4636 = vsub.f32 %v4590, %v4628
          %v4637 = vsub.f32 %v4591, %v4629
          %v4638 = vsub.f32 %v4592, %v4630
          %v4639 = vsub.f32 %v4593, %v4631
          %v4640 = vsub.f32 %v4594, %v4632
          %v4641 = vsub.f32 %v4595, %v4633
          %v4642 = vmul.f32 %v4634, %v4634
          %v4643 = vmul.f32 %v4635, %v4635
          %v4644 = vmul.f32 %v4636, %v4636
          %v4645 = vmul.f32 %v4637, %v4637
          %v4646 = vmul.f32 %v4638, %v4638
          %v4647 = vmul.f32 %v4639, %v4639
          %v4648 = vmul.f32 %v4640, %v4640
          %v4649 = vmul.f32 %v4641, %v4641
          %4650 = vadd.xlane.f32.xlu0 %v4642
          %v4651 = vpop.xlane.xlu0 %4650
          %4652 = vadd.xlane.f32.xlu0 %v4643
          %v4653 = vpop.xlane.xlu0 %4652
          %4654 = vadd.xlane.f32.xlu0 %v4644
          %v4655 = vpop.xlane.xlu0 %4654
          %4656 = vadd.xlane.f32.xlu0 %v4645
          %v4657 = vpop.xlane.xlu0 %4656
          %4658 = vadd.xlane.f32.xlu0 %v4646
          %v4659 = vpop.xlane.xlu0 %4658
          %4660 = vadd.xlane.f32.xlu0 %v4647
          %v4661 = vpop.xlane.xlu0 %4660
          %4662 = vadd.xlane.f32.xlu0 %v4648
          %v4663 = vpop.xlane.xlu0 %4662
          %4664 = vadd.xlane.f32.xlu0 %v4649
          %v4665 = vpop.xlane.xlu0 %4664
          %v4666 = vmul.f32 %v4651, %v841
          %v4667 = vmul.f32 %v4653, %v841
          %v4668 = vmul.f32 %v4655, %v841
          %v4669 = vmul.f32 %v4657, %v841
          %v4670 = vmul.f32 %v4659, %v841
          %v4671 = vmul.f32 %v4661, %v841
          %v4672 = vmul.f32 %v4663, %v841
          %v4673 = vmul.f32 %v4665, %v841
          %v4674 = vadd.f32 %v4666, 1e-12
          %v4675 = vadd.f32 %v4667, 1e-12
          %v4676 = vadd.f32 %v4668, 1e-12
          %v4677 = vadd.f32 %v4669, 1e-12
          %v4678 = vadd.f32 %v4670, 1e-12
          %v4679 = vadd.f32 %v4671, 1e-12
          %v4680 = vadd.f32 %v4672, 1e-12
          %v4681 = vadd.f32 %v4673, 1e-12
          %v4682 = vrsqrt.pop %v4674
          %v4683 = vrsqrt.pop %v4675
          %v4684 = vrsqrt.pop %v4676
          %v4685 = vrsqrt.pop %v4677
          %v4686 = vrsqrt.pop %v4678
          %v4687 = vrsqrt.pop %v4679
          %v4688 = vrsqrt.pop %v4680
          %v4689 = vrsqrt.pop %v4681
          %v4690 = vmul.f32 %v4634, %v4682
          %v4691 = vmul.f32 %v4635, %v4683
          %v4692 = vmul.f32 %v4636, %v4684
          %v4693 = vmul.f32 %v4637, %v4685
          %v4694 = vmul.f32 %v4638, %v4686
          %v4695 = vmul.f32 %v4639, %v4687
          %v4696 = vmul.f32 %v4640, %v4688
          %v4697 = vmul.f32 %v4641, %v4689
          %v4699 = vlaneseq
          %v4700 = vshrl.u32 %v4699, 7
          %v4701 = vsub.s32 0, %v4700
          %v4702 = vrot.slane %v4608, %v4701
          %v4704 = vmul.f32 %v4690, %v4702
          %v4705 = vmul.f32 %v4691, %v4702
          %v4706 = vmul.f32 %v4692, %v4702
          %v4707 = vmul.f32 %v4693, %v4702
          %v4708 = vmul.f32 %v4694, %v4702
          %v4709 = vmul.f32 %v4695, %v4702
          %v4710 = vmul.f32 %v4696, %v4702
          %v4711 = vmul.f32 %v4697, %v4702
          %v4713 = vlaneseq
          %v4714 = vshrl.u32 %v4713, 7
          %v4715 = vsub.s32 0, %v4714
          %v4716 = vrot.slane %v4609, %v4715
          %v4718 = vadd.f32 %v4704, %v4716
          %v4719 = vadd.f32 %v4705, %v4716
          %v4720 = vadd.f32 %v4706, %v4716
          %v4721 = vadd.f32 %v4707, %v4716
          %v4722 = vadd.f32 %v4708, %v4716
          %v4723 = vadd.f32 %v4709, %v4716
          %v4724 = vadd.f32 %v4710, %v4716
          %v4725 = vadd.f32 %v4711, %v4716
          %4726 = vst [vmem:[#allocation13] sm:$0xff] %v4718
          %4727 = vst [vmem:[#allocation13 + $0x8] sm:$0xff] %v4719
          %4728 = vst [vmem:[#allocation13 + $0x10] sm:$0xff] %v4720
          %4729 = vst [vmem:[#allocation13 + $0x18] sm:$0xff] %v4721
          %4730 = vst [vmem:[#allocation13 + $0x20] sm:$0xff] %v4722
          %4731 = vst [vmem:[#allocation13 + $0x28] sm:$0xff] %v4723
          %4732 = vst [vmem:[#allocation13 + $0x30] sm:$0xff] %v4724
          %4733 = vst [vmem:[#allocation13 + $0x38] sm:$0xff] %v4725
        $region112: #{tpu_custom_call.1} parent=79 // pred_fallthru
          _
        // Predicated region
        $region113: #{tpu_custom_call.1} parent=79 // pred_check
          %p4734 = pneg %p439
        $region114: #{tpu_custom_call.1} parent=79 // pred_check_branch
          %4736 = sbr.rel (%p4734) target = $region116
        $region115: #{tpu_custom_call.1} parent=79 // pred_region
          %s4737 = smul.u32 4, %s33
          %s4739 = ssub.s32 1024, 1024
          %4740 = vsyncadd [#allocation6], %s4739
          %s4741 = smul.addr %s4737, 2
          %s4742 = smul.addr %s4741, 128
          %s4743 = scalar_lea.hbm %s15, %s4742
          %s4744 = sshll.u32 [#allocation13], 4
          %s4745 = int_to_ptr.vmem [resolvable:$true] %s4744
          %4750 = dma.vmem_to_hbm [thread:$0]  %s4745, 1024, %s4743, [#allocation6], 128, 128, 8
        $region116: #{tpu_custom_call.1} parent=79 // pred_fallthru
          _
        // Predicated region
        $region117: #{tpu_custom_call.1} parent=79 // pred_check
          %p4751 = pneg %p439
        $region118: #{tpu_custom_call.1} parent=79 // pred_check_branch
          %4753 = sbr.rel (%p4751) target = $region120
        $region119: #{tpu_custom_call.1} parent=79 // pred_region
          %4754 = dma.done [#allocation6], 1024
        $region120: #{tpu_custom_call.1} parent=79 // pred_fallthru
          _
      $region80: #{tpu_custom_call.1} parent=5 // pred_fallthru
        _
      %p4755 = scmp.le.s32.totalorder 2, %s24
      // Predicated region
      $region121: #{tpu_custom_call.1} parent=5 // pred_check
        %p4756 = pneg %p4755
      $region122: #{tpu_custom_call.1} parent=5 // pred_check_branch
        %4758 = sbr.rel (%p4756) target = $region124
      $region123: #{tpu_custom_call.1} parent=5 // pred_region
        %s4759 = ssub.s32 %s24, 2
      $region124: #{tpu_custom_call.1} parent=5 // pred_fallthru
        _
    $region6: #{tpu_custom_call.1} parent=1 // loop_footer
      %s28 = sadd.s32 1, %s24
    $region7: #{tpu_custom_call.1} parent=1 // loop_footer_branch
      %23 = sbr.rel target = $region3
    $region8: #{tpu_custom_call.1} parent=1 // loop_exit
      _
    %4760 = vsyncpa [#allocation5], 1
    %s4761 = scalar_lea.sflag [#allocation5], 1
    %4762 = vsyncpa %s4761, 1
    %4763 = vsyncpa [#allocation8], 1
    %4764 = vsyncpa [#allocation6], 1
    %s4765 = scalar_lea.sflag [#allocation6], 1
    %4766 = vsyncpa %s4765, 1

</llo_original>
